<compile_context>
chip_gen: v7x
topology: tpu7x:2x2x1
jax: 0.10.0
libtpu: 0.0.40
codegen_flags: <defaults>
</compile_context>

<pallas_src>
import math
import jax
import jax.numpy as jnp
from jax.experimental import pallas as pl
from jax.experimental.pallas import tpu as pltpu  # noqa: F401  (TPU backend)

# ---------------- config (small, deterministic) ----------------
B = 2          # batch
S = 8          # sequence length
D = 32         # hidden_size
H = 4          # num_attention_heads
DH = D // H    # attention_head_size
EPS = 1e-12    # layer_norm_eps
SCALE = 1.0 / math.sqrt(DH)
NEG_BIG = -1e30   # finite "masked" additive value (avoids -inf -> NaN on fully-masked rows)


def _attention_kernel(h_ref, mask_ref, rel_ref, rel2d_ref,
                      wq_ref, wk_ref, wv_ref, qb_ref, vb_ref,
                      wo_ref, bo_ref, gamma_ref, beta_ref,
                      out_ref, probs_ref):
    """Grid-less: all batches and heads processed in one invocation."""
    h3 = h_ref[...]                              # (B, S, D)
    h2d = h3.reshape(B * S, D)                   # leading-dim merge (free)

    # Bias terms are combined on the score tile in-kernel; the mask -> additive term
    # is hoisted out of the head loop (JAX does not CSE broadcasts).
    neg = jnp.where(mask_ref[...][:, 0] != 0.0, NEG_BIG, 0.0)      # (B, S, S)
    rel = rel_ref[...]                                              # (B, H, S, S)
    rel2d = rel2d_ref[...]                                          # (B, H, S, S)

    probs_heads = []
    dense_acc = None
    for hh in range(H):   # H = 4, statically unrolled; only leading-dim indexing below.
        # Per-head projections: 2-D MXU matmuls. The 1/sqrt(DH) query scale and the
        # q/v biases are already folded into wq_ref / qb_ref by prepare_params().
        q = jnp.dot(h2d, wq_ref[hh], preferred_element_type=jnp.float32) + qb_ref[hh]
        k = jnp.dot(h2d, wk_ref[hh], preferred_element_type=jnp.float32)
        v = jnp.dot(h2d, wv_ref[hh], preferred_element_type=jnp.float32) + vb_ref[hh]

        q3 = q.reshape(B, S, DH)                                    # leading split (free)
        k3 = k.reshape(B, S, DH)
        v3 = v.reshape(B, S, DH)

        s = jnp.einsum('bqd,bkd->bqk', q3, k3,
                       preferred_element_type=jnp.float32)          # (B, S, S)
        s = s + rel[:, hh] + rel2d[:, hh] + neg

        # softmax in f32 (matches torch softmax(dtype=float32)); one exact divide per
        # row, then multiplies (keeps the 1e-5 probs tolerance).
        m = jnp.max(s, axis=-1, keepdims=True)
        e = jnp.exp(s - m)
        inv = 1.0 / jnp.sum(e, axis=-1, keepdims=True)
        p = e * inv                                                  # (B, S, S)
        probs_heads.append(p)

        ctx = jnp.einsum('bqk,bkd->bqd', p, v3,
                         preferred_element_type=jnp.float32)        # (B, S, DH)
        # Head merge folded into the output projection: dense = sum_h ctx_h @ wo[h].
        part = jnp.dot(ctx.reshape(B * S, DH), wo_ref[hh],
                       preferred_element_type=jnp.float32)          # (B*S, D)
        dense_acc = part if dense_acc is None else dense_acc + part

    # (B, 1, S, S) pieces stacked along a leading (non-lane) axis -> (B, H, S, S).
    probs_ref[...] = jnp.stack(probs_heads, axis=1).astype(probs_ref.dtype)

    # ---- SelfOutput: dense -> (dropout: identity, eval) -> LayerNorm(x + residual) ----
    x = dense_acc + bo_ref[...] + h2d
    mean = jnp.mean(x, axis=-1, keepdims=True)
    var = jnp.mean((x - mean) ** 2, axis=-1, keepdims=True)
    normed = (x - mean) * jax.lax.rsqrt(var + EPS)
    out = normed * gamma_ref[...] + beta_ref[...]
    out_ref[...] = out.reshape(B, S, D).astype(out_ref.dtype)


def prepare_params(params):
    """One-time weight prep, hoisted off the per-call path."""
    wqkv, qb, vb, wo, bo, gamma, beta = params
    wq = wqkv[:, 0 * D:1 * D] * SCALE          # fold 1/sqrt(DH) into the q projection
    wk = wqkv[:, 1 * D:2 * D]
    wv = wqkv[:, 2 * D:3 * D]
    # Per-head layouts so the kernel never slices the lane (hidden) axis:
    wq_h = wq.reshape(D, H, DH).transpose(1, 0, 2)          # (H, D, DH)
    wk_h = wk.reshape(D, H, DH).transpose(1, 0, 2)
    wv_h = wv.reshape(D, H, DH).transpose(1, 0, 2)
    qb_h = (qb.reshape(H, DH) * SCALE).reshape(H, 1, DH)     # (H, 1, DH)
    vb_h = vb.reshape(H, DH).reshape(H, 1, DH)               # (H, 1, DH)
    wo_h = wo.reshape(H, DH, D)                              # rows h*DH:(h+1)*DH of wo
    return (wq_h, wk_h, wv_h, qb_h, vb_h, wo_h,
            bo.reshape(1, D), gamma.reshape(1, D), beta.reshape(1, D))


def layoutlmv2_attention(hidden_states, attention_mask, rel_pos, rel_2d_pos, prepared):
    (wq_h, wk_h, wv_h, qb_h, vb_h, wo_h, bo2, gamma2, beta2) = prepared
    out_shape = (
        jax.ShapeDtypeStruct((B, S, D), jnp.float32),
        jax.ShapeDtypeStruct((B, H, S, S), jnp.float32),
    )
    # Grid-less call: whole working set (a few KiB) lives in VMEM; no per-step
    # pipeline overhead at these toy shapes. See TODO at top for production tiling.
    return pl.pallas_call(
        _attention_kernel,
        out_shape=out_shape,
    )(hidden_states, attention_mask, rel_pos, rel_2d_pos,
      wq_h, wk_h, wv_h, qb_h, vb_h, wo_h, bo2, gamma2, beta2)


def _reference(hidden_states, attention_mask, rel_pos, rel_2d_pos, params):
    """Pure-JAX mirror of the PyTorch forward (fast_qkv, eval mode)."""
    wqkv, qb, vb, wo, bo, gamma, beta = params
    qkv = hidden_states @ wqkv                               # (B, S, 3D)
    q, k, v = jnp.split(qkv, 3, axis=-1)
    q = q + qb.reshape(1, 1, D)
    v = v + vb.reshape(1, 1, D)

    def split_heads(x):
        return x.reshape(B, S, H, DH).transpose(0, 2, 1, 3)  # (B, H, S, DH)

    ql, kl, vl = split_heads(q), split_heads(k), split_heads(v)
    ql = ql * SCALE
    scores = jnp.einsum("bhqd,bhkd->bhqk", ql, kl) + rel_pos + rel_2d_pos
    scores = jnp.where(attention_mask != 0.0, -jnp.inf, scores)
    probs = jax.nn.softmax(scores, axis=-1)
    ctx = jnp.einsum("bhqk,bhkd->bhqd", probs, vl)
    ctx = ctx.transpose(0, 2, 1, 3).reshape(B, S, D)
    dense = ctx @ wo + bo.reshape(1, 1, D)
    x = dense + hidden_states
    mean = jnp.mean(x, axis=-1, keepdims=True)
    var = jnp.mean((x - mean) ** 2, axis=-1, keepdims=True)
    out = (x - mean) / jnp.sqrt(var + EPS) * gamma.reshape(1, 1, D) + beta.reshape(1, 1, D)
    return out, probs


if __name__ == "__main__":
    key = jax.random.PRNGKey(0)
    keys = jax.random.split(key, 10)

    hidden_states = jax.random.normal(keys[0], (B, S, D), dtype=jnp.float32)
    rel_pos = 0.1 * jax.random.normal(keys[1], (B, H, S, S), dtype=jnp.float32)
    rel_2d_pos = 0.1 * jax.random.normal(keys[2], (B, H, S, S), dtype=jnp.float32)

    # padding-style mask: batch 1 masks out the last 2 key positions (nonzero == masked)
    mask = jnp.zeros((B, 1, S, S), dtype=jnp.float32)
    mask = mask.at[1, 0, :, S - 2:].set(1.0)

    # deterministic parameter init (synthetic; no checkpoint load)
    wqkv = 0.05 * jax.random.normal(keys[3], (D, 3 * D), dtype=jnp.float32)
    qb = 0.05 * jax.random.normal(keys[4], (1, D), dtype=jnp.float32)
    vb = 0.05 * jax.random.normal(keys[5], (1, D), dtype=jnp.float32)
    wo = 0.05 * jax.random.normal(keys[6], (D, D), dtype=jnp.float32)
    bo = 0.05 * jax.random.normal(keys[7], (1, D), dtype=jnp.float32)
    gamma = 1.0 + 0.05 * jax.random.normal(keys[8], (1, D), dtype=jnp.float32)
    beta = 0.05 * jax.random.normal(keys[9], (1, D), dtype=jnp.float32)
    params = (wqkv, qb, vb, wo, bo, gamma, beta)

    prepared = prepare_params(params)   # one-time weight prep (off the request path)

    out, probs = layoutlmv2_attention(hidden_states, mask, rel_pos, rel_2d_pos, prepared)
    jax.block_until_ready((out, probs))

    ref_out, ref_probs = _reference(hidden_states, mask, rel_pos, rel_2d_pos, params)
    assert jnp.allclose(out, ref_out, atol=1e-4, rtol=1e-4)
    assert jnp.allclose(probs, ref_probs, atol=1e-5, rtol=1e-5)

    print("KERNEL_OK")
</pallas_src>

<mosaic_0001>
module attributes {stable_mosaic.version = 11 : i64} {
  func.func @_attention_kernel(%arg0: memref<2x8x32xf32, #tpu.memory_space<vmem>>, %arg1: memref<2x1x8x8xf32, #tpu.memory_space<vmem>>, %arg2: memref<2x4x8x8xf32, #tpu.memory_space<vmem>>, %arg3: memref<2x4x8x8xf32, #tpu.memory_space<vmem>>, %arg4: memref<4x32x8xf32, #tpu.memory_space<vmem>>, %arg5: memref<4x32x8xf32, #tpu.memory_space<vmem>>, %arg6: memref<4x32x8xf32, #tpu.memory_space<vmem>>, %arg7: memref<4x1x8xf32, #tpu.memory_space<vmem>>, %arg8: memref<4x1x8xf32, #tpu.memory_space<vmem>>, %arg9: memref<4x8x32xf32, #tpu.memory_space<vmem>>, %arg10: memref<1x32xf32, #tpu.memory_space<vmem>>, %arg11: memref<1x32xf32, #tpu.memory_space<vmem>>, %arg12: memref<1x32xf32, #tpu.memory_space<vmem>>, %arg13: memref<2x8x32xf32, #tpu.memory_space<vmem>>, %arg14: memref<2x4x8x8xf32, #tpu.memory_space<vmem>>) attributes {dimension_semantics = [], scalar_prefetch = 0 : i64, scratch_operands = 0 : i64, tpu.core_type = #tpu.core_type<tc>} {
    %c0 = arith.constant 0 : index
    %c0_0 = arith.constant 0 : index
    %c0_1 = arith.constant 0 : index
    %0 = vector.load %arg0[%c0, %c0_0, %c0_1] : memref<2x8x32xf32, #tpu.memory_space<vmem>>, vector<2x8x32xf32>
    %1 = vector.shape_cast %0 : vector<2x8x32xf32> to vector<16x32xf32>
    %c0_2 = arith.constant 0 : index
    %c0_3 = arith.constant 0 : index
    %c0_4 = arith.constant 0 : index
    %c0_5 = arith.constant 0 : index
    %2 = vector.load %arg1[%c0_2, %c0_3, %c0_4, %c0_5] : memref<2x1x8x8xf32, #tpu.memory_space<vmem>>, vector<2x1x8x8xf32>
    %3 = vector.shape_cast %2 : vector<2x1x8x8xf32> to vector<2x8x8xf32>
    %cst = arith.constant 0.000000e+00 : f32
    %4 = vector.broadcast %cst : f32 to vector<2x8x8xf32>
    %5 = arith.cmpf one, %3, %4 : vector<2x8x8xf32>
    %cst_6 = arith.constant -1.000000e+30 : f32
    %cst_7 = arith.constant 0.000000e+00 : f32
    %6 = vector.broadcast %cst_6 : f32 to vector<2x8x8xf32>
    %7 = vector.broadcast %cst_7 : f32 to vector<2x8x8xf32>
    %8 = arith.select %5, %6, %7 : vector<2x8x8xi1>, vector<2x8x8xf32>
    %c0_8 = arith.constant 0 : index
    %c0_9 = arith.constant 0 : index
    %c0_10 = arith.constant 0 : index
    %c0_11 = arith.constant 0 : index
    %9 = vector.load %arg2[%c0_8, %c0_9, %c0_10, %c0_11] : memref<2x4x8x8xf32, #tpu.memory_space<vmem>>, vector<2x4x8x8xf32>
    %c0_12 = arith.constant 0 : index
    %c0_13 = arith.constant 0 : index
    %c0_14 = arith.constant 0 : index
    %c0_15 = arith.constant 0 : index
    %10 = vector.load %arg3[%c0_12, %c0_13, %c0_14, %c0_15] : memref<2x4x8x8xf32, #tpu.memory_space<vmem>>, vector<2x4x8x8xf32>
    %c0_16 = arith.constant 0 : index
    %c0_17 = arith.constant 0 : index
    %c0_18 = arith.constant 0 : index
    %11 = vector.load %arg4[%c0_16, %c0_17, %c0_18] : memref<4x32x8xf32, #tpu.memory_space<vmem>>, vector<1x32x8xf32>
    %12 = vector.shape_cast %11 : vector<1x32x8xf32> to vector<32x8xf32>
    %cst_19 = arith.constant dense<0.000000e+00> : vector<16x8xf32>
    %13 = tpu.matmul %1, %12, %cst_19 {dimension_numbers = #tpu.dot_dimension_numbers<[1], [0], [0], [1], [0, 0, 1, 1], [], []>} : vector<16x32xf32>, vector<32x8xf32>, vector<16x8xf32> -> vector<16x8xf32>
    %c0_20 = arith.constant 0 : index
    %c0_21 = arith.constant 0 : index
    %c0_22 = arith.constant 0 : index
    %14 = vector.load %arg7[%c0_20, %c0_21, %c0_22] : memref<4x1x8xf32, #tpu.memory_space<vmem>>, vector<1x1x8xf32>
    %15 = vector.shape_cast %14 : vector<1x1x8xf32> to vector<1x8xf32>
    %16 = vector.broadcast %15 : vector<1x8xf32> to vector<16x8xf32>
    %17 = arith.addf %13, %16 : vector<16x8xf32>
    %c0_23 = arith.constant 0 : index
    %c0_24 = arith.constant 0 : index
    %c0_25 = arith.constant 0 : index
    %18 = vector.load %arg5[%c0_23, %c0_24, %c0_25] : memref<4x32x8xf32, #tpu.memory_space<vmem>>, vector<1x32x8xf32>
    %19 = vector.shape_cast %18 : vector<1x32x8xf32> to vector<32x8xf32>
    %cst_26 = arith.constant dense<0.000000e+00> : vector<16x8xf32>
    %20 = tpu.matmul %1, %19, %cst_26 {dimension_numbers = #tpu.dot_dimension_numbers<[1], [0], [0], [1], [0, 0, 1, 1], [], []>} : vector<16x32xf32>, vector<32x8xf32>, vector<16x8xf32> -> vector<16x8xf32>
    %c0_27 = arith.constant 0 : index
    %c0_28 = arith.constant 0 : index
    %c0_29 = arith.constant 0 : index
    %21 = vector.load %arg6[%c0_27, %c0_28, %c0_29] : memref<4x32x8xf32, #tpu.memory_space<vmem>>, vector<1x32x8xf32>
    %22 = vector.shape_cast %21 : vector<1x32x8xf32> to vector<32x8xf32>
    %cst_30 = arith.constant dense<0.000000e+00> : vector<16x8xf32>
    %23 = tpu.matmul %1, %22, %cst_30 {dimension_numbers = #tpu.dot_dimension_numbers<[1], [0], [0], [1], [0, 0, 1, 1], [], []>} : vector<16x32xf32>, vector<32x8xf32>, vector<16x8xf32> -> vector<16x8xf32>
    %c0_31 = arith.constant 0 : index
    %c0_32 = arith.constant 0 : index
    %c0_33 = arith.constant 0 : index
    %24 = vector.load %arg8[%c0_31, %c0_32, %c0_33] : memref<4x1x8xf32, #tpu.memory_space<vmem>>, vector<1x1x8xf32>
    %25 = vector.shape_cast %24 : vector<1x1x8xf32> to vector<1x8xf32>
    %26 = vector.broadcast %25 : vector<1x8xf32> to vector<16x8xf32>
    %27 = arith.addf %23, %26 : vector<16x8xf32>
    %28 = vector.shape_cast %17 : vector<16x8xf32> to vector<2x8x8xf32>
    %29 = vector.shape_cast %20 : vector<16x8xf32> to vector<2x8x8xf32>
    %30 = vector.shape_cast %27 : vector<16x8xf32> to vector<2x8x8xf32>
    "tpu.trace_start"() <{level = 10 : i32, message = "bqd,bkd->bqk"}> : () -> ()
    %cst_34 = arith.constant dense<0.000000e+00> : vector<2x8x8xf32>
    %31 = tpu.matmul %28, %29, %cst_34 {dimension_numbers = #tpu.dot_dimension_numbers<[2], [2], [1], [1], [0, 0, 0, 1, 1, 1], [0], [0]>} : vector<2x8x8xf32>, vector<2x8x8xf32>, vector<2x8x8xf32> -> vector<2x8x8xf32>
    "tpu.trace_stop"() : () -> ()
    %32 = vector.extract_strided_slice %9 {offsets = [0, 0, 0, 0], sizes = [2, 1, 8, 8], strides = [1, 1, 1, 1]} : vector<2x4x8x8xf32> to vector<2x1x8x8xf32>
    %33 = vector.shape_cast %32 : vector<2x1x8x8xf32> to vector<2x8x8xf32>
    %34 = arith.addf %31, %33 : vector<2x8x8xf32>
    %35 = vector.extract_strided_slice %10 {offsets = [0, 0, 0, 0], sizes = [2, 1, 8, 8], strides = [1, 1, 1, 1]} : vector<2x4x8x8xf32> to vector<2x1x8x8xf32>
    %36 = vector.shape_cast %35 : vector<2x1x8x8xf32> to vector<2x8x8xf32>
    %37 = arith.addf %34, %36 : vector<2x8x8xf32>
    %38 = arith.addf %37, %8 : vector<2x8x8xf32>
    %cst_35 = arith.constant dense<0xFF800000> : vector<2x8xf32>
    %39 = vector.multi_reduction <maximumf>, %38, %cst_35 [2] : vector<2x8x8xf32> to vector<2x8xf32>
    %40 = vector.shape_cast %39 : vector<2x8xf32> to vector<2x8x1xf32>
    %41 = vector.broadcast %40 : vector<2x8x1xf32> to vector<2x8x8xf32>
    %42 = arith.subf %38, %41 : vector<2x8x8xf32>
    %43 = math.exp %42 : vector<2x8x8xf32>
    %cst_36 = arith.constant dense<0.000000e+00> : vector<2x8xf32>
    %44 = vector.multi_reduction <add>, %43, %cst_36 [2] : vector<2x8x8xf32> to vector<2x8xf32>
    %45 = vector.shape_cast %44 : vector<2x8xf32> to vector<2x8x1xf32>
    %cst_37 = arith.constant 1.000000e+00 : f32
    %46 = vector.broadcast %cst_37 : f32 to vector<2x8x1xf32>
    %47 = arith.divf %46, %45 : vector<2x8x1xf32>
    %48 = vector.broadcast %47 : vector<2x8x1xf32> to vector<2x8x8xf32>
    %49 = arith.mulf %43, %48 : vector<2x8x8xf32>
    "tpu.trace_start"() <{level = 10 : i32, message = "bqk,bkd->bqd"}> : () -> ()
    %cst_38 = arith.constant dense<0.000000e+00> : vector<2x8x8xf32>
    %50 = tpu.matmul %49, %30, %cst_38 {dimension_numbers = #tpu.dot_dimension_numbers<[2], [1], [1], [2], [0, 0, 0, 1, 1, 2], [0], [0]>} : vector<2x8x8xf32>, vector<2x8x8xf32>, vector<2x8x8xf32> -> vector<2x8x8xf32>
    "tpu.trace_stop"() : () -> ()
    %51 = vector.shape_cast %50 : vector<2x8x8xf32> to vector<16x8xf32>
    %c0_39 = arith.constant 0 : index
    %c0_40 = arith.constant 0 : index
    %c0_41 = arith.constant 0 : index
    %52 = vector.load %arg9[%c0_39, %c0_40, %c0_41] : memref<4x8x32xf32, #tpu.memory_space<vmem>>, vector<1x8x32xf32>
    %53 = vector.shape_cast %52 : vector<1x8x32xf32> to vector<8x32xf32>
    %cst_42 = arith.constant dense<0.000000e+00> : vector<16x32xf32>
    %54 = tpu.matmul %51, %53, %cst_42 {dimension_numbers = #tpu.dot_dimension_numbers<[1], [0], [0], [1], [0, 0, 1, 1], [], []>} : vector<16x8xf32>, vector<8x32xf32>, vector<16x32xf32> -> vector<16x32xf32>
    %c1 = arith.constant 1 : index
    %c0_43 = arith.constant 0 : index
    %c0_44 = arith.constant 0 : index
    %55 = vector.load %arg4[%c1, %c0_43, %c0_44] : memref<4x32x8xf32, #tpu.memory_space<vmem>>, vector<1x32x8xf32>
    %56 = vector.shape_cast %55 : vector<1x32x8xf32> to vector<32x8xf32>
    %cst_45 = arith.constant dense<0.000000e+00> : vector<16x8xf32>
    %57 = tpu.matmul %1, %56, %cst_45 {dimension_numbers = #tpu.dot_dimension_numbers<[1], [0], [0], [1], [0, 0, 1, 1], [], []>} : vector<16x32xf32>, vector<32x8xf32>, vector<16x8xf32> -> vector<16x8xf32>
    %c1_46 = arith.constant 1 : index
    %c0_47 = arith.constant 0 : index
    %c0_48 = arith.constant 0 : index
    %58 = vector.load %arg7[%c1_46, %c0_47, %c0_48] : memref<4x1x8xf32, #tpu.memory_space<vmem>>, vector<1x1x8xf32>
    %59 = vector.shape_cast %58 : vector<1x1x8xf32> to vector<1x8xf32>
    %60 = vector.broadcast %59 : vector<1x8xf32> to vector<16x8xf32>
    %61 = arith.addf %57, %60 : vector<16x8xf32>
    %c1_49 = arith.constant 1 : index
    %c0_50 = arith.constant 0 : index
    %c0_51 = arith.constant 0 : index
    %62 = vector.load %arg5[%c1_49, %c0_50, %c0_51] : memref<4x32x8xf32, #tpu.memory_space<vmem>>, vector<1x32x8xf32>
    %63 = vector.shape_cast %62 : vector<1x32x8xf32> to vector<32x8xf32>
    %cst_52 = arith.constant dense<0.000000e+00> : vector<16x8xf32>
    %64 = tpu.matmul %1, %63, %cst_52 {dimension_numbers = #tpu.dot_dimension_numbers<[1], [0], [0], [1], [0, 0, 1, 1], [], []>} : vector<16x32xf32>, vector<32x8xf32>, vector<16x8xf32> -> vector<16x8xf32>
    %c1_53 = arith.constant 1 : index
    %c0_54 = arith.constant 0 : index
    %c0_55 = arith.constant 0 : index
    %65 = vector.load %arg6[%c1_53, %c0_54, %c0_55] : memref<4x32x8xf32, #tpu.memory_space<vmem>>, vector<1x32x8xf32>
    %66 = vector.shape_cast %65 : vector<1x32x8xf32> to vector<32x8xf32>
    %cst_56 = arith.constant dense<0.000000e+00> : vector<16x8xf32>
    %67 = tpu.matmul %1, %66, %cst_56 {dimension_numbers = #tpu.dot_dimension_numbers<[1], [0], [0], [1], [0, 0, 1, 1], [], []>} : vector<16x32xf32>, vector<32x8xf32>, vector<16x8xf32> -> vector<16x8xf32>
    %c1_57 = arith.constant 1 : index
    %c0_58 = arith.constant 0 : index
    %c0_59 = arith.constant 0 : index
    %68 = vector.load %arg8[%c1_57, %c0_58, %c0_59] : memref<4x1x8xf32, #tpu.memory_space<vmem>>, vector<1x1x8xf32>
    %69 = vector.shape_cast %68 : vector<1x1x8xf32> to vector<1x8xf32>
    %70 = vector.broadcast %69 : vector<1x8xf32> to vector<16x8xf32>
    %71 = arith.addf %67, %70 : vector<16x8xf32>
    %72 = vector.shape_cast %61 : vector<16x8xf32> to vector<2x8x8xf32>
    %73 = vector.shape_cast %64 : vector<16x8xf32> to vector<2x8x8xf32>
    %74 = vector.shape_cast %71 : vector<16x8xf32> to vector<2x8x8xf32>
    "tpu.trace_start"() <{level = 10 : i32, message = "bqd,bkd->bqk"}> : () -> ()
    %cst_60 = arith.constant dense<0.000000e+00> : vector<2x8x8xf32>
    %75 = tpu.matmul %72, %73, %cst_60 {dimension_numbers = #tpu.dot_dimension_numbers<[2], [2], [1], [1], [0, 0, 0, 1, 1, 1], [0], [0]>} : vector<2x8x8xf32>, vector<2x8x8xf32>, vector<2x8x8xf32> -> vector<2x8x8xf32>
    "tpu.trace_stop"() : () -> ()
    %76 = vector.extract_strided_slice %9 {offsets = [0, 1, 0, 0], sizes = [2, 1, 8, 8], strides = [1, 1, 1, 1]} : vector<2x4x8x8xf32> to vector<2x1x8x8xf32>
    %77 = vector.shape_cast %76 : vector<2x1x8x8xf32> to vector<2x8x8xf32>
    %78 = arith.addf %75, %77 : vector<2x8x8xf32>
    %79 = vector.extract_strided_slice %10 {offsets = [0, 1, 0, 0], sizes = [2, 1, 8, 8], strides = [1, 1, 1, 1]} : vector<2x4x8x8xf32> to vector<2x1x8x8xf32>
    %80 = vector.shape_cast %79 : vector<2x1x8x8xf32> to vector<2x8x8xf32>
    %81 = arith.addf %78, %80 : vector<2x8x8xf32>
    %82 = arith.addf %81, %8 : vector<2x8x8xf32>
    %cst_61 = arith.constant dense<0xFF800000> : vector<2x8xf32>
    %83 = vector.multi_reduction <maximumf>, %82, %cst_61 [2] : vector<2x8x8xf32> to vector<2x8xf32>
    %84 = vector.shape_cast %83 : vector<2x8xf32> to vector<2x8x1xf32>
    %85 = vector.broadcast %84 : vector<2x8x1xf32> to vector<2x8x8xf32>
    %86 = arith.subf %82, %85 : vector<2x8x8xf32>
    %87 = math.exp %86 : vector<2x8x8xf32>
    %cst_62 = arith.constant dense<0.000000e+00> : vector<2x8xf32>
    %88 = vector.multi_reduction <add>, %87, %cst_62 [2] : vector<2x8x8xf32> to vector<2x8xf32>
    %89 = vector.shape_cast %88 : vector<2x8xf32> to vector<2x8x1xf32>
    %cst_63 = arith.constant 1.000000e+00 : f32
    %90 = vector.broadcast %cst_63 : f32 to vector<2x8x1xf32>
    %91 = arith.divf %90, %89 : vector<2x8x1xf32>
    %92 = vector.broadcast %91 : vector<2x8x1xf32> to vector<2x8x8xf32>
    %93 = arith.mulf %87, %92 : vector<2x8x8xf32>
    "tpu.trace_start"() <{level = 10 : i32, message = "bqk,bkd->bqd"}> : () -> ()
    %cst_64 = arith.constant dense<0.000000e+00> : vector<2x8x8xf32>
    %94 = tpu.matmul %93, %74, %cst_64 {dimension_numbers = #tpu.dot_dimension_numbers<[2], [1], [1], [2], [0, 0, 0, 1, 1, 2], [0], [0]>} : vector<2x8x8xf32>, vector<2x8x8xf32>, vector<2x8x8xf32> -> vector<2x8x8xf32>
    "tpu.trace_stop"() : () -> ()
    %95 = vector.shape_cast %94 : vector<2x8x8xf32> to vector<16x8xf32>
    %c1_65 = arith.constant 1 : index
    %c0_66 = arith.constant 0 : index
    %c0_67 = arith.constant 0 : index
    %96 = vector.load %arg9[%c1_65, %c0_66, %c0_67] : memref<4x8x32xf32, #tpu.memory_space<vmem>>, vector<1x8x32xf32>
    %97 = vector.shape_cast %96 : vector<1x8x32xf32> to vector<8x32xf32>
    %cst_68 = arith.constant dense<0.000000e+00> : vector<16x32xf32>
    %98 = tpu.matmul %95, %97, %cst_68 {dimension_numbers = #tpu.dot_dimension_numbers<[1], [0], [0], [1], [0, 0, 1, 1], [], []>} : vector<16x8xf32>, vector<8x32xf32>, vector<16x32xf32> -> vector<16x32xf32>
    %99 = arith.addf %54, %98 : vector<16x32xf32>
    %c2 = arith.constant 2 : index
    %c0_69 = arith.constant 0 : index
    %c0_70 = arith.constant 0 : index
    %100 = vector.load %arg4[%c2, %c0_69, %c0_70] : memref<4x32x8xf32, #tpu.memory_space<vmem>>, vector<1x32x8xf32>
    %101 = vector.shape_cast %100 : vector<1x32x8xf32> to vector<32x8xf32>
    %cst_71 = arith.constant dense<0.000000e+00> : vector<16x8xf32>
    %102 = tpu.matmul %1, %101, %cst_71 {dimension_numbers = #tpu.dot_dimension_numbers<[1], [0], [0], [1], [0, 0, 1, 1], [], []>} : vector<16x32xf32>, vector<32x8xf32>, vector<16x8xf32> -> vector<16x8xf32>
    %c2_72 = arith.constant 2 : index
    %c0_73 = arith.constant 0 : index
    %c0_74 = arith.constant 0 : index
    %103 = vector.load %arg7[%c2_72, %c0_73, %c0_74] : memref<4x1x8xf32, #tpu.memory_space<vmem>>, vector<1x1x8xf32>
    %104 = vector.shape_cast %103 : vector<1x1x8xf32> to vector<1x8xf32>
    %105 = vector.broadcast %104 : vector<1x8xf32> to vector<16x8xf32>
    %106 = arith.addf %102, %105 : vector<16x8xf32>
    %c2_75 = arith.constant 2 : index
    %c0_76 = arith.constant 0 : index
    %c0_77 = arith.constant 0 : index
    %107 = vector.load %arg5[%c2_75, %c0_76, %c0_77] : memref<4x32x8xf32, #tpu.memory_space<vmem>>, vector<1x32x8xf32>
    %108 = vector.shape_cast %107 : vector<1x32x8xf32> to vector<32x8xf32>
    %cst_78 = arith.constant dense<0.000000e+00> : vector<16x8xf32>
    %109 = tpu.matmul %1, %108, %cst_78 {dimension_numbers = #tpu.dot_dimension_numbers<[1], [0], [0], [1], [0, 0, 1, 1], [], []>} : vector<16x32xf32>, vector<32x8xf32>, vector<16x8xf32> -> vector<16x8xf32>
    %c2_79 = arith.constant 2 : index
    %c0_80 = arith.constant 0 : index
    %c0_81 = arith.constant 0 : index
    %110 = vector.load %arg6[%c2_79, %c0_80, %c0_81] : memref<4x32x8xf32, #tpu.memory_space<vmem>>, vector<1x32x8xf32>
    %111 = vector.shape_cast %110 : vector<1x32x8xf32> to vector<32x8xf32>
    %cst_82 = arith.constant dense<0.000000e+00> : vector<16x8xf32>
    %112 = tpu.matmul %1, %111, %cst_82 {dimension_numbers = #tpu.dot_dimension_numbers<[1], [0], [0], [1], [0, 0, 1, 1], [], []>} : vector<16x32xf32>, vector<32x8xf32>, vector<16x8xf32> -> vector<16x8xf32>
    %c2_83 = arith.constant 2 : index
    %c0_84 = arith.constant 0 : index
    %c0_85 = arith.constant 0 : index
    %113 = vector.load %arg8[%c2_83, %c0_84, %c0_85] : memref<4x1x8xf32, #tpu.memory_space<vmem>>, vector<1x1x8xf32>
    %114 = vector.shape_cast %113 : vector<1x1x8xf32> to vector<1x8xf32>
    %115 = vector.broadcast %114 : vector<1x8xf32> to vector<16x8xf32>
    %116 = arith.addf %112, %115 : vector<16x8xf32>
    %117 = vector.shape_cast %106 : vector<16x8xf32> to vector<2x8x8xf32>
    %118 = vector.shape_cast %109 : vector<16x8xf32> to vector<2x8x8xf32>
    %119 = vector.shape_cast %116 : vector<16x8xf32> to vector<2x8x8xf32>
    "tpu.trace_start"() <{level = 10 : i32, message = "bqd,bkd->bqk"}> : () -> ()
    %cst_86 = arith.constant dense<0.000000e+00> : vector<2x8x8xf32>
    %120 = tpu.matmul %117, %118, %cst_86 {dimension_numbers = #tpu.dot_dimension_numbers<[2], [2], [1], [1], [0, 0, 0, 1, 1, 1], [0], [0]>} : vector<2x8x8xf32>, vector<2x8x8xf32>, vector<2x8x8xf32> -> vector<2x8x8xf32>
    "tpu.trace_stop"() : () -> ()
    %121 = vector.extract_strided_slice %9 {offsets = [0, 2, 0, 0], sizes = [2, 1, 8, 8], strides = [1, 1, 1, 1]} : vector<2x4x8x8xf32> to vector<2x1x8x8xf32>
    %122 = vector.shape_cast %121 : vector<2x1x8x8xf32> to vector<2x8x8xf32>
    %123 = arith.addf %120, %122 : vector<2x8x8xf32>
    %124 = vector.extract_strided_slice %10 {offsets = [0, 2, 0, 0], sizes = [2, 1, 8, 8], strides = [1, 1, 1, 1]} : vector<2x4x8x8xf32> to vector<2x1x8x8xf32>
    %125 = vector.shape_cast %124 : vector<2x1x8x8xf32> to vector<2x8x8xf32>
    %126 = arith.addf %123, %125 : vector<2x8x8xf32>
    %127 = arith.addf %126, %8 : vector<2x8x8xf32>
    %cst_87 = arith.constant dense<0xFF800000> : vector<2x8xf32>
    %128 = vector.multi_reduction <maximumf>, %127, %cst_87 [2] : vector<2x8x8xf32> to vector<2x8xf32>
    %129 = vector.shape_cast %128 : vector<2x8xf32> to vector<2x8x1xf32>
    %130 = vector.broadcast %129 : vector<2x8x1xf32> to vector<2x8x8xf32>
    %131 = arith.subf %127, %130 : vector<2x8x8xf32>
    %132 = math.exp %131 : vector<2x8x8xf32>
    %cst_88 = arith.constant dense<0.000000e+00> : vector<2x8xf32>
    %133 = vector.multi_reduction <add>, %132, %cst_88 [2] : vector<2x8x8xf32> to vector<2x8xf32>
    %134 = vector.shape_cast %133 : vector<2x8xf32> to vector<2x8x1xf32>
    %cst_89 = arith.constant 1.000000e+00 : f32
    %135 = vector.broadcast %cst_89 : f32 to vector<2x8x1xf32>
    %136 = arith.divf %135, %134 : vector<2x8x1xf32>
    %137 = vector.broadcast %136 : vector<2x8x1xf32> to vector<2x8x8xf32>
    %138 = arith.mulf %132, %137 : vector<2x8x8xf32>
    "tpu.trace_start"() <{level = 10 : i32, message = "bqk,bkd->bqd"}> : () -> ()
    %cst_90 = arith.constant dense<0.000000e+00> : vector<2x8x8xf32>
    %139 = tpu.matmul %138, %119, %cst_90 {dimension_numbers = #tpu.dot_dimension_numbers<[2], [1], [1], [2], [0, 0, 0, 1, 1, 2], [0], [0]>} : vector<2x8x8xf32>, vector<2x8x8xf32>, vector<2x8x8xf32> -> vector<2x8x8xf32>
    "tpu.trace_stop"() : () -> ()
    %140 = vector.shape_cast %139 : vector<2x8x8xf32> to vector<16x8xf32>
    %c2_91 = arith.constant 2 : index
    %c0_92 = arith.constant 0 : index
    %c0_93 = arith.constant 0 : index
    %141 = vector.load %arg9[%c2_91, %c0_92, %c0_93] : memref<4x8x32xf32, #tpu.memory_space<vmem>>, vector<1x8x32xf32>
    %142 = vector.shape_cast %141 : vector<1x8x32xf32> to vector<8x32xf32>
    %cst_94 = arith.constant dense<0.000000e+00> : vector<16x32xf32>
    %143 = tpu.matmul %140, %142, %cst_94 {dimension_numbers = #tpu.dot_dimension_numbers<[1], [0], [0], [1], [0, 0, 1, 1], [], []>} : vector<16x8xf32>, vector<8x32xf32>, vector<16x32xf32> -> vector<16x32xf32>
    %144 = arith.addf %99, %143 : vector<16x32xf32>
    %c3 = arith.constant 3 : index
    %c0_95 = arith.constant 0 : index
    %c0_96 = arith.constant 0 : index
    %145 = vector.load %arg4[%c3, %c0_95, %c0_96] : memref<4x32x8xf32, #tpu.memory_space<vmem>>, vector<1x32x8xf32>
    %146 = vector.shape_cast %145 : vector<1x32x8xf32> to vector<32x8xf32>
    %cst_97 = arith.constant dense<0.000000e+00> : vector<16x8xf32>
    %147 = tpu.matmul %1, %146, %cst_97 {dimension_numbers = #tpu.dot_dimension_numbers<[1], [0], [0], [1], [0, 0, 1, 1], [], []>} : vector<16x32xf32>, vector<32x8xf32>, vector<16x8xf32> -> vector<16x8xf32>
    %c3_98 = arith.constant 3 : index
    %c0_99 = arith.constant 0 : index
    %c0_100 = arith.constant 0 : index
    %148 = vector.load %arg7[%c3_98, %c0_99, %c0_100] : memref<4x1x8xf32, #tpu.memory_space<vmem>>, vector<1x1x8xf32>
    %149 = vector.shape_cast %148 : vector<1x1x8xf32> to vector<1x8xf32>
    %150 = vector.broadcast %149 : vector<1x8xf32> to vector<16x8xf32>
    %151 = arith.addf %147, %150 : vector<16x8xf32>
    %c3_101 = arith.constant 3 : index
    %c0_102 = arith.constant 0 : index
    %c0_103 = arith.constant 0 : index
    %152 = vector.load %arg5[%c3_101, %c0_102, %c0_103] : memref<4x32x8xf32, #tpu.memory_space<vmem>>, vector<1x32x8xf32>
    %153 = vector.shape_cast %152 : vector<1x32x8xf32> to vector<32x8xf32>
    %cst_104 = arith.constant dense<0.000000e+00> : vector<16x8xf32>
    %154 = tpu.matmul %1, %153, %cst_104 {dimension_numbers = #tpu.dot_dimension_numbers<[1], [0], [0], [1], [0, 0, 1, 1], [], []>} : vector<16x32xf32>, vector<32x8xf32>, vector<16x8xf32> -> vector<16x8xf32>
    %c3_105 = arith.constant 3 : index
    %c0_106 = arith.constant 0 : index
    %c0_107 = arith.constant 0 : index
    %155 = vector.load %arg6[%c3_105, %c0_106, %c0_107] : memref<4x32x8xf32, #tpu.memory_space<vmem>>, vector<1x32x8xf32>
    %156 = vector.shape_cast %155 : vector<1x32x8xf32> to vector<32x8xf32>
    %cst_108 = arith.constant dense<0.000000e+00> : vector<16x8xf32>
    %157 = tpu.matmul %1, %156, %cst_108 {dimension_numbers = #tpu.dot_dimension_numbers<[1], [0], [0], [1], [0, 0, 1, 1], [], []>} : vector<16x32xf32>, vector<32x8xf32>, vector<16x8xf32> -> vector<16x8xf32>
    %c3_109 = arith.constant 3 : index
    %c0_110 = arith.constant 0 : index
    %c0_111 = arith.constant 0 : index
    %158 = vector.load %arg8[%c3_109, %c0_110, %c0_111] : memref<4x1x8xf32, #tpu.memory_space<vmem>>, vector<1x1x8xf32>
    %159 = vector.shape_cast %158 : vector<1x1x8xf32> to vector<1x8xf32>
    %160 = vector.broadcast %159 : vector<1x8xf32> to vector<16x8xf32>
    %161 = arith.addf %157, %160 : vector<16x8xf32>
    %162 = vector.shape_cast %151 : vector<16x8xf32> to vector<2x8x8xf32>
    %163 = vector.shape_cast %154 : vector<16x8xf32> to vector<2x8x8xf32>
    %164 = vector.shape_cast %161 : vector<16x8xf32> to vector<2x8x8xf32>
    "tpu.trace_start"() <{level = 10 : i32, message = "bqd,bkd->bqk"}> : () -> ()
    %cst_112 = arith.constant dense<0.000000e+00> : vector<2x8x8xf32>
    %165 = tpu.matmul %162, %163, %cst_112 {dimension_numbers = #tpu.dot_dimension_numbers<[2], [2], [1], [1], [0, 0, 0, 1, 1, 1], [0], [0]>} : vector<2x8x8xf32>, vector<2x8x8xf32>, vector<2x8x8xf32> -> vector<2x8x8xf32>
    "tpu.trace_stop"() : () -> ()
    %166 = vector.extract_strided_slice %9 {offsets = [0, 3, 0, 0], sizes = [2, 1, 8, 8], strides = [1, 1, 1, 1]} : vector<2x4x8x8xf32> to vector<2x1x8x8xf32>
    %167 = vector.shape_cast %166 : vector<2x1x8x8xf32> to vector<2x8x8xf32>
    %168 = arith.addf %165, %167 : vector<2x8x8xf32>
    %169 = vector.extract_strided_slice %10 {offsets = [0, 3, 0, 0], sizes = [2, 1, 8, 8], strides = [1, 1, 1, 1]} : vector<2x4x8x8xf32> to vector<2x1x8x8xf32>
    %170 = vector.shape_cast %169 : vector<2x1x8x8xf32> to vector<2x8x8xf32>
    %171 = arith.addf %168, %170 : vector<2x8x8xf32>
    %172 = arith.addf %171, %8 : vector<2x8x8xf32>
    %cst_113 = arith.constant dense<0xFF800000> : vector<2x8xf32>
    %173 = vector.multi_reduction <maximumf>, %172, %cst_113 [2] : vector<2x8x8xf32> to vector<2x8xf32>
    %174 = vector.shape_cast %173 : vector<2x8xf32> to vector<2x8x1xf32>
    %175 = vector.broadcast %174 : vector<2x8x1xf32> to vector<2x8x8xf32>
    %176 = arith.subf %172, %175 : vector<2x8x8xf32>
    %177 = math.exp %176 : vector<2x8x8xf32>
    %cst_114 = arith.constant dense<0.000000e+00> : vector<2x8xf32>
    %178 = vector.multi_reduction <add>, %177, %cst_114 [2] : vector<2x8x8xf32> to vector<2x8xf32>
    %179 = vector.shape_cast %178 : vector<2x8xf32> to vector<2x8x1xf32>
    %cst_115 = arith.constant 1.000000e+00 : f32
    %180 = vector.broadcast %cst_115 : f32 to vector<2x8x1xf32>
    %181 = arith.divf %180, %179 : vector<2x8x1xf32>
    %182 = vector.broadcast %181 : vector<2x8x1xf32> to vector<2x8x8xf32>
    %183 = arith.mulf %177, %182 : vector<2x8x8xf32>
    "tpu.trace_start"() <{level = 10 : i32, message = "bqk,bkd->bqd"}> : () -> ()
    %cst_116 = arith.constant dense<0.000000e+00> : vector<2x8x8xf32>
    %184 = tpu.matmul %183, %164, %cst_116 {dimension_numbers = #tpu.dot_dimension_numbers<[2], [1], [1], [2], [0, 0, 0, 1, 1, 2], [0], [0]>} : vector<2x8x8xf32>, vector<2x8x8xf32>, vector<2x8x8xf32> -> vector<2x8x8xf32>
    "tpu.trace_stop"() : () -> ()
    %185 = vector.shape_cast %184 : vector<2x8x8xf32> to vector<16x8xf32>
    %c3_117 = arith.constant 3 : index
    %c0_118 = arith.constant 0 : index
    %c0_119 = arith.constant 0 : index
    %186 = vector.load %arg9[%c3_117, %c0_118, %c0_119] : memref<4x8x32xf32, #tpu.memory_space<vmem>>, vector<1x8x32xf32>
    %187 = vector.shape_cast %186 : vector<1x8x32xf32> to vector<8x32xf32>
    %cst_120 = arith.constant dense<0.000000e+00> : vector<16x32xf32>
    %188 = tpu.matmul %185, %187, %cst_120 {dimension_numbers = #tpu.dot_dimension_numbers<[1], [0], [0], [1], [0, 0, 1, 1], [], []>} : vector<16x8xf32>, vector<8x32xf32>, vector<16x32xf32> -> vector<16x32xf32>
    %189 = arith.addf %144, %188 : vector<16x32xf32>
    %190 = vector.shape_cast %49 : vector<2x8x8xf32> to vector<2x1x8x8xf32>
    %191 = vector.shape_cast %93 : vector<2x8x8xf32> to vector<2x1x8x8xf32>
    %192 = vector.shape_cast %138 : vector<2x8x8xf32> to vector<2x1x8x8xf32>
    %193 = vector.shape_cast %183 : vector<2x8x8xf32> to vector<2x1x8x8xf32>
    %194 = tpu.concatenate %190, %191, %192, %193 in 1 : vector<2x1x8x8xf32>, vector<2x1x8x8xf32>, vector<2x1x8x8xf32>, vector<2x1x8x8xf32> -> vector<2x4x8x8xf32>
    %c0_121 = arith.constant 0 : index
    %c0_122 = arith.constant 0 : index
    %c0_123 = arith.constant 0 : index
    %c0_124 = arith.constant 0 : index
    %195 = vector.load %arg14[%c0_121, %c0_122, %c0_123, %c0_124] : memref<2x4x8x8xf32, #tpu.memory_space<vmem>>, vector<2x4x8x8xf32>
    tpu.vector_store %arg14[%c0_121, %c0_122, %c0_123, %c0_124], %194 {strides = array<i32>} : memref<2x4x8x8xf32, #tpu.memory_space<vmem>>, vector<2x4x8x8xf32>,
    %c0_125 = arith.constant 0 : index
    %c0_126 = arith.constant 0 : index
    %196 = vector.load %arg10[%c0_125, %c0_126] : memref<1x32xf32, #tpu.memory_space<vmem>>, vector<1x32xf32>
    %197 = vector.broadcast %196 : vector<1x32xf32> to vector<16x32xf32>
    %198 = arith.addf %189, %197 : vector<16x32xf32>
    %199 = arith.addf %198, %1 : vector<16x32xf32>
    %cst_127 = arith.constant dense<0.000000e+00> : vector<16xf32>
    %200 = vector.multi_reduction <add>, %199, %cst_127 [1] : vector<16x32xf32> to vector<16xf32>
    %201 = vector.shape_cast %200 : vector<16xf32> to vector<16x1xf32>
    %cst_128 = arith.constant 3.200000e+01 : f32
    %202 = vector.broadcast %cst_128 : f32 to vector<16x1xf32>
    %203 = arith.divf %201, %202 : vector<16x1xf32>
    %204 = vector.broadcast %203 : vector<16x1xf32> to vector<16x32xf32>
    %205 = arith.subf %199, %204 : vector<16x32xf32>
    %206 = arith.mulf %205, %205 : vector<16x32xf32>
    %cst_129 = arith.constant dense<0.000000e+00> : vector<16xf32>
    %207 = vector.multi_reduction <add>, %206, %cst_129 [1] : vector<16x32xf32> to vector<16xf32>
    %208 = vector.shape_cast %207 : vector<16xf32> to vector<16x1xf32>
    %cst_130 = arith.constant 3.200000e+01 : f32
    %209 = vector.broadcast %cst_130 : f32 to vector<16x1xf32>
    %210 = arith.divf %208, %209 : vector<16x1xf32>
    %211 = vector.broadcast %203 : vector<16x1xf32> to vector<16x32xf32>
    %212 = arith.subf %199, %211 : vector<16x32xf32>
    %cst_131 = arith.constant 9.99999996E-13 : f32
    %213 = vector.broadcast %cst_131 : f32 to vector<16x1xf32>
    %214 = arith.addf %210, %213 : vector<16x1xf32>
    %215 = math.rsqrt %214 : vector<16x1xf32>
    %216 = vector.broadcast %215 : vector<16x1xf32> to vector<16x32xf32>
    %217 = arith.mulf %212, %216 : vector<16x32xf32>
    %c0_132 = arith.constant 0 : index
    %c0_133 = arith.constant 0 : index
    %218 = vector.load %arg11[%c0_132, %c0_133] : memref<1x32xf32, #tpu.memory_space<vmem>>, vector<1x32xf32>
    %219 = vector.broadcast %218 : vector<1x32xf32> to vector<16x32xf32>
    %220 = arith.mulf %217, %219 : vector<16x32xf32>
    %c0_134 = arith.constant 0 : index
    %c0_135 = arith.constant 0 : index
    %221 = vector.load %arg12[%c0_134, %c0_135] : memref<1x32xf32, #tpu.memory_space<vmem>>, vector<1x32xf32>
    %222 = vector.broadcast %221 : vector<1x32xf32> to vector<16x32xf32>
    %223 = arith.addf %220, %222 : vector<16x32xf32>
    %224 = vector.shape_cast %223 : vector<16x32xf32> to vector<2x8x32xf32>
    %c0_136 = arith.constant 0 : index
    %c0_137 = arith.constant 0 : index
    %c0_138 = arith.constant 0 : index
    %225 = vector.load %arg13[%c0_136, %c0_137, %c0_138] : memref<2x8x32xf32, #tpu.memory_space<vmem>>, vector<2x8x32xf32>
    tpu.vector_store %arg13[%c0_136, %c0_137, %c0_138], %224 {strides = array<i32>} : memref<2x8x32xf32, #tpu.memory_space<vmem>>, vector<2x8x32xf32>,
    return
  }
}

</mosaic_0001>

<llo_original>
// kernel: tpu_custom_call.1
$region0: #{tpu_custom_call.1}
  #allocation0 [shape = 'u32[]', space=smem, size = 0x4, offset = 0x4, fixed_abs, tag = 'smem constant byte address 0x4 - core index']
  #allocation1 [shape = 'u32[144,128]{1,0:T(1,128)}', space=vmem, size = 0x12000, scoped, tag = 'internal scratch']
  %s0 = inlined_call_operand.vmem [shape: f32[2,8,32], index: 0, kind: input, shape index: {}]
  %s1 = inlined_call_operand.vmem [shape: f32[2,1,8,8], index: 1, kind: input, shape index: {}]
  %s2 = inlined_call_operand.vmem [shape: f32[2,4,8,8], index: 2, kind: input, shape index: {}]
  %s3 = inlined_call_operand.vmem [shape: f32[2,4,8,8], index: 3, kind: input, shape index: {}]
  %s4 = inlined_call_operand.vmem [shape: f32[4,32,8], index: 4, kind: input, shape index: {}]
  %s5 = inlined_call_operand.vmem [shape: f32[4,32,8], index: 5, kind: input, shape index: {}]
  %s6 = inlined_call_operand.vmem [shape: f32[4,32,8], index: 6, kind: input, shape index: {}]
  %s7 = inlined_call_operand.vmem [shape: f32[4,1,8], index: 7, kind: input, shape index: {}]
  %s8 = inlined_call_operand.vmem [shape: f32[4,1,8], index: 8, kind: input, shape index: {}]
  %s9 = inlined_call_operand.vmem [shape: f32[4,8,32], index: 9, kind: input, shape index: {}]
  %s10 = inlined_call_operand.vmem [shape: f32[1,32], index: 10, kind: input, shape index: {}]
  %s11 = inlined_call_operand.vmem [shape: f32[1,32], index: 11, kind: input, shape index: {}]
  %s12 = inlined_call_operand.vmem [shape: f32[1,32], index: 12, kind: input, shape index: {}]
  %s13 = inlined_call_operand.hbm [shape: f32[2,8,32], index: 13, kind: output, shape index: {0}]
  %s14 = inlined_call_operand.hbm [shape: f32[2,4,8,8], index: 14, kind: output, shape index: {1}]
  %15 = xla_tuple %s13, %s14
  %s16 = sld [smem:[#allocation0]]
  $region70: #{tpu_custom_call.1} parent=0
    _
  %s18 = ssub.s32 1, %s16
  %s19 = scalar_select 0, %s18, %s16
  $region1: #{tpu_custom_call.1} parent=0
    #allocation2 [shape = 'u8[8192]{0}', space=vmem, size = 0x2000, scoped, tag = 'output window, operand 0, single buffered']
    #allocation3 [shape = 's32[1]{0}', space=sflag, size = 0x4, scoped, tag = 'scoped memory for tpu_custom_call.1']
    #allocation4 [shape = 'u8[32768]{0}', space=vmem, size = 0x8000, scoped, tag = 'output window, operand 1, single buffered']
    #allocation5 [shape = 's32[1]{0}', space=sflag, size = 0x4, scoped, tag = 'scoped memory for tpu_custom_call.1']
    %20 = vsyncpa [#allocation3], 0
    %21 = vsyncpa [#allocation5], 0
    // Predicated region
    $region2: #{tpu_custom_call.1} parent=1 // pred_check
      _
    $region3: #{tpu_custom_call.1} parent=1 // pred_check_branch
      %23 = sbr.rel (0) target = $region5
    $region4: #{tpu_custom_call.1} parent=1 // pred_region
      _
    $region5: #{tpu_custom_call.1} parent=1 // pred_fallthru
      _
    // Predicated region
    $region6: #{tpu_custom_call.1} parent=1 // pred_check
      _
    $region7: #{tpu_custom_call.1} parent=1 // pred_check_branch
      %25 = sbr.rel (0) target = $region9
    $region8: #{tpu_custom_call.1} parent=1 // pred_region
      _
    $region9: #{tpu_custom_call.1} parent=1 // pred_fallthru
      _
    // Predicated region
    $region10: #{tpu_custom_call.1} parent=1 // pred_check
      _
    $region11: #{tpu_custom_call.1} parent=1 // pred_check_branch
      %27 = sbr.rel (0) target = $region13
    $region12: #{tpu_custom_call.1} parent=1 // pred_region
      _
    $region13: #{tpu_custom_call.1} parent=1 // pred_fallthru
      _
    // Predicated region
    $region14: #{tpu_custom_call.1} parent=1 // pred_check
      _
    $region15: #{tpu_custom_call.1} parent=1 // pred_check_branch
      %29 = sbr.rel (0) target = $region17
    $region16: #{tpu_custom_call.1} parent=1 // pred_region
      _
    $region17: #{tpu_custom_call.1} parent=1 // pred_fallthru
      _
    // Predicated region
    $region18: #{tpu_custom_call.1} parent=1 // pred_check
      _
    $region19: #{tpu_custom_call.1} parent=1 // pred_check_branch
      %31 = sbr.rel (0) target = $region21
    $region20: #{tpu_custom_call.1} parent=1 // pred_region
      _
    $region21: #{tpu_custom_call.1} parent=1 // pred_fallthru
      _
    // Predicated region
    $region22: #{tpu_custom_call.1} parent=1 // pred_check
      _
    $region23: #{tpu_custom_call.1} parent=1 // pred_check_branch
      %33 = sbr.rel (0) target = $region25
    $region24: #{tpu_custom_call.1} parent=1 // pred_region
      _
    $region25: #{tpu_custom_call.1} parent=1 // pred_fallthru
      _
    // Predicated region
    $region26: #{tpu_custom_call.1} parent=1 // pred_check
      _
    $region27: #{tpu_custom_call.1} parent=1 // pred_check_branch
      %35 = sbr.rel (0) target = $region29
    $region28: #{tpu_custom_call.1} parent=1 // pred_region
      _
    $region29: #{tpu_custom_call.1} parent=1 // pred_fallthru
      _
    // Predicated region
    $region30: #{tpu_custom_call.1} parent=1 // pred_check
      _
    $region31: #{tpu_custom_call.1} parent=1 // pred_check_branch
      %37 = sbr.rel (0) target = $region33
    $region32: #{tpu_custom_call.1} parent=1 // pred_region
      _
    $region33: #{tpu_custom_call.1} parent=1 // pred_fallthru
      _
    // Predicated region
    $region34: #{tpu_custom_call.1} parent=1 // pred_check
      _
    $region35: #{tpu_custom_call.1} parent=1 // pred_check_branch
      %39 = sbr.rel (0) target = $region37
    $region36: #{tpu_custom_call.1} parent=1 // pred_region
      _
    $region37: #{tpu_custom_call.1} parent=1 // pred_fallthru
      _
    // Predicated region
    $region38: #{tpu_custom_call.1} parent=1 // pred_check
      _
    $region39: #{tpu_custom_call.1} parent=1 // pred_check_branch
      %41 = sbr.rel (0) target = $region41
    $region40: #{tpu_custom_call.1} parent=1 // pred_region
      _
    $region41: #{tpu_custom_call.1} parent=1 // pred_fallthru
      _
    // Predicated region
    $region42: #{tpu_custom_call.1} parent=1 // pred_check
      _
    $region43: #{tpu_custom_call.1} parent=1 // pred_check_branch
      %43 = sbr.rel (0) target = $region45
    $region44: #{tpu_custom_call.1} parent=1 // pred_region
      _
    $region45: #{tpu_custom_call.1} parent=1 // pred_fallthru
      _
    // Predicated region
    $region46: #{tpu_custom_call.1} parent=1 // pred_check
      _
    $region47: #{tpu_custom_call.1} parent=1 // pred_check_branch
      %45 = sbr.rel (0) target = $region49
    $region48: #{tpu_custom_call.1} parent=1 // pred_region
      _
    $region49: #{tpu_custom_call.1} parent=1 // pred_fallthru
      _
    // Predicated region
    $region50: #{tpu_custom_call.1} parent=1 // pred_check
      _
    $region51: #{tpu_custom_call.1} parent=1 // pred_check_branch
      %47 = sbr.rel (0) target = $region53
    $region52: #{tpu_custom_call.1} parent=1 // pred_region
      _
    $region53: #{tpu_custom_call.1} parent=1 // pred_fallthru
      _
    %v48 = vld [vmem:[%s0] sm:$0xff]
    %v49 = vld [vmem:[%s0 + $0x8] sm:$0xff]
    %v50 = vld [vmem:[%s1] sm:$0xff]
    %v51 = vld [vmem:[%s1 + $0x8] sm:$0xff]
    %vm52 = vcmp.ne.f32.partialorder %v50, 0.0
    %vm53 = vcmp.ne.f32.partialorder %v51, 0.0
    %v54 = vsel %vm52, -1e+30, 0.0
    %v55 = vsel %vm53, -1e+30, 0.0
    %v56 = vld [vmem:[%s2] sm:$0xff]
    %v57 = vld [vmem:[%s2 + $0x8] sm:$0xff]
    %v58 = vld [vmem:[%s2 + $0x10] sm:$0xff]
    %v59 = vld [vmem:[%s2 + $0x18] sm:$0xff]
    %v60 = vld [vmem:[%s2 + $0x20] sm:$0xff]
    %v61 = vld [vmem:[%s2 + $0x28] sm:$0xff]
    %v62 = vld [vmem:[%s2 + $0x30] sm:$0xff]
    %v63 = vld [vmem:[%s2 + $0x38] sm:$0xff]
    %v64 = vld [vmem:[%s3] sm:$0xff]
    %v65 = vld [vmem:[%s3 + $0x8] sm:$0xff]
    %v66 = vld [vmem:[%s3 + $0x10] sm:$0xff]
    %v67 = vld [vmem:[%s3 + $0x18] sm:$0xff]
    %v68 = vld [vmem:[%s3 + $0x20] sm:$0xff]
    %v69 = vld [vmem:[%s3 + $0x28] sm:$0xff]
    %v70 = vld [vmem:[%s3 + $0x30] sm:$0xff]
    %v71 = vld [vmem:[%s3 + $0x38] sm:$0xff]
    %v72 = vld [vmem:[%s4] sm:$0xff]
    %v73 = vld [vmem:[%s4 + $0x8] sm:$0xff]
    %v74 = vld [vmem:[%s4 + $0x10] sm:$0xff]
    %v75 = vld [vmem:[%s4 + $0x18] sm:$0xff]
    %v76 = vld [vmem:[%s7] sm:$0x1]
    %v78 = vlaneseq
    %v79 = vshrl.u32 %v78, 7
    %v80 = vsub.s32 0, %v79
    %v81 = vrot.slane %v76, %v80
    %vm83 = vcmask 261120
    %v85 = vsel %vm83, %v48, 0
    %v88 = vsel %vm83, %v49, 0
    %90 = vmatprep.subr.mxu0 0.0
    %91 = vmatpush1.msra.mxu0 %v72
    %92 = vmatprep.subr.mxu0 0.0
    %93 = vmatpush1.msra.mxu0 %v73
    %94 = vmatprep.subr.mxu0 0.0
    %95 = vmatpush1.msra.mxu0 %v74
    %96 = vmatprep.subr.mxu0 0.0
    %97 = vmatpush1.msra.mxu0 %v75
    %98 = vmatprep.subr.mxu0 0.0
    %99 = vmatpush1.msra.mxu0 0.0
    %100 = vmatprep.subr.mxu0 0.0
    %101 = vmatpush1.msra.mxu0 0.0
    %102 = vmatprep.subr.mxu0 0.0
    %103 = vmatpush1.msra.mxu0 0.0
    %104 = vmatprep.subr.mxu0 0.0
    %105 = vmatpush1.msra.mxu0 0.0
    %106 = vmatprep.subr.mxu0 0.0
    %107 = vmatpush1.msra.mxu0 0.0
    %108 = vmatprep.subr.mxu0 0.0
    %109 = vmatpush1.msra.mxu0 0.0
    %110 = vmatprep.subr.mxu0 0.0
    %111 = vmatpush1.msra.mxu0 0.0
    %112 = vmatprep.subr.mxu0 0.0
    %113 = vmatpush1.msra.mxu0 0.0
    %114 = vmatprep.subr.mxu0 0.0
    %115 = vmatpush1.msra.mxu0 0.0
    %116 = vmatprep.subr.mxu0 0.0
    %117 = vmatpush1.msra.mxu0 0.0
    %118 = vmatprep.subr.mxu0 0.0
    %119 = vmatpush1.msra.mxu0 0.0
    %120 = vmatprep.subr.mxu0 0.0
    %121 = vmatpush1.msra.mxu0 0.0
    %122 = vmatprep.subr.mxu0 0.0
    %123 = vmatpush1.msra.mxu0 0.0
    %124 = vmatprep.subr.mxu0 0.0
    %125 = vmatpush1.msra.mxu0 0.0
    %126 = vmatprep.subr.mxu0 0.0
    %127 = vmatpush1.msra.mxu0 0.0
    %128 = vmatprep.subr.mxu0 0.0
    %129 = vmatpush1.msra.mxu0 0.0
    %130 = vmatprep.subr.mxu0 0.0
    %131 = vmatpush1.msra.mxu0 0.0
    %132 = vmatprep.subr.mxu0 0.0
    %133 = vmatpush1.msra.mxu0 0.0
    %134 = vmatprep.subr.mxu0 0.0
    %135 = vmatpush1.msra.mxu0 0.0
    %136 = vmatprep.subr.mxu0 0.0
    %137 = vmatpush1.msra.mxu0 0.0
    %138 = vmatprep.subr.mxu0 0.0
    %139 = vmatpush1.msra.mxu0 0.0
    %140 = vmatprep.subr.mxu0 0.0
    %141 = vmatpush1.msra.mxu0 0.0
    %142 = vmatprep.subr.mxu0 0.0
    %143 = vmatpush1.msra.mxu0 0.0
    %144 = vmatprep.subr.mxu0 0.0
    %145 = vmatpush1.msra.mxu0 0.0
    %146 = vmatprep.subr.mxu0 0.0
    %147 = vmatpush1.msra.mxu0 0.0
    %148 = vmatprep.subr.mxu0 0.0
    %149 = vmatpush1.msra.mxu0 0.0
    %150 = vmatprep.subr.mxu0 0.0
    %151 = vmatpush1.msra.mxu0 0.0
    %152 = vmatprep.subr.mxu0 0.0
    %153 = vmatpush1.msra.mxu0 0.0
    %154 = vmatprep.mubr.f32.mxu0 0.0
    %155 = vmatmul.mubr.f32.gmra.mrb[0].mxu0 %v85
    %v156 = vpop.f32.mrb[0].mxu0
    %v157 = vadd.f32 %v81, %v156
    %v158 = vpop.f32.mrb[0].mxu0
    %159 = vmatprep.mubr.f32.mxu0 0.0
    %160 = vmatmul.mubr.f32.gmra.mrb[0].mxu0 %v88
    %v161 = vpop.f32.mrb[0].mxu0
    %v162 = vadd.f32 %v81, %v161
    %v163 = vpop.f32.mrb[0].mxu0
    %164 = vdwg.mxu0
    %v165 = vld [vmem:[%s5] sm:$0xff]
    %v166 = vld [vmem:[%s5 + $0x8] sm:$0xff]
    %v167 = vld [vmem:[%s5 + $0x10] sm:$0xff]
    %v168 = vld [vmem:[%s5 + $0x18] sm:$0xff]
    %169 = vmatprep.subr.mxu0 0.0
    %170 = vmatpush1.msra.mxu0 %v165
    %171 = vmatprep.subr.mxu0 0.0
    %172 = vmatpush1.msra.mxu0 %v166
    %173 = vmatprep.subr.mxu0 0.0
    %174 = vmatpush1.msra.mxu0 %v167
    %175 = vmatprep.subr.mxu0 0.0
    %176 = vmatpush1.msra.mxu0 %v168
    %177 = vmatprep.subr.mxu0 0.0
    %178 = vmatpush1.msra.mxu0 0.0
    %179 = vmatprep.subr.mxu0 0.0
    %180 = vmatpush1.msra.mxu0 0.0
    %181 = vmatprep.subr.mxu0 0.0
    %182 = vmatpush1.msra.mxu0 0.0
    %183 = vmatprep.subr.mxu0 0.0
    %184 = vmatpush1.msra.mxu0 0.0
    %185 = vmatprep.subr.mxu0 0.0
    %186 = vmatpush1.msra.mxu0 0.0
    %187 = vmatprep.subr.mxu0 0.0
    %188 = vmatpush1.msra.mxu0 0.0
    %189 = vmatprep.subr.mxu0 0.0
    %190 = vmatpush1.msra.mxu0 0.0
    %191 = vmatprep.subr.mxu0 0.0
    %192 = vmatpush1.msra.mxu0 0.0
    %193 = vmatprep.subr.mxu0 0.0
    %194 = vmatpush1.msra.mxu0 0.0
    %195 = vmatprep.subr.mxu0 0.0
    %196 = vmatpush1.msra.mxu0 0.0
    %197 = vmatprep.subr.mxu0 0.0
    %198 = vmatpush1.msra.mxu0 0.0
    %199 = vmatprep.subr.mxu0 0.0
    %200 = vmatpush1.msra.mxu0 0.0
    %201 = vmatprep.subr.mxu0 0.0
    %202 = vmatpush1.msra.mxu0 0.0
    %203 = vmatprep.subr.mxu0 0.0
    %204 = vmatpush1.msra.mxu0 0.0
    %205 = vmatprep.subr.mxu0 0.0
    %206 = vmatpush1.msra.mxu0 0.0
    %207 = vmatprep.subr.mxu0 0.0
    %208 = vmatpush1.msra.mxu0 0.0
    %209 = vmatprep.subr.mxu0 0.0
    %210 = vmatpush1.msra.mxu0 0.0
    %211 = vmatprep.subr.mxu0 0.0
    %212 = vmatpush1.msra.mxu0 0.0
    %213 = vmatprep.subr.mxu0 0.0
    %214 = vmatpush1.msra.mxu0 0.0
    %215 = vmatprep.subr.mxu0 0.0
    %216 = vmatpush1.msra.mxu0 0.0
    %217 = vmatprep.subr.mxu0 0.0
    %218 = vmatpush1.msra.mxu0 0.0
    %219 = vmatprep.subr.mxu0 0.0
    %220 = vmatpush1.msra.mxu0 0.0
    %221 = vmatprep.subr.mxu0 0.0
    %222 = vmatpush1.msra.mxu0 0.0
    %223 = vmatprep.subr.mxu0 0.0
    %224 = vmatpush1.msra.mxu0 0.0
    %225 = vmatprep.subr.mxu0 0.0
    %226 = vmatpush1.msra.mxu0 0.0
    %227 = vmatprep.subr.mxu0 0.0
    %228 = vmatpush1.msra.mxu0 0.0
    %229 = vmatprep.subr.mxu0 0.0
    %230 = vmatpush1.msra.mxu0 0.0
    %231 = vmatprep.subr.mxu0 0.0
    %232 = vmatpush1.msra.mxu0 0.0
    %233 = vmatprep.mubr.f32.mxu0 0.0
    %234 = vmatmul.mubr.f32.gmra.mrb[0].mxu0 %v85
    %v235 = vpop.f32.mrb[0].mxu0
    %v236 = vadd.f32 0.0, %v235
    %v237 = vpop.f32.mrb[0].mxu0
    %238 = vmatprep.mubr.f32.mxu0 0.0
    %239 = vmatmul.mubr.f32.gmra.mrb[0].mxu0 %v88
    %v240 = vpop.f32.mrb[0].mxu0
    %v241 = vadd.f32 0.0, %v240
    %v242 = vpop.f32.mrb[0].mxu0
    %243 = vdwg.mxu0
    %v244 = vld [vmem:[%s6] sm:$0xff]
    %v245 = vld [vmem:[%s6 + $0x8] sm:$0xff]
    %v246 = vld [vmem:[%s6 + $0x10] sm:$0xff]
    %v247 = vld [vmem:[%s6 + $0x18] sm:$0xff]
    %v248 = vld [vmem:[%s8] sm:$0x1]
    %v250 = vlaneseq
    %v251 = vshrl.u32 %v250, 7
    %v252 = vsub.s32 0, %v251
    %v253 = vrot.slane %v248, %v252
    %255 = vmatprep.subr.mxu0 0.0
    %256 = vmatpush1.msra.mxu0 %v244
    %257 = vmatprep.subr.mxu0 0.0
    %258 = vmatpush1.msra.mxu0 %v245
    %259 = vmatprep.subr.mxu0 0.0
    %260 = vmatpush1.msra.mxu0 %v246
    %261 = vmatprep.subr.mxu0 0.0
    %262 = vmatpush1.msra.mxu0 %v247
    %263 = vmatprep.subr.mxu0 0.0
    %264 = vmatpush1.msra.mxu0 0.0
    %265 = vmatprep.subr.mxu0 0.0
    %266 = vmatpush1.msra.mxu0 0.0
    %267 = vmatprep.subr.mxu0 0.0
    %268 = vmatpush1.msra.mxu0 0.0
    %269 = vmatprep.subr.mxu0 0.0
    %270 = vmatpush1.msra.mxu0 0.0
    %271 = vmatprep.subr.mxu0 0.0
    %272 = vmatpush1.msra.mxu0 0.0
    %273 = vmatprep.subr.mxu0 0.0
    %274 = vmatpush1.msra.mxu0 0.0
    %275 = vmatprep.subr.mxu0 0.0
    %276 = vmatpush1.msra.mxu0 0.0
    %277 = vmatprep.subr.mxu0 0.0
    %278 = vmatpush1.msra.mxu0 0.0
    %279 = vmatprep.subr.mxu0 0.0
    %280 = vmatpush1.msra.mxu0 0.0
    %281 = vmatprep.subr.mxu0 0.0
    %282 = vmatpush1.msra.mxu0 0.0
    %283 = vmatprep.subr.mxu0 0.0
    %284 = vmatpush1.msra.mxu0 0.0
    %285 = vmatprep.subr.mxu0 0.0
    %286 = vmatpush1.msra.mxu0 0.0
    %287 = vmatprep.subr.mxu0 0.0
    %288 = vmatpush1.msra.mxu0 0.0
    %289 = vmatprep.subr.mxu0 0.0
    %290 = vmatpush1.msra.mxu0 0.0
    %291 = vmatprep.subr.mxu0 0.0
    %292 = vmatpush1.msra.mxu0 0.0
    %293 = vmatprep.subr.mxu0 0.0
    %294 = vmatpush1.msra.mxu0 0.0
    %295 = vmatprep.subr.mxu0 0.0
    %296 = vmatpush1.msra.mxu0 0.0
    %297 = vmatprep.subr.mxu0 0.0
    %298 = vmatpush1.msra.mxu0 0.0
    %299 = vmatprep.subr.mxu0 0.0
    %300 = vmatpush1.msra.mxu0 0.0
    %301 = vmatprep.subr.mxu0 0.0
    %302 = vmatpush1.msra.mxu0 0.0
    %303 = vmatprep.subr.mxu0 0.0
    %304 = vmatpush1.msra.mxu0 0.0
    %305 = vmatprep.subr.mxu0 0.0
    %306 = vmatpush1.msra.mxu0 0.0
    %307 = vmatprep.subr.mxu0 0.0
    %308 = vmatpush1.msra.mxu0 0.0
    %309 = vmatprep.subr.mxu0 0.0
    %310 = vmatpush1.msra.mxu0 0.0
    %311 = vmatprep.subr.mxu0 0.0
    %312 = vmatpush1.msra.mxu0 0.0
    %313 = vmatprep.subr.mxu0 0.0
    %314 = vmatpush1.msra.mxu0 0.0
    %315 = vmatprep.subr.mxu0 0.0
    %316 = vmatpush1.msra.mxu0 0.0
    %317 = vmatprep.subr.mxu0 0.0
    %318 = vmatpush1.msra.mxu0 0.0
    %319 = vmatprep.mubr.f32.mxu0 0.0
    %320 = vmatmul.mubr.f32.gmra.mrb[0].mxu0 %v85
    %v321 = vpop.f32.mrb[0].mxu0
    %v322 = vadd.f32 %v253, %v321
    %v323 = vpop.f32.mrb[0].mxu0
    %324 = vmatprep.mubr.f32.mxu0 0.0
    %325 = vmatmul.mubr.f32.gmra.mrb[0].mxu0 %v88
    %v326 = vpop.f32.mrb[0].mxu0
    %v327 = vadd.f32 %v253, %v326
    %v328 = vpop.f32.mrb[0].mxu0
    %329 = vdwg.mxu0
    %vm330 = vcmask 64512
    %v332 = vsel %vm330, %v157, 0
    %v335 = vsel %vm330, %v236, 0
    %337 = vmatprep.subr.mxu0 0.0
    %338 = vmatpush1.xpose.msra.mxu0 %v335
    %339 = vmatprep.subr.mxu0 0.0
    %340 = vmatpush1.xpose.msra.mxu0 0.0
    %341 = vmatprep.subr.mxu0 0.0
    %342 = vmatpush1.xpose.msra.mxu0 0.0
    %343 = vmatprep.subr.mxu0 0.0
    %344 = vmatpush1.xpose.msra.mxu0 0.0
    %345 = vmatprep.subr.mxu0 0.0
    %346 = vmatpush1.xpose.msra.mxu0 0.0
    %347 = vmatprep.subr.mxu0 0.0
    %348 = vmatpush1.xpose.msra.mxu0 0.0
    %349 = vmatprep.subr.mxu0 0.0
    %350 = vmatpush1.xpose.msra.mxu0 0.0
    %351 = vmatprep.subr.mxu0 0.0
    %352 = vmatpush1.xpose.msra.mxu0 0.0
    %353 = vmatprep.subr.mxu0 0.0
    %354 = vmatpush1.xpose.msra.mxu0 0.0
    %355 = vmatprep.subr.mxu0 0.0
    %356 = vmatpush1.xpose.msra.mxu0 0.0
    %357 = vmatprep.subr.mxu0 0.0
    %358 = vmatpush1.xpose.msra.mxu0 0.0
    %359 = vmatprep.subr.mxu0 0.0
    %360 = vmatpush1.xpose.msra.mxu0 0.0
    %361 = vmatprep.subr.mxu0 0.0
    %362 = vmatpush1.xpose.msra.mxu0 0.0
    %363 = vmatprep.subr.mxu0 0.0
    %364 = vmatpush1.xpose.msra.mxu0 0.0
    %365 = vmatprep.subr.mxu0 0.0
    %366 = vmatpush1.xpose.msra.mxu0 0.0
    %367 = vmatprep.subr.mxu0 0.0
    %368 = vmatpush1.xpose.msra.mxu0 0.0
    %369 = vmatprep.subr.mxu0 0.0
    %370 = vmatpush1.xpose.msra.mxu0 0.0
    %371 = vmatprep.subr.mxu0 0.0
    %372 = vmatpush1.xpose.msra.mxu0 0.0
    %373 = vmatprep.subr.mxu0 0.0
    %374 = vmatpush1.xpose.msra.mxu0 0.0
    %375 = vmatprep.subr.mxu0 0.0
    %376 = vmatpush1.xpose.msra.mxu0 0.0
    %377 = vmatprep.subr.mxu0 0.0
    %378 = vmatpush1.xpose.msra.mxu0 0.0
    %379 = vmatprep.subr.mxu0 0.0
    %380 = vmatpush1.xpose.msra.mxu0 0.0
    %381 = vmatprep.subr.mxu0 0.0
    %382 = vmatpush1.xpose.msra.mxu0 0.0
    %383 = vmatprep.subr.mxu0 0.0
    %384 = vmatpush1.xpose.msra.mxu0 0.0
    %385 = vmatprep.subr.mxu0 0.0
    %386 = vmatpush1.xpose.msra.mxu0 0.0
    %387 = vmatprep.subr.mxu0 0.0
    %388 = vmatpush1.xpose.msra.mxu0 0.0
    %389 = vmatprep.subr.mxu0 0.0
    %390 = vmatpush1.xpose.msra.mxu0 0.0
    %391 = vmatprep.subr.mxu0 0.0
    %392 = vmatpush1.xpose.msra.mxu0 0.0
    %393 = vmatprep.subr.mxu0 0.0
    %394 = vmatpush1.xpose.msra.mxu0 0.0
    %395 = vmatprep.subr.mxu0 0.0
    %396 = vmatpush1.xpose.msra.mxu0 0.0
    %397 = vmatprep.subr.mxu0 0.0
    %398 = vmatpush1.xpose.msra.mxu0 0.0
    %399 = vmatprep.subr.mxu0 0.0
    %400 = vmatpush1.xpose.msra.mxu0 0.0
    %401 = vmatprep.mubr.f32.mxu0 0.0
    %402 = vmatmul.mubr.f32.gmra.mrb[0].mxu0 %v332
    %v403 = vpop.f32.mrb[0].mxu0
    %v404 = vadd.f32 %v56, %v403
    %v405 = vpop.f32.mrb[0].mxu0
    %406 = vdwg.mxu0
    %v408 = vsel %vm330, %v162, 0
    %v411 = vsel %vm330, %v241, 0
    %413 = vmatprep.subr.mxu0 0.0
    %414 = vmatpush1.xpose.msra.mxu0 %v411
    %415 = vmatprep.subr.mxu0 0.0
    %416 = vmatpush1.xpose.msra.mxu0 0.0
    %417 = vmatprep.subr.mxu0 0.0
    %418 = vmatpush1.xpose.msra.mxu0 0.0
    %419 = vmatprep.subr.mxu0 0.0
    %420 = vmatpush1.xpose.msra.mxu0 0.0
    %421 = vmatprep.subr.mxu0 0.0
    %422 = vmatpush1.xpose.msra.mxu0 0.0
    %423 = vmatprep.subr.mxu0 0.0
    %424 = vmatpush1.xpose.msra.mxu0 0.0
    %425 = vmatprep.subr.mxu0 0.0
    %426 = vmatpush1.xpose.msra.mxu0 0.0
    %427 = vmatprep.subr.mxu0 0.0
    %428 = vmatpush1.xpose.msra.mxu0 0.0
    %429 = vmatprep.subr.mxu0 0.0
    %430 = vmatpush1.xpose.msra.mxu0 0.0
    %431 = vmatprep.subr.mxu0 0.0
    %432 = vmatpush1.xpose.msra.mxu0 0.0
    %433 = vmatprep.subr.mxu0 0.0
    %434 = vmatpush1.xpose.msra.mxu0 0.0
    %435 = vmatprep.subr.mxu0 0.0
    %436 = vmatpush1.xpose.msra.mxu0 0.0
    %437 = vmatprep.subr.mxu0 0.0
    %438 = vmatpush1.xpose.msra.mxu0 0.0
    %439 = vmatprep.subr.mxu0 0.0
    %440 = vmatpush1.xpose.msra.mxu0 0.0
    %441 = vmatprep.subr.mxu0 0.0
    %442 = vmatpush1.xpose.msra.mxu0 0.0
    %443 = vmatprep.subr.mxu0 0.0
    %444 = vmatpush1.xpose.msra.mxu0 0.0
    %445 = vmatprep.subr.mxu0 0.0
    %446 = vmatpush1.xpose.msra.mxu0 0.0
    %447 = vmatprep.subr.mxu0 0.0
    %448 = vmatpush1.xpose.msra.mxu0 0.0
    %449 = vmatprep.subr.mxu0 0.0
    %450 = vmatpush1.xpose.msra.mxu0 0.0
    %451 = vmatprep.subr.mxu0 0.0
    %452 = vmatpush1.xpose.msra.mxu0 0.0
    %453 = vmatprep.subr.mxu0 0.0
    %454 = vmatpush1.xpose.msra.mxu0 0.0
    %455 = vmatprep.subr.mxu0 0.0
    %456 = vmatpush1.xpose.msra.mxu0 0.0
    %457 = vmatprep.subr.mxu0 0.0
    %458 = vmatpush1.xpose.msra.mxu0 0.0
    %459 = vmatprep.subr.mxu0 0.0
    %460 = vmatpush1.xpose.msra.mxu0 0.0
    %461 = vmatprep.subr.mxu0 0.0
    %462 = vmatpush1.xpose.msra.mxu0 0.0
    %463 = vmatprep.subr.mxu0 0.0
    %464 = vmatpush1.xpose.msra.mxu0 0.0
    %465 = vmatprep.subr.mxu0 0.0
    %466 = vmatpush1.xpose.msra.mxu0 0.0
    %467 = vmatprep.subr.mxu0 0.0
    %468 = vmatpush1.xpose.msra.mxu0 0.0
    %469 = vmatprep.subr.mxu0 0.0
    %470 = vmatpush1.xpose.msra.mxu0 0.0
    %471 = vmatprep.subr.mxu0 0.0
    %472 = vmatpush1.xpose.msra.mxu0 0.0
    %473 = vmatprep.subr.mxu0 0.0
    %474 = vmatpush1.xpose.msra.mxu0 0.0
    %475 = vmatprep.subr.mxu0 0.0
    %476 = vmatpush1.xpose.msra.mxu0 0.0
    %477 = vmatprep.mubr.f32.mxu0 0.0
    %478 = vmatmul.mubr.f32.gmra.mrb[0].mxu0 %v408
    %v479 = vpop.f32.mrb[0].mxu0
    %v480 = vadd.f32 %v60, %v479
    %v481 = vpop.f32.mrb[0].mxu0
    %482 = vdwg.mxu0
    %v483 = vadd.f32 %v404, %v64
    %v484 = vadd.f32 %v480, %v68
    %v485 = vadd.f32 %v483, %v54
    %v486 = vadd.f32 %v484, %v55
    %v487 = vsel %vm330, %v485, -inf
    %488 = vmax.xlane.f32.xlu0 %v487
    %v489 = vpop.xlane.xlu0 %488
    %v490 = vsel %vm330, %v486, -inf
    %491 = vmax.xlane.f32.xlu0 %v490
    %v492 = vpop.xlane.xlu0 %491
    %v493 = vsub.f32 %v485, %v489
    %v494 = vsub.f32 %v486, %v492
    %v495 = vmul.f32 %v493, 1.442695
    %v496 = vpow.pop %v495
    %v497 = vmul.f32 %v494, 1.442695
    %v498 = vpow.pop %v497
    %v499 = vsel %vm330, %v496, 0.0
    %500 = vadd.xlane.f32.xlu0 %v499
    %v501 = vpop.xlane.xlu0 %500
    %v502 = vsel %vm330, %v498, 0.0
    %503 = vadd.xlane.f32.xlu0 %v502
    %v504 = vpop.xlane.xlu0 %503
    %v505 = vrcp.pop %v501
    %v506 = vmul.f32 1.0, %v505
    %v507 = vrcp.pop %v504
    %v508 = vmul.f32 1.0, %v507
    %v509 = vmul.f32 %v496, %v506
    %v510 = vmul.f32 %v498, %v508
    %v512 = vsel %vm330, %v509, 0
    %514 = vmatprep.subr.mxu0 0.0
    %515 = vmatpush1.msra.mxu0 %v322
    %516 = vmatprep.subr.mxu0 0.0
    %517 = vmatpush1.msra.mxu0 0.0
    %518 = vmatprep.subr.mxu0 0.0
    %519 = vmatpush1.msra.mxu0 0.0
    %520 = vmatprep.subr.mxu0 0.0
    %521 = vmatpush1.msra.mxu0 0.0
    %522 = vmatprep.subr.mxu0 0.0
    %523 = vmatpush1.msra.mxu0 0.0
    %524 = vmatprep.subr.mxu0 0.0
    %525 = vmatpush1.msra.mxu0 0.0
    %526 = vmatprep.subr.mxu0 0.0
    %527 = vmatpush1.msra.mxu0 0.0
    %528 = vmatprep.subr.mxu0 0.0
    %529 = vmatpush1.msra.mxu0 0.0
    %530 = vmatprep.subr.mxu0 0.0
    %531 = vmatpush1.msra.mxu0 0.0
    %532 = vmatprep.subr.mxu0 0.0
    %533 = vmatpush1.msra.mxu0 0.0
    %534 = vmatprep.subr.mxu0 0.0
    %535 = vmatpush1.msra.mxu0 0.0
    %536 = vmatprep.subr.mxu0 0.0
    %537 = vmatpush1.msra.mxu0 0.0
    %538 = vmatprep.subr.mxu0 0.0
    %539 = vmatpush1.msra.mxu0 0.0
    %540 = vmatprep.subr.mxu0 0.0
    %541 = vmatpush1.msra.mxu0 0.0
    %542 = vmatprep.subr.mxu0 0.0
    %543 = vmatpush1.msra.mxu0 0.0
    %544 = vmatprep.subr.mxu0 0.0
    %545 = vmatpush1.msra.mxu0 0.0
    %546 = vmatprep.subr.mxu0 0.0
    %547 = vmatpush1.msra.mxu0 0.0
    %548 = vmatprep.subr.mxu0 0.0
    %549 = vmatpush1.msra.mxu0 0.0
    %550 = vmatprep.subr.mxu0 0.0
    %551 = vmatpush1.msra.mxu0 0.0
    %552 = vmatprep.subr.mxu0 0.0
    %553 = vmatpush1.msra.mxu0 0.0
    %554 = vmatprep.subr.mxu0 0.0
    %555 = vmatpush1.msra.mxu0 0.0
    %556 = vmatprep.subr.mxu0 0.0
    %557 = vmatpush1.msra.mxu0 0.0
    %558 = vmatprep.subr.mxu0 0.0
    %559 = vmatpush1.msra.mxu0 0.0
    %560 = vmatprep.subr.mxu0 0.0
    %561 = vmatpush1.msra.mxu0 0.0
    %562 = vmatprep.subr.mxu0 0.0
    %563 = vmatpush1.msra.mxu0 0.0
    %564 = vmatprep.subr.mxu0 0.0
    %565 = vmatpush1.msra.mxu0 0.0
    %566 = vmatprep.subr.mxu0 0.0
    %567 = vmatpush1.msra.mxu0 0.0
    %568 = vmatprep.subr.mxu0 0.0
    %569 = vmatpush1.msra.mxu0 0.0
    %570 = vmatprep.subr.mxu0 0.0
    %571 = vmatpush1.msra.mxu0 0.0
    %572 = vmatprep.subr.mxu0 0.0
    %573 = vmatpush1.msra.mxu0 0.0
    %574 = vmatprep.subr.mxu0 0.0
    %575 = vmatpush1.msra.mxu0 0.0
    %576 = vmatprep.subr.mxu0 0.0
    %577 = vmatpush1.msra.mxu0 0.0
    %578 = vmatprep.mubr.f32.mxu0 0.0
    %579 = vmatmul.mubr.f32.gmra.mrb[0].mxu0 %v512
    %v580 = vpop.f32.mrb[0].mxu0
    %v581 = vadd.f32 0.0, %v580
    %v582 = vpop.f32.mrb[0].mxu0
    %583 = vdwg.mxu0
    %v585 = vsel %vm330, %v510, 0
    %587 = vmatprep.subr.mxu0 0.0
    %588 = vmatpush1.msra.mxu0 %v327
    %589 = vmatprep.subr.mxu0 0.0
    %590 = vmatpush1.msra.mxu0 0.0
    %591 = vmatprep.subr.mxu0 0.0
    %592 = vmatpush1.msra.mxu0 0.0
    %593 = vmatprep.subr.mxu0 0.0
    %594 = vmatpush1.msra.mxu0 0.0
    %595 = vmatprep.subr.mxu0 0.0
    %596 = vmatpush1.msra.mxu0 0.0
    %597 = vmatprep.subr.mxu0 0.0
    %598 = vmatpush1.msra.mxu0 0.0
    %599 = vmatprep.subr.mxu0 0.0
    %600 = vmatpush1.msra.mxu0 0.0
    %601 = vmatprep.subr.mxu0 0.0
    %602 = vmatpush1.msra.mxu0 0.0
    %603 = vmatprep.subr.mxu0 0.0
    %604 = vmatpush1.msra.mxu0 0.0
    %605 = vmatprep.subr.mxu0 0.0
    %606 = vmatpush1.msra.mxu0 0.0
    %607 = vmatprep.subr.mxu0 0.0
    %608 = vmatpush1.msra.mxu0 0.0
    %609 = vmatprep.subr.mxu0 0.0
    %610 = vmatpush1.msra.mxu0 0.0
    %611 = vmatprep.subr.mxu0 0.0
    %612 = vmatpush1.msra.mxu0 0.0
    %613 = vmatprep.subr.mxu0 0.0
    %614 = vmatpush1.msra.mxu0 0.0
    %615 = vmatprep.subr.mxu0 0.0
    %616 = vmatpush1.msra.mxu0 0.0
    %617 = vmatprep.subr.mxu0 0.0
    %618 = vmatpush1.msra.mxu0 0.0
    %619 = vmatprep.subr.mxu0 0.0
    %620 = vmatpush1.msra.mxu0 0.0
    %621 = vmatprep.subr.mxu0 0.0
    %622 = vmatpush1.msra.mxu0 0.0
    %623 = vmatprep.subr.mxu0 0.0
    %624 = vmatpush1.msra.mxu0 0.0
    %625 = vmatprep.subr.mxu0 0.0
    %626 = vmatpush1.msra.mxu0 0.0
    %627 = vmatprep.subr.mxu0 0.0
    %628 = vmatpush1.msra.mxu0 0.0
    %629 = vmatprep.subr.mxu0 0.0
    %630 = vmatpush1.msra.mxu0 0.0
    %631 = vmatprep.subr.mxu0 0.0
    %632 = vmatpush1.msra.mxu0 0.0
    %633 = vmatprep.subr.mxu0 0.0
    %634 = vmatpush1.msra.mxu0 0.0
    %635 = vmatprep.subr.mxu0 0.0
    %636 = vmatpush1.msra.mxu0 0.0
    %637 = vmatprep.subr.mxu0 0.0
    %638 = vmatpush1.msra.mxu0 0.0
    %639 = vmatprep.subr.mxu0 0.0
    %640 = vmatpush1.msra.mxu0 0.0
    %641 = vmatprep.subr.mxu0 0.0
    %642 = vmatpush1.msra.mxu0 0.0
    %643 = vmatprep.subr.mxu0 0.0
    %644 = vmatpush1.msra.mxu0 0.0
    %645 = vmatprep.subr.mxu0 0.0
    %646 = vmatpush1.msra.mxu0 0.0
    %647 = vmatprep.subr.mxu0 0.0
    %648 = vmatpush1.msra.mxu0 0.0
    %649 = vmatprep.subr.mxu0 0.0
    %650 = vmatpush1.msra.mxu0 0.0
    %651 = vmatprep.mubr.f32.mxu0 0.0
    %652 = vmatmul.mubr.f32.gmra.mrb[0].mxu0 %v585
    %v653 = vpop.f32.mrb[0].mxu0
    %v654 = vadd.f32 0.0, %v653
    %v655 = vpop.f32.mrb[0].mxu0
    %656 = vdwg.mxu0
    %v657 = vld [vmem:[%s9] sm:$0xff]
    %s658 = scalar_lea.vmem %s4, 32
    %v659 = vld [vmem:[%s658] sm:$0xff]
    %v660 = vld [vmem:[%s658 + $0x8] sm:$0xff]
    %v661 = vld [vmem:[%s658 + $0x10] sm:$0xff]
    %v662 = vld [vmem:[%s658 + $0x18] sm:$0xff]
    %s663 = scalar_lea.vmem %s7, 1
    %v664 = vld [vmem:[%s663] sm:$0x1]
    %v666 = vlaneseq
    %v667 = vshrl.u32 %v666, 7
    %v668 = vsub.s32 0, %v667
    %v669 = vrot.slane %v664, %v668
    %671 = vmatprep.subr.mxu0 0.0
    %672 = vmatpush1.msra.mxu0 %v659
    %673 = vmatprep.subr.mxu0 0.0
    %674 = vmatpush1.msra.mxu0 %v660
    %675 = vmatprep.subr.mxu0 0.0
    %676 = vmatpush1.msra.mxu0 %v661
    %677 = vmatprep.subr.mxu0 0.0
    %678 = vmatpush1.msra.mxu0 %v662
    %679 = vmatprep.subr.mxu0 0.0
    %680 = vmatpush1.msra.mxu0 0.0
    %681 = vmatprep.subr.mxu0 0.0
    %682 = vmatpush1.msra.mxu0 0.0
    %683 = vmatprep.subr.mxu0 0.0
    %684 = vmatpush1.msra.mxu0 0.0
    %685 = vmatprep.subr.mxu0 0.0
    %686 = vmatpush1.msra.mxu0 0.0
    %687 = vmatprep.subr.mxu0 0.0
    %688 = vmatpush1.msra.mxu0 0.0
    %689 = vmatprep.subr.mxu0 0.0
    %690 = vmatpush1.msra.mxu0 0.0
    %691 = vmatprep.subr.mxu0 0.0
    %692 = vmatpush1.msra.mxu0 0.0
    %693 = vmatprep.subr.mxu0 0.0
    %694 = vmatpush1.msra.mxu0 0.0
    %695 = vmatprep.subr.mxu0 0.0
    %696 = vmatpush1.msra.mxu0 0.0
    %697 = vmatprep.subr.mxu0 0.0
    %698 = vmatpush1.msra.mxu0 0.0
    %699 = vmatprep.subr.mxu0 0.0
    %700 = vmatpush1.msra.mxu0 0.0
    %701 = vmatprep.subr.mxu0 0.0
    %702 = vmatpush1.msra.mxu0 0.0
    %703 = vmatprep.subr.mxu0 0.0
    %704 = vmatpush1.msra.mxu0 0.0
    %705 = vmatprep.subr.mxu0 0.0
    %706 = vmatpush1.msra.mxu0 0.0
    %707 = vmatprep.subr.mxu0 0.0
    %708 = vmatpush1.msra.mxu0 0.0
    %709 = vmatprep.subr.mxu0 0.0
    %710 = vmatpush1.msra.mxu0 0.0
    %711 = vmatprep.subr.mxu0 0.0
    %712 = vmatpush1.msra.mxu0 0.0
    %713 = vmatprep.subr.mxu0 0.0
    %714 = vmatpush1.msra.mxu0 0.0
    %715 = vmatprep.subr.mxu0 0.0
    %716 = vmatpush1.msra.mxu0 0.0
    %717 = vmatprep.subr.mxu0 0.0
    %718 = vmatpush1.msra.mxu0 0.0
    %719 = vmatprep.subr.mxu0 0.0
    %720 = vmatpush1.msra.mxu0 0.0
    %721 = vmatprep.subr.mxu0 0.0
    %722 = vmatpush1.msra.mxu0 0.0
    %723 = vmatprep.subr.mxu0 0.0
    %724 = vmatpush1.msra.mxu0 0.0
    %725 = vmatprep.subr.mxu0 0.0
    %726 = vmatpush1.msra.mxu0 0.0
    %727 = vmatprep.subr.mxu0 0.0
    %728 = vmatpush1.msra.mxu0 0.0
    %729 = vmatprep.subr.mxu0 0.0
    %730 = vmatpush1.msra.mxu0 0.0
    %731 = vmatprep.subr.mxu0 0.0
    %732 = vmatpush1.msra.mxu0 0.0
    %733 = vmatprep.subr.mxu0 0.0
    %734 = vmatpush1.msra.mxu0 0.0
    %735 = vmatprep.mubr.f32.mxu0 0.0
    %736 = vmatmul.mubr.f32.gmra.mrb[0].mxu0 %v85
    %v737 = vpop.f32.mrb[0].mxu0
    %v738 = vadd.f32 %v669, %v737
    %v739 = vpop.f32.mrb[0].mxu0
    %740 = vmatprep.mubr.f32.mxu0 0.0
    %741 = vmatmul.mubr.f32.gmra.mrb[0].mxu0 %v88
    %v742 = vpop.f32.mrb[0].mxu0
    %v743 = vadd.f32 %v669, %v742
    %v744 = vpop.f32.mrb[0].mxu0
    %745 = vdwg.mxu0
    %s746 = scalar_lea.vmem %s5, 32
    %v747 = vld [vmem:[%s746] sm:$0xff]
    %v748 = vld [vmem:[%s746 + $0x8] sm:$0xff]
    %v749 = vld [vmem:[%s746 + $0x10] sm:$0xff]
    %v750 = vld [vmem:[%s746 + $0x18] sm:$0xff]
    %751 = vmatprep.subr.mxu0 0.0
    %752 = vmatpush1.msra.mxu0 %v747
    %753 = vmatprep.subr.mxu0 0.0
    %754 = vmatpush1.msra.mxu0 %v748
    %755 = vmatprep.subr.mxu0 0.0
    %756 = vmatpush1.msra.mxu0 %v749
    %757 = vmatprep.subr.mxu0 0.0
    %758 = vmatpush1.msra.mxu0 %v750
    %759 = vmatprep.subr.mxu0 0.0
    %760 = vmatpush1.msra.mxu0 0.0
    %761 = vmatprep.subr.mxu0 0.0
    %762 = vmatpush1.msra.mxu0 0.0
    %763 = vmatprep.subr.mxu0 0.0
    %764 = vmatpush1.msra.mxu0 0.0
    %765 = vmatprep.subr.mxu0 0.0
    %766 = vmatpush1.msra.mxu0 0.0
    %767 = vmatprep.subr.mxu0 0.0
    %768 = vmatpush1.msra.mxu0 0.0
    %769 = vmatprep.subr.mxu0 0.0
    %770 = vmatpush1.msra.mxu0 0.0
    %771 = vmatprep.subr.mxu0 0.0
    %772 = vmatpush1.msra.mxu0 0.0
    %773 = vmatprep.subr.mxu0 0.0
    %774 = vmatpush1.msra.mxu0 0.0
    %775 = vmatprep.subr.mxu0 0.0
    %776 = vmatpush1.msra.mxu0 0.0
    %777 = vmatprep.subr.mxu0 0.0
    %778 = vmatpush1.msra.mxu0 0.0
    %779 = vmatprep.subr.mxu0 0.0
    %780 = vmatpush1.msra.mxu0 0.0
    %781 = vmatprep.subr.mxu0 0.0
    %782 = vmatpush1.msra.mxu0 0.0
    %783 = vmatprep.subr.mxu0 0.0
    %784 = vmatpush1.msra.mxu0 0.0
    %785 = vmatprep.subr.mxu0 0.0
    %786 = vmatpush1.msra.mxu0 0.0
    %787 = vmatprep.subr.mxu0 0.0
    %788 = vmatpush1.msra.mxu0 0.0
    %789 = vmatprep.subr.mxu0 0.0
    %790 = vmatpush1.msra.mxu0 0.0
    %791 = vmatprep.subr.mxu0 0.0
    %792 = vmatpush1.msra.mxu0 0.0
    %793 = vmatprep.subr.mxu0 0.0
    %794 = vmatpush1.msra.mxu0 0.0
    %795 = vmatprep.subr.mxu0 0.0
    %796 = vmatpush1.msra.mxu0 0.0
    %797 = vmatprep.subr.mxu0 0.0
    %798 = vmatpush1.msra.mxu0 0.0
    %799 = vmatprep.subr.mxu0 0.0
    %800 = vmatpush1.msra.mxu0 0.0
    %801 = vmatprep.subr.mxu0 0.0
    %802 = vmatpush1.msra.mxu0 0.0
    %803 = vmatprep.subr.mxu0 0.0
    %804 = vmatpush1.msra.mxu0 0.0
    %805 = vmatprep.subr.mxu0 0.0
    %806 = vmatpush1.msra.mxu0 0.0
    %807 = vmatprep.subr.mxu0 0.0
    %808 = vmatpush1.msra.mxu0 0.0
    %809 = vmatprep.subr.mxu0 0.0
    %810 = vmatpush1.msra.mxu0 0.0
    %811 = vmatprep.subr.mxu0 0.0
    %812 = vmatpush1.msra.mxu0 0.0
    %813 = vmatprep.subr.mxu0 0.0
    %814 = vmatpush1.msra.mxu0 0.0
    %815 = vmatprep.mubr.f32.mxu0 0.0
    %816 = vmatmul.mubr.f32.gmra.mrb[0].mxu0 %v85
    %v817 = vpop.f32.mrb[0].mxu0
    %v818 = vadd.f32 0.0, %v817
    %v819 = vpop.f32.mrb[0].mxu0
    %820 = vmatprep.mubr.f32.mxu0 0.0
    %821 = vmatmul.mubr.f32.gmra.mrb[0].mxu0 %v88
    %v822 = vpop.f32.mrb[0].mxu0
    %v823 = vadd.f32 0.0, %v822
    %v824 = vpop.f32.mrb[0].mxu0
    %825 = vdwg.mxu0
    %s826 = scalar_lea.vmem %s6, 32
    %v827 = vld [vmem:[%s826] sm:$0xff]
    %v828 = vld [vmem:[%s826 + $0x8] sm:$0xff]
    %v829 = vld [vmem:[%s826 + $0x10] sm:$0xff]
    %v830 = vld [vmem:[%s826 + $0x18] sm:$0xff]
    %s831 = scalar_lea.vmem %s8, 1
    %v832 = vld [vmem:[%s831] sm:$0x1]
    %v834 = vlaneseq
    %v835 = vshrl.u32 %v834, 7
    %v836 = vsub.s32 0, %v835
    %v837 = vrot.slane %v832, %v836
    %839 = vmatprep.subr.mxu0 0.0
    %840 = vmatpush1.msra.mxu0 %v827
    %841 = vmatprep.subr.mxu0 0.0
    %842 = vmatpush1.msra.mxu0 %v828
    %843 = vmatprep.subr.mxu0 0.0
    %844 = vmatpush1.msra.mxu0 %v829
    %845 = vmatprep.subr.mxu0 0.0
    %846 = vmatpush1.msra.mxu0 %v830
    %847 = vmatprep.subr.mxu0 0.0
    %848 = vmatpush1.msra.mxu0 0.0
    %849 = vmatprep.subr.mxu0 0.0
    %850 = vmatpush1.msra.mxu0 0.0
    %851 = vmatprep.subr.mxu0 0.0
    %852 = vmatpush1.msra.mxu0 0.0
    %853 = vmatprep.subr.mxu0 0.0
    %854 = vmatpush1.msra.mxu0 0.0
    %855 = vmatprep.subr.mxu0 0.0
    %856 = vmatpush1.msra.mxu0 0.0
    %857 = vmatprep.subr.mxu0 0.0
    %858 = vmatpush1.msra.mxu0 0.0
    %859 = vmatprep.subr.mxu0 0.0
    %860 = vmatpush1.msra.mxu0 0.0
    %861 = vmatprep.subr.mxu0 0.0
    %862 = vmatpush1.msra.mxu0 0.0
    %863 = vmatprep.subr.mxu0 0.0
    %864 = vmatpush1.msra.mxu0 0.0
    %865 = vmatprep.subr.mxu0 0.0
    %866 = vmatpush1.msra.mxu0 0.0
    %867 = vmatprep.subr.mxu0 0.0
    %868 = vmatpush1.msra.mxu0 0.0
    %869 = vmatprep.subr.mxu0 0.0
    %870 = vmatpush1.msra.mxu0 0.0
    %871 = vmatprep.subr.mxu0 0.0
    %872 = vmatpush1.msra.mxu0 0.0
    %873 = vmatprep.subr.mxu0 0.0
    %874 = vmatpush1.msra.mxu0 0.0
    %875 = vmatprep.subr.mxu0 0.0
    %876 = vmatpush1.msra.mxu0 0.0
    %877 = vmatprep.subr.mxu0 0.0
    %878 = vmatpush1.msra.mxu0 0.0
    %879 = vmatprep.subr.mxu0 0.0
    %880 = vmatpush1.msra.mxu0 0.0
    %881 = vmatprep.subr.mxu0 0.0
    %882 = vmatpush1.msra.mxu0 0.0
    %883 = vmatprep.subr.mxu0 0.0
    %884 = vmatpush1.msra.mxu0 0.0
    %885 = vmatprep.subr.mxu0 0.0
    %886 = vmatpush1.msra.mxu0 0.0
    %887 = vmatprep.subr.mxu0 0.0
    %888 = vmatpush1.msra.mxu0 0.0
    %889 = vmatprep.subr.mxu0 0.0
    %890 = vmatpush1.msra.mxu0 0.0
    %891 = vmatprep.subr.mxu0 0.0
    %892 = vmatpush1.msra.mxu0 0.0
    %893 = vmatprep.subr.mxu0 0.0
    %894 = vmatpush1.msra.mxu0 0.0
    %895 = vmatprep.subr.mxu0 0.0
    %896 = vmatpush1.msra.mxu0 0.0
    %897 = vmatprep.subr.mxu0 0.0
    %898 = vmatpush1.msra.mxu0 0.0
    %899 = vmatprep.subr.mxu0 0.0
    %900 = vmatpush1.msra.mxu0 0.0
    %901 = vmatprep.subr.mxu0 0.0
    %902 = vmatpush1.msra.mxu0 0.0
    %903 = vmatprep.mubr.f32.mxu0 0.0
    %904 = vmatmul.mubr.f32.gmra.mrb[0].mxu0 %v85
    %v905 = vpop.f32.mrb[0].mxu0
    %v906 = vadd.f32 %v837, %v905
    %v907 = vpop.f32.mrb[0].mxu0
    %908 = vmatprep.mubr.f32.mxu0 0.0
    %909 = vmatmul.mubr.f32.gmra.mrb[0].mxu0 %v88
    %v910 = vpop.f32.mrb[0].mxu0
    %v911 = vadd.f32 %v837, %v910
    %v912 = vpop.f32.mrb[0].mxu0
    %913 = vdwg.mxu0
    %v915 = vsel %vm330, %v738, 0
    %v918 = vsel %vm330, %v818, 0
    %920 = vmatprep.subr.mxu0 0.0
    %921 = vmatpush1.xpose.msra.mxu0 %v918
    %922 = vmatprep.subr.mxu0 0.0
    %923 = vmatpush1.xpose.msra.mxu0 0.0
    %924 = vmatprep.subr.mxu0 0.0
    %925 = vmatpush1.xpose.msra.mxu0 0.0
    %926 = vmatprep.subr.mxu0 0.0
    %927 = vmatpush1.xpose.msra.mxu0 0.0
    %928 = vmatprep.subr.mxu0 0.0
    %929 = vmatpush1.xpose.msra.mxu0 0.0
    %930 = vmatprep.subr.mxu0 0.0
    %931 = vmatpush1.xpose.msra.mxu0 0.0
    %932 = vmatprep.subr.mxu0 0.0
    %933 = vmatpush1.xpose.msra.mxu0 0.0
    %934 = vmatprep.subr.mxu0 0.0
    %935 = vmatpush1.xpose.msra.mxu0 0.0
    %936 = vmatprep.subr.mxu0 0.0
    %937 = vmatpush1.xpose.msra.mxu0 0.0
    %938 = vmatprep.subr.mxu0 0.0
    %939 = vmatpush1.xpose.msra.mxu0 0.0
    %940 = vmatprep.subr.mxu0 0.0
    %941 = vmatpush1.xpose.msra.mxu0 0.0
    %942 = vmatprep.subr.mxu0 0.0
    %943 = vmatpush1.xpose.msra.mxu0 0.0
    %944 = vmatprep.subr.mxu0 0.0
    %945 = vmatpush1.xpose.msra.mxu0 0.0
    %946 = vmatprep.subr.mxu0 0.0
    %947 = vmatpush1.xpose.msra.mxu0 0.0
    %948 = vmatprep.subr.mxu0 0.0
    %949 = vmatpush1.xpose.msra.mxu0 0.0
    %950 = vmatprep.subr.mxu0 0.0
    %951 = vmatpush1.xpose.msra.mxu0 0.0
    %952 = vmatprep.subr.mxu0 0.0
    %953 = vmatpush1.xpose.msra.mxu0 0.0
    %954 = vmatprep.subr.mxu0 0.0
    %955 = vmatpush1.xpose.msra.mxu0 0.0
    %956 = vmatprep.subr.mxu0 0.0
    %957 = vmatpush1.xpose.msra.mxu0 0.0
    %958 = vmatprep.subr.mxu0 0.0
    %959 = vmatpush1.xpose.msra.mxu0 0.0
    %960 = vmatprep.subr.mxu0 0.0
    %961 = vmatpush1.xpose.msra.mxu0 0.0
    %962 = vmatprep.subr.mxu0 0.0
    %963 = vmatpush1.xpose.msra.mxu0 0.0
    %964 = vmatprep.subr.mxu0 0.0
    %965 = vmatpush1.xpose.msra.mxu0 0.0
    %966 = vmatprep.subr.mxu0 0.0
    %967 = vmatpush1.xpose.msra.mxu0 0.0
    %968 = vmatprep.subr.mxu0 0.0
    %969 = vmatpush1.xpose.msra.mxu0 0.0
    %970 = vmatprep.subr.mxu0 0.0
    %971 = vmatpush1.xpose.msra.mxu0 0.0
    %972 = vmatprep.subr.mxu0 0.0
    %973 = vmatpush1.xpose.msra.mxu0 0.0
    %974 = vmatprep.subr.mxu0 0.0
    %975 = vmatpush1.xpose.msra.mxu0 0.0
    %976 = vmatprep.subr.mxu0 0.0
    %977 = vmatpush1.xpose.msra.mxu0 0.0
    %978 = vmatprep.subr.mxu0 0.0
    %979 = vmatpush1.xpose.msra.mxu0 0.0
    %980 = vmatprep.subr.mxu0 0.0
    %981 = vmatpush1.xpose.msra.mxu0 0.0
    %982 = vmatprep.subr.mxu0 0.0
    %983 = vmatpush1.xpose.msra.mxu0 0.0
    %984 = vmatprep.mubr.f32.mxu0 0.0
    %985 = vmatmul.mubr.f32.gmra.mrb[0].mxu0 %v915
    %v986 = vpop.f32.mrb[0].mxu0
    %v987 = vadd.f32 %v57, %v986
    %v988 = vpop.f32.mrb[0].mxu0
    %989 = vdwg.mxu0
    %v991 = vsel %vm330, %v743, 0
    %v994 = vsel %vm330, %v823, 0
    %996 = vmatprep.subr.mxu0 0.0
    %997 = vmatpush1.xpose.msra.mxu0 %v994
    %998 = vmatprep.subr.mxu0 0.0
    %999 = vmatpush1.xpose.msra.mxu0 0.0
    %1000 = vmatprep.subr.mxu0 0.0
    %1001 = vmatpush1.xpose.msra.mxu0 0.0
    %1002 = vmatprep.subr.mxu0 0.0
    %1003 = vmatpush1.xpose.msra.mxu0 0.0
    %1004 = vmatprep.subr.mxu0 0.0
    %1005 = vmatpush1.xpose.msra.mxu0 0.0
    %1006 = vmatprep.subr.mxu0 0.0
    %1007 = vmatpush1.xpose.msra.mxu0 0.0
    %1008 = vmatprep.subr.mxu0 0.0
    %1009 = vmatpush1.xpose.msra.mxu0 0.0
    %1010 = vmatprep.subr.mxu0 0.0
    %1011 = vmatpush1.xpose.msra.mxu0 0.0
    %1012 = vmatprep.subr.mxu0 0.0
    %1013 = vmatpush1.xpose.msra.mxu0 0.0
    %1014 = vmatprep.subr.mxu0 0.0
    %1015 = vmatpush1.xpose.msra.mxu0 0.0
    %1016 = vmatprep.subr.mxu0 0.0
    %1017 = vmatpush1.xpose.msra.mxu0 0.0
    %1018 = vmatprep.subr.mxu0 0.0
    %1019 = vmatpush1.xpose.msra.mxu0 0.0
    %1020 = vmatprep.subr.mxu0 0.0
    %1021 = vmatpush1.xpose.msra.mxu0 0.0
    %1022 = vmatprep.subr.mxu0 0.0
    %1023 = vmatpush1.xpose.msra.mxu0 0.0
    %1024 = vmatprep.subr.mxu0 0.0
    %1025 = vmatpush1.xpose.msra.mxu0 0.0
    %1026 = vmatprep.subr.mxu0 0.0
    %1027 = vmatpush1.xpose.msra.mxu0 0.0
    %1028 = vmatprep.subr.mxu0 0.0
    %1029 = vmatpush1.xpose.msra.mxu0 0.0
    %1030 = vmatprep.subr.mxu0 0.0
    %1031 = vmatpush1.xpose.msra.mxu0 0.0
    %1032 = vmatprep.subr.mxu0 0.0
    %1033 = vmatpush1.xpose.msra.mxu0 0.0
    %1034 = vmatprep.subr.mxu0 0.0
    %1035 = vmatpush1.xpose.msra.mxu0 0.0
    %1036 = vmatprep.subr.mxu0 0.0
    %1037 = vmatpush1.xpose.msra.mxu0 0.0
    %1038 = vmatprep.subr.mxu0 0.0
    %1039 = vmatpush1.xpose.msra.mxu0 0.0
    %1040 = vmatprep.subr.mxu0 0.0
    %1041 = vmatpush1.xpose.msra.mxu0 0.0
    %1042 = vmatprep.subr.mxu0 0.0
    %1043 = vmatpush1.xpose.msra.mxu0 0.0
    %1044 = vmatprep.subr.mxu0 0.0
    %1045 = vmatpush1.xpose.msra.mxu0 0.0
    %1046 = vmatprep.subr.mxu0 0.0
    %1047 = vmatpush1.xpose.msra.mxu0 0.0
    %1048 = vmatprep.subr.mxu0 0.0
    %1049 = vmatpush1.xpose.msra.mxu0 0.0
    %1050 = vmatprep.subr.mxu0 0.0
    %1051 = vmatpush1.xpose.msra.mxu0 0.0
    %1052 = vmatprep.subr.mxu0 0.0
    %1053 = vmatpush1.xpose.msra.mxu0 0.0
    %1054 = vmatprep.subr.mxu0 0.0
    %1055 = vmatpush1.xpose.msra.mxu0 0.0
    %1056 = vmatprep.subr.mxu0 0.0
    %1057 = vmatpush1.xpose.msra.mxu0 0.0
    %1058 = vmatprep.subr.mxu0 0.0
    %1059 = vmatpush1.xpose.msra.mxu0 0.0
    %1060 = vmatprep.mubr.f32.mxu0 0.0
    %1061 = vmatmul.mubr.f32.gmra.mrb[0].mxu0 %v991
    %v1062 = vpop.f32.mrb[0].mxu0
    %v1063 = vadd.f32 %v61, %v1062
    %v1064 = vpop.f32.mrb[0].mxu0
    %1065 = vdwg.mxu0
    %v1066 = vadd.f32 %v987, %v65
    %v1067 = vadd.f32 %v1063, %v69
    %v1068 = vadd.f32 %v1066, %v54
    %v1069 = vadd.f32 %v1067, %v55
    %v1070 = vsel %vm330, %v1068, -inf
    %1071 = vmax.xlane.f32.xlu0 %v1070
    %v1072 = vpop.xlane.xlu0 %1071
    %v1073 = vsel %vm330, %v1069, -inf
    %1074 = vmax.xlane.f32.xlu0 %v1073
    %v1075 = vpop.xlane.xlu0 %1074
    %v1076 = vsub.f32 %v1068, %v1072
    %v1077 = vsub.f32 %v1069, %v1075
    %v1078 = vmul.f32 %v1076, 1.442695
    %v1079 = vpow.pop %v1078
    %v1080 = vmul.f32 %v1077, 1.442695
    %v1081 = vpow.pop %v1080
    %v1082 = vsel %vm330, %v1079, 0.0
    %1083 = vadd.xlane.f32.xlu0 %v1082
    %v1084 = vpop.xlane.xlu0 %1083
    %v1085 = vsel %vm330, %v1081, 0.0
    %1086 = vadd.xlane.f32.xlu0 %v1085
    %v1087 = vpop.xlane.xlu0 %1086
    %v1088 = vrcp.pop %v1084
    %v1089 = vmul.f32 1.0, %v1088
    %v1090 = vrcp.pop %v1087
    %v1091 = vmul.f32 1.0, %v1090
    %v1092 = vmul.f32 %v1079, %v1089
    %v1093 = vmul.f32 %v1081, %v1091
    %v1095 = vsel %vm330, %v1092, 0
    %1097 = vmatprep.subr.mxu0 0.0
    %1098 = vmatpush1.msra.mxu0 %v906
    %1099 = vmatprep.subr.mxu0 0.0
    %1100 = vmatpush1.msra.mxu0 0.0
    %1101 = vmatprep.subr.mxu0 0.0
    %1102 = vmatpush1.msra.mxu0 0.0
    %1103 = vmatprep.subr.mxu0 0.0
    %1104 = vmatpush1.msra.mxu0 0.0
    %1105 = vmatprep.subr.mxu0 0.0
    %1106 = vmatpush1.msra.mxu0 0.0
    %1107 = vmatprep.subr.mxu0 0.0
    %1108 = vmatpush1.msra.mxu0 0.0
    %1109 = vmatprep.subr.mxu0 0.0
    %1110 = vmatpush1.msra.mxu0 0.0
    %1111 = vmatprep.subr.mxu0 0.0
    %1112 = vmatpush1.msra.mxu0 0.0
    %1113 = vmatprep.subr.mxu0 0.0
    %1114 = vmatpush1.msra.mxu0 0.0
    %1115 = vmatprep.subr.mxu0 0.0
    %1116 = vmatpush1.msra.mxu0 0.0
    %1117 = vmatprep.subr.mxu0 0.0
    %1118 = vmatpush1.msra.mxu0 0.0
    %1119 = vmatprep.subr.mxu0 0.0
    %1120 = vmatpush1.msra.mxu0 0.0
    %1121 = vmatprep.subr.mxu0 0.0
    %1122 = vmatpush1.msra.mxu0 0.0
    %1123 = vmatprep.subr.mxu0 0.0
    %1124 = vmatpush1.msra.mxu0 0.0
    %1125 = vmatprep.subr.mxu0 0.0
    %1126 = vmatpush1.msra.mxu0 0.0
    %1127 = vmatprep.subr.mxu0 0.0
    %1128 = vmatpush1.msra.mxu0 0.0
    %1129 = vmatprep.subr.mxu0 0.0
    %1130 = vmatpush1.msra.mxu0 0.0
    %1131 = vmatprep.subr.mxu0 0.0
    %1132 = vmatpush1.msra.mxu0 0.0
    %1133 = vmatprep.subr.mxu0 0.0
    %1134 = vmatpush1.msra.mxu0 0.0
    %1135 = vmatprep.subr.mxu0 0.0
    %1136 = vmatpush1.msra.mxu0 0.0
    %1137 = vmatprep.subr.mxu0 0.0
    %1138 = vmatpush1.msra.mxu0 0.0
    %1139 = vmatprep.subr.mxu0 0.0
    %1140 = vmatpush1.msra.mxu0 0.0
    %1141 = vmatprep.subr.mxu0 0.0
    %1142 = vmatpush1.msra.mxu0 0.0
    %1143 = vmatprep.subr.mxu0 0.0
    %1144 = vmatpush1.msra.mxu0 0.0
    %1145 = vmatprep.subr.mxu0 0.0
    %1146 = vmatpush1.msra.mxu0 0.0
    %1147 = vmatprep.subr.mxu0 0.0
    %1148 = vmatpush1.msra.mxu0 0.0
    %1149 = vmatprep.subr.mxu0 0.0
    %1150 = vmatpush1.msra.mxu0 0.0
    %1151 = vmatprep.subr.mxu0 0.0
    %1152 = vmatpush1.msra.mxu0 0.0
    %1153 = vmatprep.subr.mxu0 0.0
    %1154 = vmatpush1.msra.mxu0 0.0
    %1155 = vmatprep.subr.mxu0 0.0
    %1156 = vmatpush1.msra.mxu0 0.0
    %1157 = vmatprep.subr.mxu0 0.0
    %1158 = vmatpush1.msra.mxu0 0.0
    %1159 = vmatprep.subr.mxu0 0.0
    %1160 = vmatpush1.msra.mxu0 0.0
    %1161 = vmatprep.mubr.f32.mxu0 0.0
    %1162 = vmatmul.mubr.f32.gmra.mrb[0].mxu0 %v1095
    %v1163 = vpop.f32.mrb[0].mxu0
    %v1164 = vadd.f32 0.0, %v1163
    %v1165 = vpop.f32.mrb[0].mxu0
    %1166 = vdwg.mxu0
    %v1168 = vsel %vm330, %v1093, 0
    %1170 = vmatprep.subr.mxu0 0.0
    %1171 = vmatpush1.msra.mxu0 %v911
    %1172 = vmatprep.subr.mxu0 0.0
    %1173 = vmatpush1.msra.mxu0 0.0
    %1174 = vmatprep.subr.mxu0 0.0
    %1175 = vmatpush1.msra.mxu0 0.0
    %1176 = vmatprep.subr.mxu0 0.0
    %1177 = vmatpush1.msra.mxu0 0.0
    %1178 = vmatprep.subr.mxu0 0.0
    %1179 = vmatpush1.msra.mxu0 0.0
    %1180 = vmatprep.subr.mxu0 0.0
    %1181 = vmatpush1.msra.mxu0 0.0
    %1182 = vmatprep.subr.mxu0 0.0
    %1183 = vmatpush1.msra.mxu0 0.0
    %1184 = vmatprep.subr.mxu0 0.0
    %1185 = vmatpush1.msra.mxu0 0.0
    %1186 = vmatprep.subr.mxu0 0.0
    %1187 = vmatpush1.msra.mxu0 0.0
    %1188 = vmatprep.subr.mxu0 0.0
    %1189 = vmatpush1.msra.mxu0 0.0
    %1190 = vmatprep.subr.mxu0 0.0
    %1191 = vmatpush1.msra.mxu0 0.0
    %1192 = vmatprep.subr.mxu0 0.0
    %1193 = vmatpush1.msra.mxu0 0.0
    %1194 = vmatprep.subr.mxu0 0.0
    %1195 = vmatpush1.msra.mxu0 0.0
    %1196 = vmatprep.subr.mxu0 0.0
    %1197 = vmatpush1.msra.mxu0 0.0
    %1198 = vmatprep.subr.mxu0 0.0
    %1199 = vmatpush1.msra.mxu0 0.0
    %1200 = vmatprep.subr.mxu0 0.0
    %1201 = vmatpush1.msra.mxu0 0.0
    %1202 = vmatprep.subr.mxu0 0.0
    %1203 = vmatpush1.msra.mxu0 0.0
    %1204 = vmatprep.subr.mxu0 0.0
    %1205 = vmatpush1.msra.mxu0 0.0
    %1206 = vmatprep.subr.mxu0 0.0
    %1207 = vmatpush1.msra.mxu0 0.0
    %1208 = vmatprep.subr.mxu0 0.0
    %1209 = vmatpush1.msra.mxu0 0.0
    %1210 = vmatprep.subr.mxu0 0.0
    %1211 = vmatpush1.msra.mxu0 0.0
    %1212 = vmatprep.subr.mxu0 0.0
    %1213 = vmatpush1.msra.mxu0 0.0
    %1214 = vmatprep.subr.mxu0 0.0
    %1215 = vmatpush1.msra.mxu0 0.0
    %1216 = vmatprep.subr.mxu0 0.0
    %1217 = vmatpush1.msra.mxu0 0.0
    %1218 = vmatprep.subr.mxu0 0.0
    %1219 = vmatpush1.msra.mxu0 0.0
    %1220 = vmatprep.subr.mxu0 0.0
    %1221 = vmatpush1.msra.mxu0 0.0
    %1222 = vmatprep.subr.mxu0 0.0
    %1223 = vmatpush1.msra.mxu0 0.0
    %1224 = vmatprep.subr.mxu0 0.0
    %1225 = vmatpush1.msra.mxu0 0.0
    %1226 = vmatprep.subr.mxu0 0.0
    %1227 = vmatpush1.msra.mxu0 0.0
    %1228 = vmatprep.subr.mxu0 0.0
    %1229 = vmatpush1.msra.mxu0 0.0
    %1230 = vmatprep.subr.mxu0 0.0
    %1231 = vmatpush1.msra.mxu0 0.0
    %1232 = vmatprep.subr.mxu0 0.0
    %1233 = vmatpush1.msra.mxu0 0.0
    %1234 = vmatprep.mubr.f32.mxu0 0.0
    %1235 = vmatmul.mubr.f32.gmra.mrb[0].mxu0 %v1168
    %v1236 = vpop.f32.mrb[0].mxu0
    %v1237 = vadd.f32 0.0, %v1236
    %v1238 = vpop.f32.mrb[0].mxu0
    %1239 = vdwg.mxu0
    %s1240 = scalar_lea.vmem %s9, 8
    %v1241 = vld [vmem:[%s1240] sm:$0xff]
    %v1243 = vsel %vm330, %v1164, 0
    %v1246 = vsel %vm330, %v1237, 0
    %1248 = vmatprep.subr.mxu0 0.0
    %1249 = vmatpush1.msra.mxu0 %v1241
    %1250 = vmatprep.subr.mxu0 0.0
    %1251 = vmatpush1.msra.mxu0 0.0
    %1252 = vmatprep.subr.mxu0 0.0
    %1253 = vmatpush1.msra.mxu0 0.0
    %1254 = vmatprep.subr.mxu0 0.0
    %1255 = vmatpush1.msra.mxu0 0.0
    %1256 = vmatprep.subr.mxu0 0.0
    %1257 = vmatpush1.msra.mxu0 0.0
    %1258 = vmatprep.subr.mxu0 0.0
    %1259 = vmatpush1.msra.mxu0 0.0
    %1260 = vmatprep.subr.mxu0 0.0
    %1261 = vmatpush1.msra.mxu0 0.0
    %1262 = vmatprep.subr.mxu0 0.0
    %1263 = vmatpush1.msra.mxu0 0.0
    %1264 = vmatprep.subr.mxu0 0.0
    %1265 = vmatpush1.msra.mxu0 0.0
    %1266 = vmatprep.subr.mxu0 0.0
    %1267 = vmatpush1.msra.mxu0 0.0
    %1268 = vmatprep.subr.mxu0 0.0
    %1269 = vmatpush1.msra.mxu0 0.0
    %1270 = vmatprep.subr.mxu0 0.0
    %1271 = vmatpush1.msra.mxu0 0.0
    %1272 = vmatprep.subr.mxu0 0.0
    %1273 = vmatpush1.msra.mxu0 0.0
    %1274 = vmatprep.subr.mxu0 0.0
    %1275 = vmatpush1.msra.mxu0 0.0
    %1276 = vmatprep.subr.mxu0 0.0
    %1277 = vmatpush1.msra.mxu0 0.0
    %1278 = vmatprep.subr.mxu0 0.0
    %1279 = vmatpush1.msra.mxu0 0.0
    %1280 = vmatprep.subr.mxu0 0.0
    %1281 = vmatpush1.msra.mxu0 0.0
    %1282 = vmatprep.subr.mxu0 0.0
    %1283 = vmatpush1.msra.mxu0 0.0
    %1284 = vmatprep.subr.mxu0 0.0
    %1285 = vmatpush1.msra.mxu0 0.0
    %1286 = vmatprep.subr.mxu0 0.0
    %1287 = vmatpush1.msra.mxu0 0.0
    %1288 = vmatprep.subr.mxu0 0.0
    %1289 = vmatpush1.msra.mxu0 0.0
    %1290 = vmatprep.subr.mxu0 0.0
    %1291 = vmatpush1.msra.mxu0 0.0
    %1292 = vmatprep.subr.mxu0 0.0
    %1293 = vmatpush1.msra.mxu0 0.0
    %1294 = vmatprep.subr.mxu0 0.0
    %1295 = vmatpush1.msra.mxu0 0.0
    %1296 = vmatprep.subr.mxu0 0.0
    %1297 = vmatpush1.msra.mxu0 0.0
    %1298 = vmatprep.subr.mxu0 0.0
    %1299 = vmatpush1.msra.mxu0 0.0
    %1300 = vmatprep.subr.mxu0 0.0
    %1301 = vmatpush1.msra.mxu0 0.0
    %1302 = vmatprep.subr.mxu0 0.0
    %1303 = vmatpush1.msra.mxu0 0.0
    %1304 = vmatprep.subr.mxu0 0.0
    %1305 = vmatpush1.msra.mxu0 0.0
    %1306 = vmatprep.subr.mxu0 0.0
    %1307 = vmatpush1.msra.mxu0 0.0
    %1308 = vmatprep.subr.mxu0 0.0
    %1309 = vmatpush1.msra.mxu0 0.0
    %1310 = vmatprep.subr.mxu0 0.0
    %1311 = vmatpush1.msra.mxu0 0.0
    %1312 = vmatprep.mubr.f32.mxu0 0.0
    %1313 = vmatmul.mubr.f32.gmra.mrb[0].mxu0 %v1243
    %v1314 = vpop.f32.mrb[0].mxu0
    %v1315 = vadd.f32 0.0, %v1314
    %v1316 = vpop.f32.mrb[0].mxu0
    %1317 = vmatprep.mubr.f32.mxu0 0.0
    %1318 = vmatmul.mubr.f32.gmra.mrb[0].mxu0 %v1246
    %v1319 = vpop.f32.mrb[0].mxu0
    %v1320 = vadd.f32 0.0, %v1319
    %v1321 = vpop.f32.mrb[0].mxu0
    %1322 = vdwg.mxu0
    %v1324 = vsel %vm330, %v581, 0
    %v1327 = vsel %vm330, %v654, 0
    %1329 = vmatprep.subr.mxu0 0.0
    %1330 = vmatpush1.msra.mxu0 %v657
    %1331 = vmatprep.subr.mxu0 0.0
    %1332 = vmatpush1.msra.mxu0 0.0
    %1333 = vmatprep.subr.mxu0 0.0
    %1334 = vmatpush1.msra.mxu0 0.0
    %1335 = vmatprep.subr.mxu0 0.0
    %1336 = vmatpush1.msra.mxu0 0.0
    %1337 = vmatprep.subr.mxu0 0.0
    %1338 = vmatpush1.msra.mxu0 0.0
    %1339 = vmatprep.subr.mxu0 0.0
    %1340 = vmatpush1.msra.mxu0 0.0
    %1341 = vmatprep.subr.mxu0 0.0
    %1342 = vmatpush1.msra.mxu0 0.0
    %1343 = vmatprep.subr.mxu0 0.0
    %1344 = vmatpush1.msra.mxu0 0.0
    %1345 = vmatprep.subr.mxu0 0.0
    %1346 = vmatpush1.msra.mxu0 0.0
    %1347 = vmatprep.subr.mxu0 0.0
    %1348 = vmatpush1.msra.mxu0 0.0
    %1349 = vmatprep.subr.mxu0 0.0
    %1350 = vmatpush1.msra.mxu0 0.0
    %1351 = vmatprep.subr.mxu0 0.0
    %1352 = vmatpush1.msra.mxu0 0.0
    %1353 = vmatprep.subr.mxu0 0.0
    %1354 = vmatpush1.msra.mxu0 0.0
    %1355 = vmatprep.subr.mxu0 0.0
    %1356 = vmatpush1.msra.mxu0 0.0
    %1357 = vmatprep.subr.mxu0 0.0
    %1358 = vmatpush1.msra.mxu0 0.0
    %1359 = vmatprep.subr.mxu0 0.0
    %1360 = vmatpush1.msra.mxu0 0.0
    %1361 = vmatprep.subr.mxu0 0.0
    %1362 = vmatpush1.msra.mxu0 0.0
    %1363 = vmatprep.subr.mxu0 0.0
    %1364 = vmatpush1.msra.mxu0 0.0
    %1365 = vmatprep.subr.mxu0 0.0
    %1366 = vmatpush1.msra.mxu0 0.0
    %1367 = vmatprep.subr.mxu0 0.0
    %1368 = vmatpush1.msra.mxu0 0.0
    %1369 = vmatprep.subr.mxu0 0.0
    %1370 = vmatpush1.msra.mxu0 0.0
    %1371 = vmatprep.subr.mxu0 0.0
    %1372 = vmatpush1.msra.mxu0 0.0
    %1373 = vmatprep.subr.mxu0 0.0
    %1374 = vmatpush1.msra.mxu0 0.0
    %1375 = vmatprep.subr.mxu0 0.0
    %1376 = vmatpush1.msra.mxu0 0.0
    %1377 = vmatprep.subr.mxu0 0.0
    %1378 = vmatpush1.msra.mxu0 0.0
    %1379 = vmatprep.subr.mxu0 0.0
    %1380 = vmatpush1.msra.mxu0 0.0
    %1381 = vmatprep.subr.mxu0 0.0
    %1382 = vmatpush1.msra.mxu0 0.0
    %1383 = vmatprep.subr.mxu0 0.0
    %1384 = vmatpush1.msra.mxu0 0.0
    %1385 = vmatprep.subr.mxu0 0.0
    %1386 = vmatpush1.msra.mxu0 0.0
    %1387 = vmatprep.subr.mxu0 0.0
    %1388 = vmatpush1.msra.mxu0 0.0
    %1389 = vmatprep.subr.mxu0 0.0
    %1390 = vmatpush1.msra.mxu0 0.0
    %1391 = vmatprep.subr.mxu0 0.0
    %1392 = vmatpush1.msra.mxu0 0.0
    %1393 = vmatprep.mubr.f32.mxu0 0.0
    %1394 = vmatmul.mubr.f32.gmra.mrb[0].mxu0 %v1324
    %v1395 = vpop.f32.mrb[0].mxu0
    %v1396 = vadd.f32 %v1315, %v1395
    %v1397 = vpop.f32.mrb[0].mxu0
    %1398 = vmatprep.mubr.f32.mxu0 0.0
    %1399 = vmatmul.mubr.f32.gmra.mrb[0].mxu0 %v1327
    %v1400 = vpop.f32.mrb[0].mxu0
    %v1401 = vadd.f32 %v1320, %v1400
    %v1402 = vpop.f32.mrb[0].mxu0
    %1403 = vdwg.mxu0
    %s1404 = scalar_lea.vmem %s4, 64
    %v1405 = vld [vmem:[%s1404] sm:$0xff]
    %v1406 = vld [vmem:[%s1404 + $0x8] sm:$0xff]
    %v1407 = vld [vmem:[%s1404 + $0x10] sm:$0xff]
    %v1408 = vld [vmem:[%s1404 + $0x18] sm:$0xff]
    %s1409 = scalar_lea.vmem %s7, 2
    %v1410 = vld [vmem:[%s1409] sm:$0x1]
    %v1412 = vlaneseq
    %v1413 = vshrl.u32 %v1412, 7
    %v1414 = vsub.s32 0, %v1413
    %v1415 = vrot.slane %v1410, %v1414
    %1417 = vmatprep.subr.mxu0 0.0
    %1418 = vmatpush1.msra.mxu0 %v1405
    %1419 = vmatprep.subr.mxu0 0.0
    %1420 = vmatpush1.msra.mxu0 %v1406
    %1421 = vmatprep.subr.mxu0 0.0
    %1422 = vmatpush1.msra.mxu0 %v1407
    %1423 = vmatprep.subr.mxu0 0.0
    %1424 = vmatpush1.msra.mxu0 %v1408
    %1425 = vmatprep.subr.mxu0 0.0
    %1426 = vmatpush1.msra.mxu0 0.0
    %1427 = vmatprep.subr.mxu0 0.0
    %1428 = vmatpush1.msra.mxu0 0.0
    %1429 = vmatprep.subr.mxu0 0.0
    %1430 = vmatpush1.msra.mxu0 0.0
    %1431 = vmatprep.subr.mxu0 0.0
    %1432 = vmatpush1.msra.mxu0 0.0
    %1433 = vmatprep.subr.mxu0 0.0
    %1434 = vmatpush1.msra.mxu0 0.0
    %1435 = vmatprep.subr.mxu0 0.0
    %1436 = vmatpush1.msra.mxu0 0.0
    %1437 = vmatprep.subr.mxu0 0.0
    %1438 = vmatpush1.msra.mxu0 0.0
    %1439 = vmatprep.subr.mxu0 0.0
    %1440 = vmatpush1.msra.mxu0 0.0
    %1441 = vmatprep.subr.mxu0 0.0
    %1442 = vmatpush1.msra.mxu0 0.0
    %1443 = vmatprep.subr.mxu0 0.0
    %1444 = vmatpush1.msra.mxu0 0.0
    %1445 = vmatprep.subr.mxu0 0.0
    %1446 = vmatpush1.msra.mxu0 0.0
    %1447 = vmatprep.subr.mxu0 0.0
    %1448 = vmatpush1.msra.mxu0 0.0
    %1449 = vmatprep.subr.mxu0 0.0
    %1450 = vmatpush1.msra.mxu0 0.0
    %1451 = vmatprep.subr.mxu0 0.0
    %1452 = vmatpush1.msra.mxu0 0.0
    %1453 = vmatprep.subr.mxu0 0.0
    %1454 = vmatpush1.msra.mxu0 0.0
    %1455 = vmatprep.subr.mxu0 0.0
    %1456 = vmatpush1.msra.mxu0 0.0
    %1457 = vmatprep.subr.mxu0 0.0
    %1458 = vmatpush1.msra.mxu0 0.0
    %1459 = vmatprep.subr.mxu0 0.0
    %1460 = vmatpush1.msra.mxu0 0.0
    %1461 = vmatprep.subr.mxu0 0.0
    %1462 = vmatpush1.msra.mxu0 0.0
    %1463 = vmatprep.subr.mxu0 0.0
    %1464 = vmatpush1.msra.mxu0 0.0
    %1465 = vmatprep.subr.mxu0 0.0
    %1466 = vmatpush1.msra.mxu0 0.0
    %1467 = vmatprep.subr.mxu0 0.0
    %1468 = vmatpush1.msra.mxu0 0.0
    %1469 = vmatprep.subr.mxu0 0.0
    %1470 = vmatpush1.msra.mxu0 0.0
    %1471 = vmatprep.subr.mxu0 0.0
    %1472 = vmatpush1.msra.mxu0 0.0
    %1473 = vmatprep.subr.mxu0 0.0
    %1474 = vmatpush1.msra.mxu0 0.0
    %1475 = vmatprep.subr.mxu0 0.0
    %1476 = vmatpush1.msra.mxu0 0.0
    %1477 = vmatprep.subr.mxu0 0.0
    %1478 = vmatpush1.msra.mxu0 0.0
    %1479 = vmatprep.subr.mxu0 0.0
    %1480 = vmatpush1.msra.mxu0 0.0
    %1481 = vmatprep.mubr.f32.mxu0 0.0
    %1482 = vmatmul.mubr.f32.gmra.mrb[0].mxu0 %v85
    %v1483 = vpop.f32.mrb[0].mxu0
    %v1484 = vadd.f32 %v1415, %v1483
    %v1485 = vpop.f32.mrb[0].mxu0
    %1486 = vmatprep.mubr.f32.mxu0 0.0
    %1487 = vmatmul.mubr.f32.gmra.mrb[0].mxu0 %v88
    %v1488 = vpop.f32.mrb[0].mxu0
    %v1489 = vadd.f32 %v1415, %v1488
    %v1490 = vpop.f32.mrb[0].mxu0
    %1491 = vdwg.mxu0
    %s1492 = scalar_lea.vmem %s5, 64
    %v1493 = vld [vmem:[%s1492] sm:$0xff]
    %v1494 = vld [vmem:[%s1492 + $0x8] sm:$0xff]
    %v1495 = vld [vmem:[%s1492 + $0x10] sm:$0xff]
    %v1496 = vld [vmem:[%s1492 + $0x18] sm:$0xff]
    %1497 = vmatprep.subr.mxu0 0.0
    %1498 = vmatpush1.msra.mxu0 %v1493
    %1499 = vmatprep.subr.mxu0 0.0
    %1500 = vmatpush1.msra.mxu0 %v1494
    %1501 = vmatprep.subr.mxu0 0.0
    %1502 = vmatpush1.msra.mxu0 %v1495
    %1503 = vmatprep.subr.mxu0 0.0
    %1504 = vmatpush1.msra.mxu0 %v1496
    %1505 = vmatprep.subr.mxu0 0.0
    %1506 = vmatpush1.msra.mxu0 0.0
    %1507 = vmatprep.subr.mxu0 0.0
    %1508 = vmatpush1.msra.mxu0 0.0
    %1509 = vmatprep.subr.mxu0 0.0
    %1510 = vmatpush1.msra.mxu0 0.0
    %1511 = vmatprep.subr.mxu0 0.0
    %1512 = vmatpush1.msra.mxu0 0.0
    %1513 = vmatprep.subr.mxu0 0.0
    %1514 = vmatpush1.msra.mxu0 0.0
    %1515 = vmatprep.subr.mxu0 0.0
    %1516 = vmatpush1.msra.mxu0 0.0
    %1517 = vmatprep.subr.mxu0 0.0
    %1518 = vmatpush1.msra.mxu0 0.0
    %1519 = vmatprep.subr.mxu0 0.0
    %1520 = vmatpush1.msra.mxu0 0.0
    %1521 = vmatprep.subr.mxu0 0.0
    %1522 = vmatpush1.msra.mxu0 0.0
    %1523 = vmatprep.subr.mxu0 0.0
    %1524 = vmatpush1.msra.mxu0 0.0
    %1525 = vmatprep.subr.mxu0 0.0
    %1526 = vmatpush1.msra.mxu0 0.0
    %1527 = vmatprep.subr.mxu0 0.0
    %1528 = vmatpush1.msra.mxu0 0.0
    %1529 = vmatprep.subr.mxu0 0.0
    %1530 = vmatpush1.msra.mxu0 0.0
    %1531 = vmatprep.subr.mxu0 0.0
    %1532 = vmatpush1.msra.mxu0 0.0
    %1533 = vmatprep.subr.mxu0 0.0
    %1534 = vmatpush1.msra.mxu0 0.0
    %1535 = vmatprep.subr.mxu0 0.0
    %1536 = vmatpush1.msra.mxu0 0.0
    %1537 = vmatprep.subr.mxu0 0.0
    %1538 = vmatpush1.msra.mxu0 0.0
    %1539 = vmatprep.subr.mxu0 0.0
    %1540 = vmatpush1.msra.mxu0 0.0
    %1541 = vmatprep.subr.mxu0 0.0
    %1542 = vmatpush1.msra.mxu0 0.0
    %1543 = vmatprep.subr.mxu0 0.0
    %1544 = vmatpush1.msra.mxu0 0.0
    %1545 = vmatprep.subr.mxu0 0.0
    %1546 = vmatpush1.msra.mxu0 0.0
    %1547 = vmatprep.subr.mxu0 0.0
    %1548 = vmatpush1.msra.mxu0 0.0
    %1549 = vmatprep.subr.mxu0 0.0
    %1550 = vmatpush1.msra.mxu0 0.0
    %1551 = vmatprep.subr.mxu0 0.0
    %1552 = vmatpush1.msra.mxu0 0.0
    %1553 = vmatprep.subr.mxu0 0.0
    %1554 = vmatpush1.msra.mxu0 0.0
    %1555 = vmatprep.subr.mxu0 0.0
    %1556 = vmatpush1.msra.mxu0 0.0
    %1557 = vmatprep.subr.mxu0 0.0
    %1558 = vmatpush1.msra.mxu0 0.0
    %1559 = vmatprep.subr.mxu0 0.0
    %1560 = vmatpush1.msra.mxu0 0.0
    %1561 = vmatprep.mubr.f32.mxu0 0.0
    %1562 = vmatmul.mubr.f32.gmra.mrb[0].mxu0 %v85
    %v1563 = vpop.f32.mrb[0].mxu0
    %v1564 = vadd.f32 0.0, %v1563
    %v1565 = vpop.f32.mrb[0].mxu0
    %1566 = vmatprep.mubr.f32.mxu0 0.0
    %1567 = vmatmul.mubr.f32.gmra.mrb[0].mxu0 %v88
    %v1568 = vpop.f32.mrb[0].mxu0
    %v1569 = vadd.f32 0.0, %v1568
    %v1570 = vpop.f32.mrb[0].mxu0
    %1571 = vdwg.mxu0
    %s1572 = scalar_lea.vmem %s6, 64
    %v1573 = vld [vmem:[%s1572] sm:$0xff]
    %v1574 = vld [vmem:[%s1572 + $0x8] sm:$0xff]
    %v1575 = vld [vmem:[%s1572 + $0x10] sm:$0xff]
    %v1576 = vld [vmem:[%s1572 + $0x18] sm:$0xff]
    %s1577 = scalar_lea.vmem %s8, 2
    %v1578 = vld [vmem:[%s1577] sm:$0x1]
    %v1580 = vlaneseq
    %v1581 = vshrl.u32 %v1580, 7
    %v1582 = vsub.s32 0, %v1581
    %v1583 = vrot.slane %v1578, %v1582
    %1585 = vmatprep.subr.mxu0 0.0
    %1586 = vmatpush1.msra.mxu0 %v1573
    %1587 = vmatprep.subr.mxu0 0.0
    %1588 = vmatpush1.msra.mxu0 %v1574
    %1589 = vmatprep.subr.mxu0 0.0
    %1590 = vmatpush1.msra.mxu0 %v1575
    %1591 = vmatprep.subr.mxu0 0.0
    %1592 = vmatpush1.msra.mxu0 %v1576
    %1593 = vmatprep.subr.mxu0 0.0
    %1594 = vmatpush1.msra.mxu0 0.0
    %1595 = vmatprep.subr.mxu0 0.0
    %1596 = vmatpush1.msra.mxu0 0.0
    %1597 = vmatprep.subr.mxu0 0.0
    %1598 = vmatpush1.msra.mxu0 0.0
    %1599 = vmatprep.subr.mxu0 0.0
    %1600 = vmatpush1.msra.mxu0 0.0
    %1601 = vmatprep.subr.mxu0 0.0
    %1602 = vmatpush1.msra.mxu0 0.0
    %1603 = vmatprep.subr.mxu0 0.0
    %1604 = vmatpush1.msra.mxu0 0.0
    %1605 = vmatprep.subr.mxu0 0.0
    %1606 = vmatpush1.msra.mxu0 0.0
    %1607 = vmatprep.subr.mxu0 0.0
    %1608 = vmatpush1.msra.mxu0 0.0
    %1609 = vmatprep.subr.mxu0 0.0
    %1610 = vmatpush1.msra.mxu0 0.0
    %1611 = vmatprep.subr.mxu0 0.0
    %1612 = vmatpush1.msra.mxu0 0.0
    %1613 = vmatprep.subr.mxu0 0.0
    %1614 = vmatpush1.msra.mxu0 0.0
    %1615 = vmatprep.subr.mxu0 0.0
    %1616 = vmatpush1.msra.mxu0 0.0
    %1617 = vmatprep.subr.mxu0 0.0
    %1618 = vmatpush1.msra.mxu0 0.0
    %1619 = vmatprep.subr.mxu0 0.0
    %1620 = vmatpush1.msra.mxu0 0.0
    %1621 = vmatprep.subr.mxu0 0.0
    %1622 = vmatpush1.msra.mxu0 0.0
    %1623 = vmatprep.subr.mxu0 0.0
    %1624 = vmatpush1.msra.mxu0 0.0
    %1625 = vmatprep.subr.mxu0 0.0
    %1626 = vmatpush1.msra.mxu0 0.0
    %1627 = vmatprep.subr.mxu0 0.0
    %1628 = vmatpush1.msra.mxu0 0.0
    %1629 = vmatprep.subr.mxu0 0.0
    %1630 = vmatpush1.msra.mxu0 0.0
    %1631 = vmatprep.subr.mxu0 0.0
    %1632 = vmatpush1.msra.mxu0 0.0
    %1633 = vmatprep.subr.mxu0 0.0
    %1634 = vmatpush1.msra.mxu0 0.0
    %1635 = vmatprep.subr.mxu0 0.0
    %1636 = vmatpush1.msra.mxu0 0.0
    %1637 = vmatprep.subr.mxu0 0.0
    %1638 = vmatpush1.msra.mxu0 0.0
    %1639 = vmatprep.subr.mxu0 0.0
    %1640 = vmatpush1.msra.mxu0 0.0
    %1641 = vmatprep.subr.mxu0 0.0
    %1642 = vmatpush1.msra.mxu0 0.0
    %1643 = vmatprep.subr.mxu0 0.0
    %1644 = vmatpush1.msra.mxu0 0.0
    %1645 = vmatprep.subr.mxu0 0.0
    %1646 = vmatpush1.msra.mxu0 0.0
    %1647 = vmatprep.subr.mxu0 0.0
    %1648 = vmatpush1.msra.mxu0 0.0
    %1649 = vmatprep.mubr.f32.mxu0 0.0
    %1650 = vmatmul.mubr.f32.gmra.mrb[0].mxu0 %v85
    %v1651 = vpop.f32.mrb[0].mxu0
    %v1652 = vadd.f32 %v1583, %v1651
    %v1653 = vpop.f32.mrb[0].mxu0
    %1654 = vmatprep.mubr.f32.mxu0 0.0
    %1655 = vmatmul.mubr.f32.gmra.mrb[0].mxu0 %v88
    %v1656 = vpop.f32.mrb[0].mxu0
    %v1657 = vadd.f32 %v1583, %v1656
    %v1658 = vpop.f32.mrb[0].mxu0
    %1659 = vdwg.mxu0
    %v1661 = vsel %vm330, %v1484, 0
    %v1664 = vsel %vm330, %v1564, 0
    %1666 = vmatprep.subr.mxu0 0.0
    %1667 = vmatpush1.xpose.msra.mxu0 %v1664
    %1668 = vmatprep.subr.mxu0 0.0
    %1669 = vmatpush1.xpose.msra.mxu0 0.0
    %1670 = vmatprep.subr.mxu0 0.0
    %1671 = vmatpush1.xpose.msra.mxu0 0.0
    %1672 = vmatprep.subr.mxu0 0.0
    %1673 = vmatpush1.xpose.msra.mxu0 0.0
    %1674 = vmatprep.subr.mxu0 0.0
    %1675 = vmatpush1.xpose.msra.mxu0 0.0
    %1676 = vmatprep.subr.mxu0 0.0
    %1677 = vmatpush1.xpose.msra.mxu0 0.0
    %1678 = vmatprep.subr.mxu0 0.0
    %1679 = vmatpush1.xpose.msra.mxu0 0.0
    %1680 = vmatprep.subr.mxu0 0.0
    %1681 = vmatpush1.xpose.msra.mxu0 0.0
    %1682 = vmatprep.subr.mxu0 0.0
    %1683 = vmatpush1.xpose.msra.mxu0 0.0
    %1684 = vmatprep.subr.mxu0 0.0
    %1685 = vmatpush1.xpose.msra.mxu0 0.0
    %1686 = vmatprep.subr.mxu0 0.0
    %1687 = vmatpush1.xpose.msra.mxu0 0.0
    %1688 = vmatprep.subr.mxu0 0.0
    %1689 = vmatpush1.xpose.msra.mxu0 0.0
    %1690 = vmatprep.subr.mxu0 0.0
    %1691 = vmatpush1.xpose.msra.mxu0 0.0
    %1692 = vmatprep.subr.mxu0 0.0
    %1693 = vmatpush1.xpose.msra.mxu0 0.0
    %1694 = vmatprep.subr.mxu0 0.0
    %1695 = vmatpush1.xpose.msra.mxu0 0.0
    %1696 = vmatprep.subr.mxu0 0.0
    %1697 = vmatpush1.xpose.msra.mxu0 0.0
    %1698 = vmatprep.subr.mxu0 0.0
    %1699 = vmatpush1.xpose.msra.mxu0 0.0
    %1700 = vmatprep.subr.mxu0 0.0
    %1701 = vmatpush1.xpose.msra.mxu0 0.0
    %1702 = vmatprep.subr.mxu0 0.0
    %1703 = vmatpush1.xpose.msra.mxu0 0.0
    %1704 = vmatprep.subr.mxu0 0.0
    %1705 = vmatpush1.xpose.msra.mxu0 0.0
    %1706 = vmatprep.subr.mxu0 0.0
    %1707 = vmatpush1.xpose.msra.mxu0 0.0
    %1708 = vmatprep.subr.mxu0 0.0
    %1709 = vmatpush1.xpose.msra.mxu0 0.0
    %1710 = vmatprep.subr.mxu0 0.0
    %1711 = vmatpush1.xpose.msra.mxu0 0.0
    %1712 = vmatprep.subr.mxu0 0.0
    %1713 = vmatpush1.xpose.msra.mxu0 0.0
    %1714 = vmatprep.subr.mxu0 0.0
    %1715 = vmatpush1.xpose.msra.mxu0 0.0
    %1716 = vmatprep.subr.mxu0 0.0
    %1717 = vmatpush1.xpose.msra.mxu0 0.0
    %1718 = vmatprep.subr.mxu0 0.0
    %1719 = vmatpush1.xpose.msra.mxu0 0.0
    %1720 = vmatprep.subr.mxu0 0.0
    %1721 = vmatpush1.xpose.msra.mxu0 0.0
    %1722 = vmatprep.subr.mxu0 0.0
    %1723 = vmatpush1.xpose.msra.mxu0 0.0
    %1724 = vmatprep.subr.mxu0 0.0
    %1725 = vmatpush1.xpose.msra.mxu0 0.0
    %1726 = vmatprep.subr.mxu0 0.0
    %1727 = vmatpush1.xpose.msra.mxu0 0.0
    %1728 = vmatprep.subr.mxu0 0.0
    %1729 = vmatpush1.xpose.msra.mxu0 0.0
    %1730 = vmatprep.mubr.f32.mxu0 0.0
    %1731 = vmatmul.mubr.f32.gmra.mrb[0].mxu0 %v1661
    %v1732 = vpop.f32.mrb[0].mxu0
    %v1733 = vadd.f32 %v58, %v1732
    %v1734 = vpop.f32.mrb[0].mxu0
    %1735 = vdwg.mxu0
    %v1737 = vsel %vm330, %v1489, 0
    %v1740 = vsel %vm330, %v1569, 0
    %1742 = vmatprep.subr.mxu0 0.0
    %1743 = vmatpush1.xpose.msra.mxu0 %v1740
    %1744 = vmatprep.subr.mxu0 0.0
    %1745 = vmatpush1.xpose.msra.mxu0 0.0
    %1746 = vmatprep.subr.mxu0 0.0
    %1747 = vmatpush1.xpose.msra.mxu0 0.0
    %1748 = vmatprep.subr.mxu0 0.0
    %1749 = vmatpush1.xpose.msra.mxu0 0.0
    %1750 = vmatprep.subr.mxu0 0.0
    %1751 = vmatpush1.xpose.msra.mxu0 0.0
    %1752 = vmatprep.subr.mxu0 0.0
    %1753 = vmatpush1.xpose.msra.mxu0 0.0
    %1754 = vmatprep.subr.mxu0 0.0
    %1755 = vmatpush1.xpose.msra.mxu0 0.0
    %1756 = vmatprep.subr.mxu0 0.0
    %1757 = vmatpush1.xpose.msra.mxu0 0.0
    %1758 = vmatprep.subr.mxu0 0.0
    %1759 = vmatpush1.xpose.msra.mxu0 0.0
    %1760 = vmatprep.subr.mxu0 0.0
    %1761 = vmatpush1.xpose.msra.mxu0 0.0
    %1762 = vmatprep.subr.mxu0 0.0
    %1763 = vmatpush1.xpose.msra.mxu0 0.0
    %1764 = vmatprep.subr.mxu0 0.0
    %1765 = vmatpush1.xpose.msra.mxu0 0.0
    %1766 = vmatprep.subr.mxu0 0.0
    %1767 = vmatpush1.xpose.msra.mxu0 0.0
    %1768 = vmatprep.subr.mxu0 0.0
    %1769 = vmatpush1.xpose.msra.mxu0 0.0
    %1770 = vmatprep.subr.mxu0 0.0
    %1771 = vmatpush1.xpose.msra.mxu0 0.0
    %1772 = vmatprep.subr.mxu0 0.0
    %1773 = vmatpush1.xpose.msra.mxu0 0.0
    %1774 = vmatprep.subr.mxu0 0.0
    %1775 = vmatpush1.xpose.msra.mxu0 0.0
    %1776 = vmatprep.subr.mxu0 0.0
    %1777 = vmatpush1.xpose.msra.mxu0 0.0
    %1778 = vmatprep.subr.mxu0 0.0
    %1779 = vmatpush1.xpose.msra.mxu0 0.0
    %1780 = vmatprep.subr.mxu0 0.0
    %1781 = vmatpush1.xpose.msra.mxu0 0.0
    %1782 = vmatprep.subr.mxu0 0.0
    %1783 = vmatpush1.xpose.msra.mxu0 0.0
    %1784 = vmatprep.subr.mxu0 0.0
    %1785 = vmatpush1.xpose.msra.mxu0 0.0
    %1786 = vmatprep.subr.mxu0 0.0
    %1787 = vmatpush1.xpose.msra.mxu0 0.0
    %1788 = vmatprep.subr.mxu0 0.0
    %1789 = vmatpush1.xpose.msra.mxu0 0.0
    %1790 = vmatprep.subr.mxu0 0.0
    %1791 = vmatpush1.xpose.msra.mxu0 0.0
    %1792 = vmatprep.subr.mxu0 0.0
    %1793 = vmatpush1.xpose.msra.mxu0 0.0
    %1794 = vmatprep.subr.mxu0 0.0
    %1795 = vmatpush1.xpose.msra.mxu0 0.0
    %1796 = vmatprep.subr.mxu0 0.0
    %1797 = vmatpush1.xpose.msra.mxu0 0.0
    %1798 = vmatprep.subr.mxu0 0.0
    %1799 = vmatpush1.xpose.msra.mxu0 0.0
    %1800 = vmatprep.subr.mxu0 0.0
    %1801 = vmatpush1.xpose.msra.mxu0 0.0
    %1802 = vmatprep.subr.mxu0 0.0
    %1803 = vmatpush1.xpose.msra.mxu0 0.0
    %1804 = vmatprep.subr.mxu0 0.0
    %1805 = vmatpush1.xpose.msra.mxu0 0.0
    %1806 = vmatprep.mubr.f32.mxu0 0.0
    %1807 = vmatmul.mubr.f32.gmra.mrb[0].mxu0 %v1737
    %v1808 = vpop.f32.mrb[0].mxu0
    %v1809 = vadd.f32 %v62, %v1808
    %v1810 = vpop.f32.mrb[0].mxu0
    %1811 = vdwg.mxu0
    %v1812 = vadd.f32 %v1733, %v66
    %v1813 = vadd.f32 %v1809, %v70
    %v1814 = vadd.f32 %v1812, %v54
    %v1815 = vadd.f32 %v1813, %v55
    %v1816 = vsel %vm330, %v1814, -inf
    %1817 = vmax.xlane.f32.xlu0 %v1816
    %v1818 = vpop.xlane.xlu0 %1817
    %v1819 = vsel %vm330, %v1815, -inf
    %1820 = vmax.xlane.f32.xlu0 %v1819
    %v1821 = vpop.xlane.xlu0 %1820
    %v1822 = vsub.f32 %v1814, %v1818
    %v1823 = vsub.f32 %v1815, %v1821
    %v1824 = vmul.f32 %v1822, 1.442695
    %v1825 = vpow.pop %v1824
    %v1826 = vmul.f32 %v1823, 1.442695
    %v1827 = vpow.pop %v1826
    %v1828 = vsel %vm330, %v1825, 0.0
    %1829 = vadd.xlane.f32.xlu0 %v1828
    %v1830 = vpop.xlane.xlu0 %1829
    %v1831 = vsel %vm330, %v1827, 0.0
    %1832 = vadd.xlane.f32.xlu0 %v1831
    %v1833 = vpop.xlane.xlu0 %1832
    %v1834 = vrcp.pop %v1830
    %v1835 = vmul.f32 1.0, %v1834
    %v1836 = vrcp.pop %v1833
    %v1837 = vmul.f32 1.0, %v1836
    %v1838 = vmul.f32 %v1825, %v1835
    %v1839 = vmul.f32 %v1827, %v1837
    %v1841 = vsel %vm330, %v1838, 0
    %1843 = vmatprep.subr.mxu0 0.0
    %1844 = vmatpush1.msra.mxu0 %v1652
    %1845 = vmatprep.subr.mxu0 0.0
    %1846 = vmatpush1.msra.mxu0 0.0
    %1847 = vmatprep.subr.mxu0 0.0
    %1848 = vmatpush1.msra.mxu0 0.0
    %1849 = vmatprep.subr.mxu0 0.0
    %1850 = vmatpush1.msra.mxu0 0.0
    %1851 = vmatprep.subr.mxu0 0.0
    %1852 = vmatpush1.msra.mxu0 0.0
    %1853 = vmatprep.subr.mxu0 0.0
    %1854 = vmatpush1.msra.mxu0 0.0
    %1855 = vmatprep.subr.mxu0 0.0
    %1856 = vmatpush1.msra.mxu0 0.0
    %1857 = vmatprep.subr.mxu0 0.0
    %1858 = vmatpush1.msra.mxu0 0.0
    %1859 = vmatprep.subr.mxu0 0.0
    %1860 = vmatpush1.msra.mxu0 0.0
    %1861 = vmatprep.subr.mxu0 0.0
    %1862 = vmatpush1.msra.mxu0 0.0
    %1863 = vmatprep.subr.mxu0 0.0
    %1864 = vmatpush1.msra.mxu0 0.0
    %1865 = vmatprep.subr.mxu0 0.0
    %1866 = vmatpush1.msra.mxu0 0.0
    %1867 = vmatprep.subr.mxu0 0.0
    %1868 = vmatpush1.msra.mxu0 0.0
    %1869 = vmatprep.subr.mxu0 0.0
    %1870 = vmatpush1.msra.mxu0 0.0
    %1871 = vmatprep.subr.mxu0 0.0
    %1872 = vmatpush1.msra.mxu0 0.0
    %1873 = vmatprep.subr.mxu0 0.0
    %1874 = vmatpush1.msra.mxu0 0.0
    %1875 = vmatprep.subr.mxu0 0.0
    %1876 = vmatpush1.msra.mxu0 0.0
    %1877 = vmatprep.subr.mxu0 0.0
    %1878 = vmatpush1.msra.mxu0 0.0
    %1879 = vmatprep.subr.mxu0 0.0
    %1880 = vmatpush1.msra.mxu0 0.0
    %1881 = vmatprep.subr.mxu0 0.0
    %1882 = vmatpush1.msra.mxu0 0.0
    %1883 = vmatprep.subr.mxu0 0.0
    %1884 = vmatpush1.msra.mxu0 0.0
    %1885 = vmatprep.subr.mxu0 0.0
    %1886 = vmatpush1.msra.mxu0 0.0
    %1887 = vmatprep.subr.mxu0 0.0
    %1888 = vmatpush1.msra.mxu0 0.0
    %1889 = vmatprep.subr.mxu0 0.0
    %1890 = vmatpush1.msra.mxu0 0.0
    %1891 = vmatprep.subr.mxu0 0.0
    %1892 = vmatpush1.msra.mxu0 0.0
    %1893 = vmatprep.subr.mxu0 0.0
    %1894 = vmatpush1.msra.mxu0 0.0
    %1895 = vmatprep.subr.mxu0 0.0
    %1896 = vmatpush1.msra.mxu0 0.0
    %1897 = vmatprep.subr.mxu0 0.0
    %1898 = vmatpush1.msra.mxu0 0.0
    %1899 = vmatprep.subr.mxu0 0.0
    %1900 = vmatpush1.msra.mxu0 0.0
    %1901 = vmatprep.subr.mxu0 0.0
    %1902 = vmatpush1.msra.mxu0 0.0
    %1903 = vmatprep.subr.mxu0 0.0
    %1904 = vmatpush1.msra.mxu0 0.0
    %1905 = vmatprep.subr.mxu0 0.0
    %1906 = vmatpush1.msra.mxu0 0.0
    %1907 = vmatprep.mubr.f32.mxu0 0.0
    %1908 = vmatmul.mubr.f32.gmra.mrb[0].mxu0 %v1841
    %v1909 = vpop.f32.mrb[0].mxu0
    %v1910 = vadd.f32 0.0, %v1909
    %v1911 = vpop.f32.mrb[0].mxu0
    %1912 = vdwg.mxu0
    %v1914 = vsel %vm330, %v1839, 0
    %1916 = vmatprep.subr.mxu0 0.0
    %1917 = vmatpush1.msra.mxu0 %v1657
    %1918 = vmatprep.subr.mxu0 0.0
    %1919 = vmatpush1.msra.mxu0 0.0
    %1920 = vmatprep.subr.mxu0 0.0
    %1921 = vmatpush1.msra.mxu0 0.0
    %1922 = vmatprep.subr.mxu0 0.0
    %1923 = vmatpush1.msra.mxu0 0.0
    %1924 = vmatprep.subr.mxu0 0.0
    %1925 = vmatpush1.msra.mxu0 0.0
    %1926 = vmatprep.subr.mxu0 0.0
    %1927 = vmatpush1.msra.mxu0 0.0
    %1928 = vmatprep.subr.mxu0 0.0
    %1929 = vmatpush1.msra.mxu0 0.0
    %1930 = vmatprep.subr.mxu0 0.0
    %1931 = vmatpush1.msra.mxu0 0.0
    %1932 = vmatprep.subr.mxu0 0.0
    %1933 = vmatpush1.msra.mxu0 0.0
    %1934 = vmatprep.subr.mxu0 0.0
    %1935 = vmatpush1.msra.mxu0 0.0
    %1936 = vmatprep.subr.mxu0 0.0
    %1937 = vmatpush1.msra.mxu0 0.0
    %1938 = vmatprep.subr.mxu0 0.0
    %1939 = vmatpush1.msra.mxu0 0.0
    %1940 = vmatprep.subr.mxu0 0.0
    %1941 = vmatpush1.msra.mxu0 0.0
    %1942 = vmatprep.subr.mxu0 0.0
    %1943 = vmatpush1.msra.mxu0 0.0
    %1944 = vmatprep.subr.mxu0 0.0
    %1945 = vmatpush1.msra.mxu0 0.0
    %1946 = vmatprep.subr.mxu0 0.0
    %1947 = vmatpush1.msra.mxu0 0.0
    %1948 = vmatprep.subr.mxu0 0.0
    %1949 = vmatpush1.msra.mxu0 0.0
    %1950 = vmatprep.subr.mxu0 0.0
    %1951 = vmatpush1.msra.mxu0 0.0
    %1952 = vmatprep.subr.mxu0 0.0
    %1953 = vmatpush1.msra.mxu0 0.0
    %1954 = vmatprep.subr.mxu0 0.0
    %1955 = vmatpush1.msra.mxu0 0.0
    %1956 = vmatprep.subr.mxu0 0.0
    %1957 = vmatpush1.msra.mxu0 0.0
    %1958 = vmatprep.subr.mxu0 0.0
    %1959 = vmatpush1.msra.mxu0 0.0
    %1960 = vmatprep.subr.mxu0 0.0
    %1961 = vmatpush1.msra.mxu0 0.0
    %1962 = vmatprep.subr.mxu0 0.0
    %1963 = vmatpush1.msra.mxu0 0.0
    %1964 = vmatprep.subr.mxu0 0.0
    %1965 = vmatpush1.msra.mxu0 0.0
    %1966 = vmatprep.subr.mxu0 0.0
    %1967 = vmatpush1.msra.mxu0 0.0
    %1968 = vmatprep.subr.mxu0 0.0
    %1969 = vmatpush1.msra.mxu0 0.0
    %1970 = vmatprep.subr.mxu0 0.0
    %1971 = vmatpush1.msra.mxu0 0.0
    %1972 = vmatprep.subr.mxu0 0.0
    %1973 = vmatpush1.msra.mxu0 0.0
    %1974 = vmatprep.subr.mxu0 0.0
    %1975 = vmatpush1.msra.mxu0 0.0
    %1976 = vmatprep.subr.mxu0 0.0
    %1977 = vmatpush1.msra.mxu0 0.0
    %1978 = vmatprep.subr.mxu0 0.0
    %1979 = vmatpush1.msra.mxu0 0.0
    %1980 = vmatprep.mubr.f32.mxu0 0.0
    %1981 = vmatmul.mubr.f32.gmra.mrb[0].mxu0 %v1914
    %v1982 = vpop.f32.mrb[0].mxu0
    %v1983 = vadd.f32 0.0, %v1982
    %v1984 = vpop.f32.mrb[0].mxu0
    %1985 = vdwg.mxu0
    %s1986 = scalar_lea.vmem %s9, 16
    %v1987 = vld [vmem:[%s1986] sm:$0xff]
    %v1989 = vsel %vm330, %v1910, 0
    %v1992 = vsel %vm330, %v1983, 0
    %1994 = vmatprep.subr.mxu0 0.0
    %1995 = vmatpush1.msra.mxu0 %v1987
    %1996 = vmatprep.subr.mxu0 0.0
    %1997 = vmatpush1.msra.mxu0 0.0
    %1998 = vmatprep.subr.mxu0 0.0
    %1999 = vmatpush1.msra.mxu0 0.0
    %2000 = vmatprep.subr.mxu0 0.0
    %2001 = vmatpush1.msra.mxu0 0.0
    %2002 = vmatprep.subr.mxu0 0.0
    %2003 = vmatpush1.msra.mxu0 0.0
    %2004 = vmatprep.subr.mxu0 0.0
    %2005 = vmatpush1.msra.mxu0 0.0
    %2006 = vmatprep.subr.mxu0 0.0
    %2007 = vmatpush1.msra.mxu0 0.0
    %2008 = vmatprep.subr.mxu0 0.0
    %2009 = vmatpush1.msra.mxu0 0.0
    %2010 = vmatprep.subr.mxu0 0.0
    %2011 = vmatpush1.msra.mxu0 0.0
    %2012 = vmatprep.subr.mxu0 0.0
    %2013 = vmatpush1.msra.mxu0 0.0
    %2014 = vmatprep.subr.mxu0 0.0
    %2015 = vmatpush1.msra.mxu0 0.0
    %2016 = vmatprep.subr.mxu0 0.0
    %2017 = vmatpush1.msra.mxu0 0.0
    %2018 = vmatprep.subr.mxu0 0.0
    %2019 = vmatpush1.msra.mxu0 0.0
    %2020 = vmatprep.subr.mxu0 0.0
    %2021 = vmatpush1.msra.mxu0 0.0
    %2022 = vmatprep.subr.mxu0 0.0
    %2023 = vmatpush1.msra.mxu0 0.0
    %2024 = vmatprep.subr.mxu0 0.0
    %2025 = vmatpush1.msra.mxu0 0.0
    %2026 = vmatprep.subr.mxu0 0.0
    %2027 = vmatpush1.msra.mxu0 0.0
    %2028 = vmatprep.subr.mxu0 0.0
    %2029 = vmatpush1.msra.mxu0 0.0
    %2030 = vmatprep.subr.mxu0 0.0
    %2031 = vmatpush1.msra.mxu0 0.0
    %2032 = vmatprep.subr.mxu0 0.0
    %2033 = vmatpush1.msra.mxu0 0.0
    %2034 = vmatprep.subr.mxu0 0.0
    %2035 = vmatpush1.msra.mxu0 0.0
    %2036 = vmatprep.subr.mxu0 0.0
    %2037 = vmatpush1.msra.mxu0 0.0
    %2038 = vmatprep.subr.mxu0 0.0
    %2039 = vmatpush1.msra.mxu0 0.0
    %2040 = vmatprep.subr.mxu0 0.0
    %2041 = vmatpush1.msra.mxu0 0.0
    %2042 = vmatprep.subr.mxu0 0.0
    %2043 = vmatpush1.msra.mxu0 0.0
    %2044 = vmatprep.subr.mxu0 0.0
    %2045 = vmatpush1.msra.mxu0 0.0
    %2046 = vmatprep.subr.mxu0 0.0
    %2047 = vmatpush1.msra.mxu0 0.0
    %2048 = vmatprep.subr.mxu0 0.0
    %2049 = vmatpush1.msra.mxu0 0.0
    %2050 = vmatprep.subr.mxu0 0.0
    %2051 = vmatpush1.msra.mxu0 0.0
    %2052 = vmatprep.subr.mxu0 0.0
    %2053 = vmatpush1.msra.mxu0 0.0
    %2054 = vmatprep.subr.mxu0 0.0
    %2055 = vmatpush1.msra.mxu0 0.0
    %2056 = vmatprep.subr.mxu0 0.0
    %2057 = vmatpush1.msra.mxu0 0.0
    %2058 = vmatprep.mubr.f32.mxu0 0.0
    %2059 = vmatmul.mubr.f32.gmra.mrb[0].mxu0 %v1989
    %v2060 = vpop.f32.mrb[0].mxu0
    %v2061 = vadd.f32 0.0, %v2060
    %v2062 = vpop.f32.mrb[0].mxu0
    %2063 = vmatprep.mubr.f32.mxu0 0.0
    %2064 = vmatmul.mubr.f32.gmra.mrb[0].mxu0 %v1992
    %v2065 = vpop.f32.mrb[0].mxu0
    %v2066 = vadd.f32 0.0, %v2065
    %v2067 = vpop.f32.mrb[0].mxu0
    %2068 = vdwg.mxu0
    %v2069 = vadd.f32 %v1396, %v2061
    %v2070 = vadd.f32 %v1401, %v2066
    %s2071 = scalar_lea.vmem %s4, 96
    %v2072 = vld [vmem:[%s2071] sm:$0xff]
    %v2073 = vld [vmem:[%s2071 + $0x8] sm:$0xff]
    %v2074 = vld [vmem:[%s2071 + $0x10] sm:$0xff]
    %v2075 = vld [vmem:[%s2071 + $0x18] sm:$0xff]
    %s2076 = scalar_lea.vmem %s7, 3
    %v2077 = vld [vmem:[%s2076] sm:$0x1]
    %v2079 = vlaneseq
    %v2080 = vshrl.u32 %v2079, 7
    %v2081 = vsub.s32 0, %v2080
    %v2082 = vrot.slane %v2077, %v2081
    %2084 = vmatprep.subr.mxu0 0.0
    %2085 = vmatpush1.msra.mxu0 %v2072
    %2086 = vmatprep.subr.mxu0 0.0
    %2087 = vmatpush1.msra.mxu0 %v2073
    %2088 = vmatprep.subr.mxu0 0.0
    %2089 = vmatpush1.msra.mxu0 %v2074
    %2090 = vmatprep.subr.mxu0 0.0
    %2091 = vmatpush1.msra.mxu0 %v2075
    %2092 = vmatprep.subr.mxu0 0.0
    %2093 = vmatpush1.msra.mxu0 0.0
    %2094 = vmatprep.subr.mxu0 0.0
    %2095 = vmatpush1.msra.mxu0 0.0
    %2096 = vmatprep.subr.mxu0 0.0
    %2097 = vmatpush1.msra.mxu0 0.0
    %2098 = vmatprep.subr.mxu0 0.0
    %2099 = vmatpush1.msra.mxu0 0.0
    %2100 = vmatprep.subr.mxu0 0.0
    %2101 = vmatpush1.msra.mxu0 0.0
    %2102 = vmatprep.subr.mxu0 0.0
    %2103 = vmatpush1.msra.mxu0 0.0
    %2104 = vmatprep.subr.mxu0 0.0
    %2105 = vmatpush1.msra.mxu0 0.0
    %2106 = vmatprep.subr.mxu0 0.0
    %2107 = vmatpush1.msra.mxu0 0.0
    %2108 = vmatprep.subr.mxu0 0.0
    %2109 = vmatpush1.msra.mxu0 0.0
    %2110 = vmatprep.subr.mxu0 0.0
    %2111 = vmatpush1.msra.mxu0 0.0
    %2112 = vmatprep.subr.mxu0 0.0
    %2113 = vmatpush1.msra.mxu0 0.0
    %2114 = vmatprep.subr.mxu0 0.0
    %2115 = vmatpush1.msra.mxu0 0.0
    %2116 = vmatprep.subr.mxu0 0.0
    %2117 = vmatpush1.msra.mxu0 0.0
    %2118 = vmatprep.subr.mxu0 0.0
    %2119 = vmatpush1.msra.mxu0 0.0
    %2120 = vmatprep.subr.mxu0 0.0
    %2121 = vmatpush1.msra.mxu0 0.0
    %2122 = vmatprep.subr.mxu0 0.0
    %2123 = vmatpush1.msra.mxu0 0.0
    %2124 = vmatprep.subr.mxu0 0.0
    %2125 = vmatpush1.msra.mxu0 0.0
    %2126 = vmatprep.subr.mxu0 0.0
    %2127 = vmatpush1.msra.mxu0 0.0
    %2128 = vmatprep.subr.mxu0 0.0
    %2129 = vmatpush1.msra.mxu0 0.0
    %2130 = vmatprep.subr.mxu0 0.0
    %2131 = vmatpush1.msra.mxu0 0.0
    %2132 = vmatprep.subr.mxu0 0.0
    %2133 = vmatpush1.msra.mxu0 0.0
    %2134 = vmatprep.subr.mxu0 0.0
    %2135 = vmatpush1.msra.mxu0 0.0
    %2136 = vmatprep.subr.mxu0 0.0
    %2137 = vmatpush1.msra.mxu0 0.0
    %2138 = vmatprep.subr.mxu0 0.0
    %2139 = vmatpush1.msra.mxu0 0.0
    %2140 = vmatprep.subr.mxu0 0.0
    %2141 = vmatpush1.msra.mxu0 0.0
    %2142 = vmatprep.subr.mxu0 0.0
    %2143 = vmatpush1.msra.mxu0 0.0
    %2144 = vmatprep.subr.mxu0 0.0
    %2145 = vmatpush1.msra.mxu0 0.0
    %2146 = vmatprep.subr.mxu0 0.0
    %2147 = vmatpush1.msra.mxu0 0.0
    %2148 = vmatprep.mubr.f32.mxu0 0.0
    %2149 = vmatmul.mubr.f32.gmra.mrb[0].mxu0 %v85
    %v2150 = vpop.f32.mrb[0].mxu0
    %v2151 = vadd.f32 %v2082, %v2150
    %v2152 = vpop.f32.mrb[0].mxu0
    %2153 = vmatprep.mubr.f32.mxu0 0.0
    %2154 = vmatmul.mubr.f32.gmra.mrb[0].mxu0 %v88
    %v2155 = vpop.f32.mrb[0].mxu0
    %v2156 = vadd.f32 %v2082, %v2155
    %v2157 = vpop.f32.mrb[0].mxu0
    %2158 = vdwg.mxu0
    %s2159 = scalar_lea.vmem %s5, 96
    %v2160 = vld [vmem:[%s2159] sm:$0xff]
    %v2161 = vld [vmem:[%s2159 + $0x8] sm:$0xff]
    %v2162 = vld [vmem:[%s2159 + $0x10] sm:$0xff]
    %v2163 = vld [vmem:[%s2159 + $0x18] sm:$0xff]
    %2164 = vmatprep.subr.mxu0 0.0
    %2165 = vmatpush1.msra.mxu0 %v2160
    %2166 = vmatprep.subr.mxu0 0.0
    %2167 = vmatpush1.msra.mxu0 %v2161
    %2168 = vmatprep.subr.mxu0 0.0
    %2169 = vmatpush1.msra.mxu0 %v2162
    %2170 = vmatprep.subr.mxu0 0.0
    %2171 = vmatpush1.msra.mxu0 %v2163
    %2172 = vmatprep.subr.mxu0 0.0
    %2173 = vmatpush1.msra.mxu0 0.0
    %2174 = vmatprep.subr.mxu0 0.0
    %2175 = vmatpush1.msra.mxu0 0.0
    %2176 = vmatprep.subr.mxu0 0.0
    %2177 = vmatpush1.msra.mxu0 0.0
    %2178 = vmatprep.subr.mxu0 0.0
    %2179 = vmatpush1.msra.mxu0 0.0
    %2180 = vmatprep.subr.mxu0 0.0
    %2181 = vmatpush1.msra.mxu0 0.0
    %2182 = vmatprep.subr.mxu0 0.0
    %2183 = vmatpush1.msra.mxu0 0.0
    %2184 = vmatprep.subr.mxu0 0.0
    %2185 = vmatpush1.msra.mxu0 0.0
    %2186 = vmatprep.subr.mxu0 0.0
    %2187 = vmatpush1.msra.mxu0 0.0
    %2188 = vmatprep.subr.mxu0 0.0
    %2189 = vmatpush1.msra.mxu0 0.0
    %2190 = vmatprep.subr.mxu0 0.0
    %2191 = vmatpush1.msra.mxu0 0.0
    %2192 = vmatprep.subr.mxu0 0.0
    %2193 = vmatpush1.msra.mxu0 0.0
    %2194 = vmatprep.subr.mxu0 0.0
    %2195 = vmatpush1.msra.mxu0 0.0
    %2196 = vmatprep.subr.mxu0 0.0
    %2197 = vmatpush1.msra.mxu0 0.0
    %2198 = vmatprep.subr.mxu0 0.0
    %2199 = vmatpush1.msra.mxu0 0.0
    %2200 = vmatprep.subr.mxu0 0.0
    %2201 = vmatpush1.msra.mxu0 0.0
    %2202 = vmatprep.subr.mxu0 0.0
    %2203 = vmatpush1.msra.mxu0 0.0
    %2204 = vmatprep.subr.mxu0 0.0
    %2205 = vmatpush1.msra.mxu0 0.0
    %2206 = vmatprep.subr.mxu0 0.0
    %2207 = vmatpush1.msra.mxu0 0.0
    %2208 = vmatprep.subr.mxu0 0.0
    %2209 = vmatpush1.msra.mxu0 0.0
    %2210 = vmatprep.subr.mxu0 0.0
    %2211 = vmatpush1.msra.mxu0 0.0
    %2212 = vmatprep.subr.mxu0 0.0
    %2213 = vmatpush1.msra.mxu0 0.0
    %2214 = vmatprep.subr.mxu0 0.0
    %2215 = vmatpush1.msra.mxu0 0.0
    %2216 = vmatprep.subr.mxu0 0.0
    %2217 = vmatpush1.msra.mxu0 0.0
    %2218 = vmatprep.subr.mxu0 0.0
    %2219 = vmatpush1.msra.mxu0 0.0
    %2220 = vmatprep.subr.mxu0 0.0
    %2221 = vmatpush1.msra.mxu0 0.0
    %2222 = vmatprep.subr.mxu0 0.0
    %2223 = vmatpush1.msra.mxu0 0.0
    %2224 = vmatprep.subr.mxu0 0.0
    %2225 = vmatpush1.msra.mxu0 0.0
    %2226 = vmatprep.subr.mxu0 0.0
    %2227 = vmatpush1.msra.mxu0 0.0
    %2228 = vmatprep.mubr.f32.mxu0 0.0
    %2229 = vmatmul.mubr.f32.gmra.mrb[0].mxu0 %v85
    %v2230 = vpop.f32.mrb[0].mxu0
    %v2231 = vadd.f32 0.0, %v2230
    %v2232 = vpop.f32.mrb[0].mxu0
    %2233 = vmatprep.mubr.f32.mxu0 0.0
    %2234 = vmatmul.mubr.f32.gmra.mrb[0].mxu0 %v88
    %v2235 = vpop.f32.mrb[0].mxu0
    %v2236 = vadd.f32 0.0, %v2235
    %v2237 = vpop.f32.mrb[0].mxu0
    %2238 = vdwg.mxu0
    %s2239 = scalar_lea.vmem %s6, 96
    %v2240 = vld [vmem:[%s2239] sm:$0xff]
    %v2241 = vld [vmem:[%s2239 + $0x8] sm:$0xff]
    %v2242 = vld [vmem:[%s2239 + $0x10] sm:$0xff]
    %v2243 = vld [vmem:[%s2239 + $0x18] sm:$0xff]
    %s2244 = scalar_lea.vmem %s8, 3
    %v2245 = vld [vmem:[%s2244] sm:$0x1]
    %v2247 = vlaneseq
    %v2248 = vshrl.u32 %v2247, 7
    %v2249 = vsub.s32 0, %v2248
    %v2250 = vrot.slane %v2245, %v2249
    %2252 = vmatprep.subr.mxu0 0.0
    %2253 = vmatpush1.msra.mxu0 %v2240
    %2254 = vmatprep.subr.mxu0 0.0
    %2255 = vmatpush1.msra.mxu0 %v2241
    %2256 = vmatprep.subr.mxu0 0.0
    %2257 = vmatpush1.msra.mxu0 %v2242
    %2258 = vmatprep.subr.mxu0 0.0
    %2259 = vmatpush1.msra.mxu0 %v2243
    %2260 = vmatprep.subr.mxu0 0.0
    %2261 = vmatpush1.msra.mxu0 0.0
    %2262 = vmatprep.subr.mxu0 0.0
    %2263 = vmatpush1.msra.mxu0 0.0
    %2264 = vmatprep.subr.mxu0 0.0
    %2265 = vmatpush1.msra.mxu0 0.0
    %2266 = vmatprep.subr.mxu0 0.0
    %2267 = vmatpush1.msra.mxu0 0.0
    %2268 = vmatprep.subr.mxu0 0.0
    %2269 = vmatpush1.msra.mxu0 0.0
    %2270 = vmatprep.subr.mxu0 0.0
    %2271 = vmatpush1.msra.mxu0 0.0
    %2272 = vmatprep.subr.mxu0 0.0
    %2273 = vmatpush1.msra.mxu0 0.0
    %2274 = vmatprep.subr.mxu0 0.0
    %2275 = vmatpush1.msra.mxu0 0.0
    %2276 = vmatprep.subr.mxu0 0.0
    %2277 = vmatpush1.msra.mxu0 0.0
    %2278 = vmatprep.subr.mxu0 0.0
    %2279 = vmatpush1.msra.mxu0 0.0
    %2280 = vmatprep.subr.mxu0 0.0
    %2281 = vmatpush1.msra.mxu0 0.0
    %2282 = vmatprep.subr.mxu0 0.0
    %2283 = vmatpush1.msra.mxu0 0.0
    %2284 = vmatprep.subr.mxu0 0.0
    %2285 = vmatpush1.msra.mxu0 0.0
    %2286 = vmatprep.subr.mxu0 0.0
    %2287 = vmatpush1.msra.mxu0 0.0
    %2288 = vmatprep.subr.mxu0 0.0
    %2289 = vmatpush1.msra.mxu0 0.0
    %2290 = vmatprep.subr.mxu0 0.0
    %2291 = vmatpush1.msra.mxu0 0.0
    %2292 = vmatprep.subr.mxu0 0.0
    %2293 = vmatpush1.msra.mxu0 0.0
    %2294 = vmatprep.subr.mxu0 0.0
    %2295 = vmatpush1.msra.mxu0 0.0
    %2296 = vmatprep.subr.mxu0 0.0
    %2297 = vmatpush1.msra.mxu0 0.0
    %2298 = vmatprep.subr.mxu0 0.0
    %2299 = vmatpush1.msra.mxu0 0.0
    %2300 = vmatprep.subr.mxu0 0.0
    %2301 = vmatpush1.msra.mxu0 0.0
    %2302 = vmatprep.subr.mxu0 0.0
    %2303 = vmatpush1.msra.mxu0 0.0
    %2304 = vmatprep.subr.mxu0 0.0
    %2305 = vmatpush1.msra.mxu0 0.0
    %2306 = vmatprep.subr.mxu0 0.0
    %2307 = vmatpush1.msra.mxu0 0.0
    %2308 = vmatprep.subr.mxu0 0.0
    %2309 = vmatpush1.msra.mxu0 0.0
    %2310 = vmatprep.subr.mxu0 0.0
    %2311 = vmatpush1.msra.mxu0 0.0
    %2312 = vmatprep.subr.mxu0 0.0
    %2313 = vmatpush1.msra.mxu0 0.0
    %2314 = vmatprep.subr.mxu0 0.0
    %2315 = vmatpush1.msra.mxu0 0.0
    %2316 = vmatprep.mubr.f32.mxu0 0.0
    %2317 = vmatmul.mubr.f32.gmra.mrb[0].mxu0 %v85
    %v2318 = vpop.f32.mrb[0].mxu0
    %v2319 = vadd.f32 %v2250, %v2318
    %v2320 = vpop.f32.mrb[0].mxu0
    %2321 = vmatprep.mubr.f32.mxu0 0.0
    %2322 = vmatmul.mubr.f32.gmra.mrb[0].mxu0 %v88
    %v2323 = vpop.f32.mrb[0].mxu0
    %v2324 = vadd.f32 %v2250, %v2323
    %v2325 = vpop.f32.mrb[0].mxu0
    %2326 = vdwg.mxu0
    %v2328 = vsel %vm330, %v2151, 0
    %v2331 = vsel %vm330, %v2231, 0
    %2333 = vmatprep.subr.mxu0 0.0
    %2334 = vmatpush1.xpose.msra.mxu0 %v2331
    %2335 = vmatprep.subr.mxu0 0.0
    %2336 = vmatpush1.xpose.msra.mxu0 0.0
    %2337 = vmatprep.subr.mxu0 0.0
    %2338 = vmatpush1.xpose.msra.mxu0 0.0
    %2339 = vmatprep.subr.mxu0 0.0
    %2340 = vmatpush1.xpose.msra.mxu0 0.0
    %2341 = vmatprep.subr.mxu0 0.0
    %2342 = vmatpush1.xpose.msra.mxu0 0.0
    %2343 = vmatprep.subr.mxu0 0.0
    %2344 = vmatpush1.xpose.msra.mxu0 0.0
    %2345 = vmatprep.subr.mxu0 0.0
    %2346 = vmatpush1.xpose.msra.mxu0 0.0
    %2347 = vmatprep.subr.mxu0 0.0
    %2348 = vmatpush1.xpose.msra.mxu0 0.0
    %2349 = vmatprep.subr.mxu0 0.0
    %2350 = vmatpush1.xpose.msra.mxu0 0.0
    %2351 = vmatprep.subr.mxu0 0.0
    %2352 = vmatpush1.xpose.msra.mxu0 0.0
    %2353 = vmatprep.subr.mxu0 0.0
    %2354 = vmatpush1.xpose.msra.mxu0 0.0
    %2355 = vmatprep.subr.mxu0 0.0
    %2356 = vmatpush1.xpose.msra.mxu0 0.0
    %2357 = vmatprep.subr.mxu0 0.0
    %2358 = vmatpush1.xpose.msra.mxu0 0.0
    %2359 = vmatprep.subr.mxu0 0.0
    %2360 = vmatpush1.xpose.msra.mxu0 0.0
    %2361 = vmatprep.subr.mxu0 0.0
    %2362 = vmatpush1.xpose.msra.mxu0 0.0
    %2363 = vmatprep.subr.mxu0 0.0
    %2364 = vmatpush1.xpose.msra.mxu0 0.0
    %2365 = vmatprep.subr.mxu0 0.0
    %2366 = vmatpush1.xpose.msra.mxu0 0.0
    %2367 = vmatprep.subr.mxu0 0.0
    %2368 = vmatpush1.xpose.msra.mxu0 0.0
    %2369 = vmatprep.subr.mxu0 0.0
    %2370 = vmatpush1.xpose.msra.mxu0 0.0
    %2371 = vmatprep.subr.mxu0 0.0
    %2372 = vmatpush1.xpose.msra.mxu0 0.0
    %2373 = vmatprep.subr.mxu0 0.0
    %2374 = vmatpush1.xpose.msra.mxu0 0.0
    %2375 = vmatprep.subr.mxu0 0.0
    %2376 = vmatpush1.xpose.msra.mxu0 0.0
    %2377 = vmatprep.subr.mxu0 0.0
    %2378 = vmatpush1.xpose.msra.mxu0 0.0
    %2379 = vmatprep.subr.mxu0 0.0
    %2380 = vmatpush1.xpose.msra.mxu0 0.0
    %2381 = vmatprep.subr.mxu0 0.0
    %2382 = vmatpush1.xpose.msra.mxu0 0.0
    %2383 = vmatprep.subr.mxu0 0.0
    %2384 = vmatpush1.xpose.msra.mxu0 0.0
    %2385 = vmatprep.subr.mxu0 0.0
    %2386 = vmatpush1.xpose.msra.mxu0 0.0
    %2387 = vmatprep.subr.mxu0 0.0
    %2388 = vmatpush1.xpose.msra.mxu0 0.0
    %2389 = vmatprep.subr.mxu0 0.0
    %2390 = vmatpush1.xpose.msra.mxu0 0.0
    %2391 = vmatprep.subr.mxu0 0.0
    %2392 = vmatpush1.xpose.msra.mxu0 0.0
    %2393 = vmatprep.subr.mxu0 0.0
    %2394 = vmatpush1.xpose.msra.mxu0 0.0
    %2395 = vmatprep.subr.mxu0 0.0
    %2396 = vmatpush1.xpose.msra.mxu0 0.0
    %2397 = vmatprep.mubr.f32.mxu0 0.0
    %2398 = vmatmul.mubr.f32.gmra.mrb[0].mxu0 %v2328
    %v2399 = vpop.f32.mrb[0].mxu0
    %v2400 = vadd.f32 %v59, %v2399
    %v2401 = vpop.f32.mrb[0].mxu0
    %2402 = vdwg.mxu0
    %v2404 = vsel %vm330, %v2156, 0
    %v2407 = vsel %vm330, %v2236, 0
    %2409 = vmatprep.subr.mxu0 0.0
    %2410 = vmatpush1.xpose.msra.mxu0 %v2407
    %2411 = vmatprep.subr.mxu0 0.0
    %2412 = vmatpush1.xpose.msra.mxu0 0.0
    %2413 = vmatprep.subr.mxu0 0.0
    %2414 = vmatpush1.xpose.msra.mxu0 0.0
    %2415 = vmatprep.subr.mxu0 0.0
    %2416 = vmatpush1.xpose.msra.mxu0 0.0
    %2417 = vmatprep.subr.mxu0 0.0
    %2418 = vmatpush1.xpose.msra.mxu0 0.0
    %2419 = vmatprep.subr.mxu0 0.0
    %2420 = vmatpush1.xpose.msra.mxu0 0.0
    %2421 = vmatprep.subr.mxu0 0.0
    %2422 = vmatpush1.xpose.msra.mxu0 0.0
    %2423 = vmatprep.subr.mxu0 0.0
    %2424 = vmatpush1.xpose.msra.mxu0 0.0
    %2425 = vmatprep.subr.mxu0 0.0
    %2426 = vmatpush1.xpose.msra.mxu0 0.0
    %2427 = vmatprep.subr.mxu0 0.0
    %2428 = vmatpush1.xpose.msra.mxu0 0.0
    %2429 = vmatprep.subr.mxu0 0.0
    %2430 = vmatpush1.xpose.msra.mxu0 0.0
    %2431 = vmatprep.subr.mxu0 0.0
    %2432 = vmatpush1.xpose.msra.mxu0 0.0
    %2433 = vmatprep.subr.mxu0 0.0
    %2434 = vmatpush1.xpose.msra.mxu0 0.0
    %2435 = vmatprep.subr.mxu0 0.0
    %2436 = vmatpush1.xpose.msra.mxu0 0.0
    %2437 = vmatprep.subr.mxu0 0.0
    %2438 = vmatpush1.xpose.msra.mxu0 0.0
    %2439 = vmatprep.subr.mxu0 0.0
    %2440 = vmatpush1.xpose.msra.mxu0 0.0
    %2441 = vmatprep.subr.mxu0 0.0
    %2442 = vmatpush1.xpose.msra.mxu0 0.0
    %2443 = vmatprep.subr.mxu0 0.0
    %2444 = vmatpush1.xpose.msra.mxu0 0.0
    %2445 = vmatprep.subr.mxu0 0.0
    %2446 = vmatpush1.xpose.msra.mxu0 0.0
    %2447 = vmatprep.subr.mxu0 0.0
    %2448 = vmatpush1.xpose.msra.mxu0 0.0
    %2449 = vmatprep.subr.mxu0 0.0
    %2450 = vmatpush1.xpose.msra.mxu0 0.0
    %2451 = vmatprep.subr.mxu0 0.0
    %2452 = vmatpush1.xpose.msra.mxu0 0.0
    %2453 = vmatprep.subr.mxu0 0.0
    %2454 = vmatpush1.xpose.msra.mxu0 0.0
    %2455 = vmatprep.subr.mxu0 0.0
    %2456 = vmatpush1.xpose.msra.mxu0 0.0
    %2457 = vmatprep.subr.mxu0 0.0
    %2458 = vmatpush1.xpose.msra.mxu0 0.0
    %2459 = vmatprep.subr.mxu0 0.0
    %2460 = vmatpush1.xpose.msra.mxu0 0.0
    %2461 = vmatprep.subr.mxu0 0.0
    %2462 = vmatpush1.xpose.msra.mxu0 0.0
    %2463 = vmatprep.subr.mxu0 0.0
    %2464 = vmatpush1.xpose.msra.mxu0 0.0
    %2465 = vmatprep.subr.mxu0 0.0
    %2466 = vmatpush1.xpose.msra.mxu0 0.0
    %2467 = vmatprep.subr.mxu0 0.0
    %2468 = vmatpush1.xpose.msra.mxu0 0.0
    %2469 = vmatprep.subr.mxu0 0.0
    %2470 = vmatpush1.xpose.msra.mxu0 0.0
    %2471 = vmatprep.subr.mxu0 0.0
    %2472 = vmatpush1.xpose.msra.mxu0 0.0
    %2473 = vmatprep.mubr.f32.mxu0 0.0
    %2474 = vmatmul.mubr.f32.gmra.mrb[0].mxu0 %v2404
    %v2475 = vpop.f32.mrb[0].mxu0
    %v2476 = vadd.f32 %v63, %v2475
    %v2477 = vpop.f32.mrb[0].mxu0
    %2478 = vdwg.mxu0
    %v2479 = vadd.f32 %v2400, %v67
    %v2480 = vadd.f32 %v2476, %v71
    %v2481 = vadd.f32 %v2479, %v54
    %v2482 = vadd.f32 %v2480, %v55
    %v2483 = vsel %vm330, %v2481, -inf
    %2484 = vmax.xlane.f32.xlu0 %v2483
    %v2485 = vpop.xlane.xlu0 %2484
    %v2486 = vsel %vm330, %v2482, -inf
    %2487 = vmax.xlane.f32.xlu0 %v2486
    %v2488 = vpop.xlane.xlu0 %2487
    %v2489 = vsub.f32 %v2481, %v2485
    %v2490 = vsub.f32 %v2482, %v2488
    %v2491 = vmul.f32 %v2489, 1.442695
    %v2492 = vpow.pop %v2491
    %v2493 = vmul.f32 %v2490, 1.442695
    %v2494 = vpow.pop %v2493
    %v2495 = vsel %vm330, %v2492, 0.0
    %2496 = vadd.xlane.f32.xlu0 %v2495
    %v2497 = vpop.xlane.xlu0 %2496
    %v2498 = vsel %vm330, %v2494, 0.0
    %2499 = vadd.xlane.f32.xlu0 %v2498
    %v2500 = vpop.xlane.xlu0 %2499
    %v2501 = vrcp.pop %v2497
    %v2502 = vmul.f32 1.0, %v2501
    %v2503 = vrcp.pop %v2500
    %v2504 = vmul.f32 1.0, %v2503
    %v2505 = vmul.f32 %v2492, %v2502
    %v2506 = vmul.f32 %v2494, %v2504
    %v2508 = vsel %vm330, %v2505, 0
    %2510 = vmatprep.subr.mxu0 0.0
    %2511 = vmatpush1.msra.mxu0 %v2319
    %2512 = vmatprep.subr.mxu0 0.0
    %2513 = vmatpush1.msra.mxu0 0.0
    %2514 = vmatprep.subr.mxu0 0.0
    %2515 = vmatpush1.msra.mxu0 0.0
    %2516 = vmatprep.subr.mxu0 0.0
    %2517 = vmatpush1.msra.mxu0 0.0
    %2518 = vmatprep.subr.mxu0 0.0
    %2519 = vmatpush1.msra.mxu0 0.0
    %2520 = vmatprep.subr.mxu0 0.0
    %2521 = vmatpush1.msra.mxu0 0.0
    %2522 = vmatprep.subr.mxu0 0.0
    %2523 = vmatpush1.msra.mxu0 0.0
    %2524 = vmatprep.subr.mxu0 0.0
    %2525 = vmatpush1.msra.mxu0 0.0
    %2526 = vmatprep.subr.mxu0 0.0
    %2527 = vmatpush1.msra.mxu0 0.0
    %2528 = vmatprep.subr.mxu0 0.0
    %2529 = vmatpush1.msra.mxu0 0.0
    %2530 = vmatprep.subr.mxu0 0.0
    %2531 = vmatpush1.msra.mxu0 0.0
    %2532 = vmatprep.subr.mxu0 0.0
    %2533 = vmatpush1.msra.mxu0 0.0
    %2534 = vmatprep.subr.mxu0 0.0
    %2535 = vmatpush1.msra.mxu0 0.0
    %2536 = vmatprep.subr.mxu0 0.0
    %2537 = vmatpush1.msra.mxu0 0.0
    %2538 = vmatprep.subr.mxu0 0.0
    %2539 = vmatpush1.msra.mxu0 0.0
    %2540 = vmatprep.subr.mxu0 0.0
    %2541 = vmatpush1.msra.mxu0 0.0
    %2542 = vmatprep.subr.mxu0 0.0
    %2543 = vmatpush1.msra.mxu0 0.0
    %2544 = vmatprep.subr.mxu0 0.0
    %2545 = vmatpush1.msra.mxu0 0.0
    %2546 = vmatprep.subr.mxu0 0.0
    %2547 = vmatpush1.msra.mxu0 0.0
    %2548 = vmatprep.subr.mxu0 0.0
    %2549 = vmatpush1.msra.mxu0 0.0
    %2550 = vmatprep.subr.mxu0 0.0
    %2551 = vmatpush1.msra.mxu0 0.0
    %2552 = vmatprep.subr.mxu0 0.0
    %2553 = vmatpush1.msra.mxu0 0.0
    %2554 = vmatprep.subr.mxu0 0.0
    %2555 = vmatpush1.msra.mxu0 0.0
    %2556 = vmatprep.subr.mxu0 0.0
    %2557 = vmatpush1.msra.mxu0 0.0
    %2558 = vmatprep.subr.mxu0 0.0
    %2559 = vmatpush1.msra.mxu0 0.0
    %2560 = vmatprep.subr.mxu0 0.0
    %2561 = vmatpush1.msra.mxu0 0.0
    %2562 = vmatprep.subr.mxu0 0.0
    %2563 = vmatpush1.msra.mxu0 0.0
    %2564 = vmatprep.subr.mxu0 0.0
    %2565 = vmatpush1.msra.mxu0 0.0
    %2566 = vmatprep.subr.mxu0 0.0
    %2567 = vmatpush1.msra.mxu0 0.0
    %2568 = vmatprep.subr.mxu0 0.0
    %2569 = vmatpush1.msra.mxu0 0.0
    %2570 = vmatprep.subr.mxu0 0.0
    %2571 = vmatpush1.msra.mxu0 0.0
    %2572 = vmatprep.subr.mxu0 0.0
    %2573 = vmatpush1.msra.mxu0 0.0
    %2574 = vmatprep.mubr.f32.mxu0 0.0
    %2575 = vmatmul.mubr.f32.gmra.mrb[0].mxu0 %v2508
    %v2576 = vpop.f32.mrb[0].mxu0
    %v2577 = vadd.f32 0.0, %v2576
    %v2578 = vpop.f32.mrb[0].mxu0
    %2579 = vdwg.mxu0
    %v2581 = vsel %vm330, %v2506, 0
    %2583 = vmatprep.subr.mxu0 0.0
    %2584 = vmatpush1.msra.mxu0 %v2324
    %2585 = vmatprep.subr.mxu0 0.0
    %2586 = vmatpush1.msra.mxu0 0.0
    %2587 = vmatprep.subr.mxu0 0.0
    %2588 = vmatpush1.msra.mxu0 0.0
    %2589 = vmatprep.subr.mxu0 0.0
    %2590 = vmatpush1.msra.mxu0 0.0
    %2591 = vmatprep.subr.mxu0 0.0
    %2592 = vmatpush1.msra.mxu0 0.0
    %2593 = vmatprep.subr.mxu0 0.0
    %2594 = vmatpush1.msra.mxu0 0.0
    %2595 = vmatprep.subr.mxu0 0.0
    %2596 = vmatpush1.msra.mxu0 0.0
    %2597 = vmatprep.subr.mxu0 0.0
    %2598 = vmatpush1.msra.mxu0 0.0
    %2599 = vmatprep.subr.mxu0 0.0
    %2600 = vmatpush1.msra.mxu0 0.0
    %2601 = vmatprep.subr.mxu0 0.0
    %2602 = vmatpush1.msra.mxu0 0.0
    %2603 = vmatprep.subr.mxu0 0.0
    %2604 = vmatpush1.msra.mxu0 0.0
    %2605 = vmatprep.subr.mxu0 0.0
    %2606 = vmatpush1.msra.mxu0 0.0
    %2607 = vmatprep.subr.mxu0 0.0
    %2608 = vmatpush1.msra.mxu0 0.0
    %2609 = vmatprep.subr.mxu0 0.0
    %2610 = vmatpush1.msra.mxu0 0.0
    %2611 = vmatprep.subr.mxu0 0.0
    %2612 = vmatpush1.msra.mxu0 0.0
    %2613 = vmatprep.subr.mxu0 0.0
    %2614 = vmatpush1.msra.mxu0 0.0
    %2615 = vmatprep.subr.mxu0 0.0
    %2616 = vmatpush1.msra.mxu0 0.0
    %2617 = vmatprep.subr.mxu0 0.0
    %2618 = vmatpush1.msra.mxu0 0.0
    %2619 = vmatprep.subr.mxu0 0.0
    %2620 = vmatpush1.msra.mxu0 0.0
    %2621 = vmatprep.subr.mxu0 0.0
    %2622 = vmatpush1.msra.mxu0 0.0
    %2623 = vmatprep.subr.mxu0 0.0
    %2624 = vmatpush1.msra.mxu0 0.0
    %2625 = vmatprep.subr.mxu0 0.0
    %2626 = vmatpush1.msra.mxu0 0.0
    %2627 = vmatprep.subr.mxu0 0.0
    %2628 = vmatpush1.msra.mxu0 0.0
    %2629 = vmatprep.subr.mxu0 0.0
    %2630 = vmatpush1.msra.mxu0 0.0
    %2631 = vmatprep.subr.mxu0 0.0
    %2632 = vmatpush1.msra.mxu0 0.0
    %2633 = vmatprep.subr.mxu0 0.0
    %2634 = vmatpush1.msra.mxu0 0.0
    %2635 = vmatprep.subr.mxu0 0.0
    %2636 = vmatpush1.msra.mxu0 0.0
    %2637 = vmatprep.subr.mxu0 0.0
    %2638 = vmatpush1.msra.mxu0 0.0
    %2639 = vmatprep.subr.mxu0 0.0
    %2640 = vmatpush1.msra.mxu0 0.0
    %2641 = vmatprep.subr.mxu0 0.0
    %2642 = vmatpush1.msra.mxu0 0.0
    %2643 = vmatprep.subr.mxu0 0.0
    %2644 = vmatpush1.msra.mxu0 0.0
    %2645 = vmatprep.subr.mxu0 0.0
    %2646 = vmatpush1.msra.mxu0 0.0
    %2647 = vmatprep.mubr.f32.mxu0 0.0
    %2648 = vmatmul.mubr.f32.gmra.mrb[0].mxu0 %v2581
    %v2649 = vpop.f32.mrb[0].mxu0
    %v2650 = vadd.f32 0.0, %v2649
    %v2651 = vpop.f32.mrb[0].mxu0
    %2652 = vdwg.mxu0
    %s2653 = scalar_lea.vmem %s9, 24
    %v2654 = vld [vmem:[%s2653] sm:$0xff]
    %v2656 = vsel %vm330, %v2577, 0
    %v2659 = vsel %vm330, %v2650, 0
    %2661 = vmatprep.subr.mxu0 0.0
    %2662 = vmatpush1.msra.mxu0 %v2654
    %2663 = vmatprep.subr.mxu0 0.0
    %2664 = vmatpush1.msra.mxu0 0.0
    %2665 = vmatprep.subr.mxu0 0.0
    %2666 = vmatpush1.msra.mxu0 0.0
    %2667 = vmatprep.subr.mxu0 0.0
    %2668 = vmatpush1.msra.mxu0 0.0
    %2669 = vmatprep.subr.mxu0 0.0
    %2670 = vmatpush1.msra.mxu0 0.0
    %2671 = vmatprep.subr.mxu0 0.0
    %2672 = vmatpush1.msra.mxu0 0.0
    %2673 = vmatprep.subr.mxu0 0.0
    %2674 = vmatpush1.msra.mxu0 0.0
    %2675 = vmatprep.subr.mxu0 0.0
    %2676 = vmatpush1.msra.mxu0 0.0
    %2677 = vmatprep.subr.mxu0 0.0
    %2678 = vmatpush1.msra.mxu0 0.0
    %2679 = vmatprep.subr.mxu0 0.0
    %2680 = vmatpush1.msra.mxu0 0.0
    %2681 = vmatprep.subr.mxu0 0.0
    %2682 = vmatpush1.msra.mxu0 0.0
    %2683 = vmatprep.subr.mxu0 0.0
    %2684 = vmatpush1.msra.mxu0 0.0
    %2685 = vmatprep.subr.mxu0 0.0
    %2686 = vmatpush1.msra.mxu0 0.0
    %2687 = vmatprep.subr.mxu0 0.0
    %2688 = vmatpush1.msra.mxu0 0.0
    %2689 = vmatprep.subr.mxu0 0.0
    %2690 = vmatpush1.msra.mxu0 0.0
    %2691 = vmatprep.subr.mxu0 0.0
    %2692 = vmatpush1.msra.mxu0 0.0
    %2693 = vmatprep.subr.mxu0 0.0
    %2694 = vmatpush1.msra.mxu0 0.0
    %2695 = vmatprep.subr.mxu0 0.0
    %2696 = vmatpush1.msra.mxu0 0.0
    %2697 = vmatprep.subr.mxu0 0.0
    %2698 = vmatpush1.msra.mxu0 0.0
    %2699 = vmatprep.subr.mxu0 0.0
    %2700 = vmatpush1.msra.mxu0 0.0
    %2701 = vmatprep.subr.mxu0 0.0
    %2702 = vmatpush1.msra.mxu0 0.0
    %2703 = vmatprep.subr.mxu0 0.0
    %2704 = vmatpush1.msra.mxu0 0.0
    %2705 = vmatprep.subr.mxu0 0.0
    %2706 = vmatpush1.msra.mxu0 0.0
    %2707 = vmatprep.subr.mxu0 0.0
    %2708 = vmatpush1.msra.mxu0 0.0
    %2709 = vmatprep.subr.mxu0 0.0
    %2710 = vmatpush1.msra.mxu0 0.0
    %2711 = vmatprep.subr.mxu0 0.0
    %2712 = vmatpush1.msra.mxu0 0.0
    %2713 = vmatprep.subr.mxu0 0.0
    %2714 = vmatpush1.msra.mxu0 0.0
    %2715 = vmatprep.subr.mxu0 0.0
    %2716 = vmatpush1.msra.mxu0 0.0
    %2717 = vmatprep.subr.mxu0 0.0
    %2718 = vmatpush1.msra.mxu0 0.0
    %2719 = vmatprep.subr.mxu0 0.0
    %2720 = vmatpush1.msra.mxu0 0.0
    %2721 = vmatprep.subr.mxu0 0.0
    %2722 = vmatpush1.msra.mxu0 0.0
    %2723 = vmatprep.subr.mxu0 0.0
    %2724 = vmatpush1.msra.mxu0 0.0
    %2725 = vmatprep.mubr.f32.mxu0 0.0
    %2726 = vmatmul.mubr.f32.gmra.mrb[0].mxu0 %v2656
    %v2727 = vpop.f32.mrb[0].mxu0
    %v2728 = vadd.f32 0.0, %v2727
    %v2729 = vpop.f32.mrb[0].mxu0
    %2730 = vmatprep.mubr.f32.mxu0 0.0
    %2731 = vmatmul.mubr.f32.gmra.mrb[0].mxu0 %v2659
    %v2732 = vpop.f32.mrb[0].mxu0
    %v2733 = vadd.f32 0.0, %v2732
    %v2734 = vpop.f32.mrb[0].mxu0
    %2735 = vdwg.mxu0
    %v2736 = vadd.f32 %v2069, %v2728
    %v2737 = vadd.f32 %v2070, %v2733
    %2738 = vst.msk [vmem:[#allocation4] sm:$0xff] %vm330, %v509
    %2739 = vst.msk [vmem:[#allocation4 + $0x8] sm:$0xff] %vm330, %v1092
    %2740 = vst.msk [vmem:[#allocation4 + $0x10] sm:$0xff] %vm330, %v1838
    %2741 = vst.msk [vmem:[#allocation4 + $0x18] sm:$0xff] %vm330, %v2505
    %2742 = vst.msk [vmem:[#allocation4 + $0x20] sm:$0xff] %vm330, %v510
    %2743 = vst.msk [vmem:[#allocation4 + $0x28] sm:$0xff] %vm330, %v1093
    %2744 = vst.msk [vmem:[#allocation4 + $0x30] sm:$0xff] %vm330, %v1839
    %2745 = vst.msk [vmem:[#allocation4 + $0x38] sm:$0xff] %vm330, %v2506
    %v2746 = vld [vmem:[%s10] sm:$0x1]
    %v2748 = vlaneseq
    %v2749 = vshrl.u32 %v2748, 7
    %v2750 = vsub.s32 0, %v2749
    %v2751 = vrot.slane %v2746, %v2750
    %v2753 = vadd.f32 %v2736, %v2751
    %v2754 = vadd.f32 %v2737, %v2751
    %v2755 = vadd.f32 %v2753, %v48
    %v2756 = vadd.f32 %v2754, %v49
    %v2757 = vsel %vm83, %v2755, 0.0
    %2758 = vadd.xlane.f32.xlu0 %v2757
    %v2759 = vpop.xlane.xlu0 %2758
    %v2760 = vsel %vm83, %v2756, 0.0
    %2761 = vadd.xlane.f32.xlu0 %v2760
    %v2762 = vpop.xlane.xlu0 %2761
    %v2763 = vrcp.pop 32.0
    %v2764 = vmul.f32 %v2759, %v2763
    %v2765 = vmul.f32 %v2762, %v2763
    %v2766 = vsub.f32 %v2755, %v2764
    %v2767 = vsub.f32 %v2756, %v2765
    %v2768 = vmul.f32 %v2766, %v2766
    %v2769 = vmul.f32 %v2767, %v2767
    %v2770 = vsel %vm83, %v2768, 0.0
    %2771 = vadd.xlane.f32.xlu0 %v2770
    %v2772 = vpop.xlane.xlu0 %2771
    %v2773 = vsel %vm83, %v2769, 0.0
    %2774 = vadd.xlane.f32.xlu0 %v2773
    %v2775 = vpop.xlane.xlu0 %2774
    %v2776 = vmul.f32 %v2772, %v2763
    %v2777 = vmul.f32 %v2775, %v2763
    %v2778 = vadd.f32 %v2776, 1e-12
    %v2779 = vadd.f32 %v2777, 1e-12
    %v2780 = vrsqrt.pop %v2778
    %v2781 = vrsqrt.pop %v2779
    %v2782 = vmul.f32 %v2766, %v2780
    %v2783 = vmul.f32 %v2767, %v2781
    %v2784 = vld [vmem:[%s11] sm:$0x1]
    %v2786 = vlaneseq
    %v2787 = vshrl.u32 %v2786, 7
    %v2788 = vsub.s32 0, %v2787
    %v2789 = vrot.slane %v2784, %v2788
    %v2791 = vmul.f32 %v2782, %v2789
    %v2792 = vmul.f32 %v2783, %v2789
    %v2793 = vld [vmem:[%s12] sm:$0x1]
    %v2795 = vlaneseq
    %v2796 = vshrl.u32 %v2795, 7
    %v2797 = vsub.s32 0, %v2796
    %v2798 = vrot.slane %v2793, %v2797
    %v2800 = vadd.f32 %v2791, %v2798
    %v2801 = vadd.f32 %v2792, %v2798
    %2802 = vst.msk [vmem:[#allocation2] sm:$0xff] %vm83, %v2800
    %2803 = vst.msk [vmem:[#allocation2 + $0x8] sm:$0xff] %vm83, %v2801
    // Predicated region
    $region54: #{tpu_custom_call.1} parent=1 // pred_check
      _
    $region55: #{tpu_custom_call.1} parent=1 // pred_check_branch
      %2805 = sbr.rel (0) target = $region57
    $region56: #{tpu_custom_call.1} parent=1 // pred_region
      %s2807 = ssub.s32 256, 256
      %2808 = vsyncadd [#allocation3], %s2807
      %s2809 = sshll.u32 [#allocation2], 4
      %s2810 = int_to_ptr.vmem [resolvable:$true] %s2809
      %2815 = dma.vmem_to_hbm [thread:$0]  %s2810, 256, %s13, [#allocation3], 128, 128, 8
    $region57: #{tpu_custom_call.1} parent=1 // pred_fallthru
      _
    // Predicated region
    $region58: #{tpu_custom_call.1} parent=1 // pred_check
      _
    $region59: #{tpu_custom_call.1} parent=1 // pred_check_branch
      %2817 = sbr.rel (0) target = $region61
    $region60: #{tpu_custom_call.1} parent=1 // pred_region
      %s2819 = ssub.s32 1024, 1024
      %2820 = vsyncadd [#allocation5], %s2819
      %s2821 = sshll.u32 [#allocation4], 4
      %s2822 = int_to_ptr.vmem [resolvable:$true] %s2821
      %2827 = dma.vmem_to_hbm [thread:$0]  %s2822, 1024, %s14, [#allocation5], 128, 128, 8
    $region61: #{tpu_custom_call.1} parent=1 // pred_fallthru
      _
    // Predicated region
    $region62: #{tpu_custom_call.1} parent=1 // pred_check
      _
    $region63: #{tpu_custom_call.1} parent=1 // pred_check_branch
      %2829 = sbr.rel (0) target = $region65
    $region64: #{tpu_custom_call.1} parent=1 // pred_region
      %2830 = dma.done [#allocation3], 256
    $region65: #{tpu_custom_call.1} parent=1 // pred_fallthru
      _
    // Predicated region
    $region66: #{tpu_custom_call.1} parent=1 // pred_check
      _
    $region67: #{tpu_custom_call.1} parent=1 // pred_check_branch
      %2832 = sbr.rel (0) target = $region69
    $region68: #{tpu_custom_call.1} parent=1 // pred_region
      %2833 = dma.done [#allocation5], 1024
    $region69: #{tpu_custom_call.1} parent=1 // pred_fallthru
      _
    %2834 = vsyncpa [#allocation3], 1
    %2835 = vsyncpa [#allocation5], 1

</llo_original>
